<compile_context>
chip_gen: v7x
topology: tpu7x:2x2x1
jax: 0.10.0
libtpu: 0.0.40
codegen_flags: <defaults>
</compile_context>

<pallas_src>
import functools

import numpy as np
import jax
import jax.numpy as jnp
from jax.experimental import pallas as pl
from jax.experimental.pallas import tpu as pltpu

EPS = 1e-5


# ---------------------------------------------------------------------------
# Pallas kernels
# ---------------------------------------------------------------------------

def conv_stack_kernel(cols1_ref, cols2s_ref, w1_ref, g1_ref, be1_ref,
                      w2_ref, g2_ref, be2_ref, y2_ref):
    """Fused conv1 + BN1 + ReLU + conv2 + BN2 + ReLU, all VMEM resident.

    cols1:  (M1, K1)        im2col of the observation (rows = (n, oh1, ow1), cols = (kh,kw,cin))
    cols2s: (T2, M2, K1)    for each conv2 tap t, the conv1-input patches of the rows conv2 needs
    w1:     (K1, C1)        conv1 weight, rows ordered (kh, kw, cin)
    w2:     (T2*C1, C2)     conv2 weight, rows ordered (kh2, kw2, c1)
    g*/be*: (1, C)          BatchNorm2d gamma / beta
    out:    (M2, C2)        conv2 output rows = (n, oh2, ow2), lanes = c2
    """
    w1 = w1_ref[...]

    # ---- conv1 pre-activation over every output position (drives BN1 batch stats) ----
    z1 = jnp.dot(cols1_ref[...], w1, preferred_element_type=jnp.float32)      # (M1, C1)
    inv_m1 = 1.0 / float(cols1_ref.shape[0])
    s1 = jnp.sum(z1, axis=0, keepdims=True)                                   # one pass:
    q1 = jnp.sum(z1 * z1, axis=0, keepdims=True)                              # sum & sumsq
    mean1 = s1 * inv_m1
    var1 = jnp.maximum(q1 * inv_m1 - mean1 * mean1, 0.0)
    scale1 = jax.lax.rsqrt(var1 + EPS) * g1_ref[...]                          # fused rsqrt*gamma
    shift1 = be1_ref[...] - mean1 * scale1

    # ---- conv2: one small matmul per tap, recomputing just the conv1 rows it needs ----
    taps = cols2s_ref.shape[0]
    c1 = w1_ref.shape[1]
    m2 = cols2s_ref.shape[1]
    c2 = w2_ref.shape[1]
    w2 = w2_ref[...]                                                          # (taps*C1, C2)
    z2 = jnp.zeros((m2, c2), jnp.float32)
    for t in range(taps):                                                     # static unroll (9)
        z1t = jnp.dot(cols2s_ref[t], w1, preferred_element_type=jnp.float32)  # (M2, C1)
        y1t = jnp.maximum(z1t * scale1 + shift1, 0.0)                         # BN1 + ReLU
        z2 = z2 + jnp.dot(y1t, w2[t * c1:(t + 1) * c1, :],                    # aligned slice
                          preferred_element_type=jnp.float32)

    # ---- BN2 (training-mode batch stats) + ReLU ----
    inv_m2 = 1.0 / float(m2)
    s2 = jnp.sum(z2, axis=0, keepdims=True)
    q2 = jnp.sum(z2 * z2, axis=0, keepdims=True)
    mean2 = s2 * inv_m2
    var2 = jnp.maximum(q2 * inv_m2 - mean2 * mean2, 0.0)
    scale2 = jax.lax.rsqrt(var2 + EPS) * g2_ref[...]
    shift2 = be2_ref[...] - mean2 * scale2
    y2_ref[...] = jnp.maximum(z2 * scale2 + shift2, 0.0)


def mlp_kernel(x_ref, *refs):
    """Fused MLP: Linear(+ReLU) x (L-1) then a final Linear (Identity). All in one kernel."""
    *wb, o_ref = refs
    n_layers = len(wb) // 2
    h = x_ref[...]
    for l in range(n_layers):
        w = wb[2 * l][...]
        b = wb[2 * l + 1][...]
        h = jnp.dot(h, w, preferred_element_type=jnp.float32) + b
        if l < n_layers - 1:
            h = jnp.maximum(h, 0.0)
    o_ref[...] = h


# ---------------------------------------------------------------------------
# pallas_call wrappers (whole problem fits in VMEM -> no grid, full-array blocks)
# ---------------------------------------------------------------------------

def _vmem():
    return pl.BlockSpec(memory_space=pltpu.MemorySpace.VMEM)


def conv_stack(cols1, cols2s, w1, g1, be1, w2, g2, be2):
    m2 = cols2s.shape[1]
    c2 = w2.shape[1]
    return pl.pallas_call(
        conv_stack_kernel,
        out_shape=jax.ShapeDtypeStruct((m2, c2), jnp.float32),
        in_specs=[_vmem()] * 8,
        out_specs=_vmem(),
    )(cols1, cols2s, w1, g1, be1, w2, g2, be2)


def mlp_forward(x, wbs):
    flat = []
    for w, b in wbs:
        flat += [w, b]
    out_dim = wbs[-1][0].shape[1]
    return pl.pallas_call(
        mlp_kernel,
        out_shape=jax.ShapeDtypeStruct((x.shape[0], out_dim), jnp.float32),
        in_specs=[_vmem()] * (1 + len(flat)),
        out_specs=_vmem(),
    )(x, *flat)


# ---------------------------------------------------------------------------
# Glue: im2col of the raw input, conv2 tap-index table, init, forward
# ---------------------------------------------------------------------------

def im2col_nchw(x, k, stride):
    """x: (N,C,H,W) -> ((N*OH*OW, k*k*C), OH, OW); rows (n,oh,ow), cols (kh,kw,c)."""
    N, C, H, W = x.shape
    OH = (H - k) // stride + 1
    OW = (W - k) // stride + 1
    taps = []
    for i in range(k):
        for j in range(k):
            taps.append(jax.lax.slice(
                x, (0, 0, i, j),
                (N, C, i + (OH - 1) * stride + 1, j + (OW - 1) * stride + 1),
                (1, 1, stride, stride)))
    cols = jnp.stack(taps, axis=1)                              # (N, k*k, C, OH, OW)
    cols = cols.transpose(0, 3, 4, 1, 2).reshape(N * OH * OW, k * k * C)
    return cols, OH, OW


def conv2_patch_indices(N, OH1, OW1, k, stride):
    """Static table: for each conv2 tap, which cols1 rows (conv1 outputs) it reads."""
    OH2 = (OH1 - k) // stride + 1
    OW2 = (OW1 - k) // stride + 1
    idx = np.empty((k * k, N * OH2 * OW2), np.int32)
    for i in range(k):
        for j in range(k):
            t = i * k + j
            a = 0
            for n in range(N):
                for oh in range(OH2):
                    for ow in range(OW2):
                        idx[t, a] = (n * OH1 + (stride * oh + i)) * OW1 + (stride * ow + j)
                        a += 1
    return jnp.asarray(idx), OH2, OW2


def init_params(key, obs_dim, act_dim, conv_layer_sizes, hidden_sizes):
    """Deterministic synthetic init (PyTorch-style uniform fan-in bounds)."""
    assert len(conv_layer_sizes) == 2, "fused conv kernel is specialized to the 2-conv config"
    C, H, W = obs_dim
    conv_params = []
    in_ch, h, w_sp = C, H, W
    for (out_ch, k, stride) in conv_layer_sizes:
        key, kw = jax.random.split(key)
        fan_in = in_ch * k * k
        bound = 1.0 / np.sqrt(fan_in)
        w_t = jax.random.uniform(kw, (out_ch, in_ch, k, k), jnp.float32, -bound, bound)
        # Conv bias omitted: it is exactly cancelled by training-mode BN mean subtraction.
        w_k = jnp.transpose(w_t, (2, 3, 1, 0)).reshape(fan_in, out_ch)   # rows (kh, kw, cin)
        gamma = jnp.ones((1, out_ch), jnp.float32)                       # BN weight init
        beta = jnp.zeros((1, out_ch), jnp.float32)                       # BN bias init
        conv_params.append((w_k, gamma, beta))
        in_ch = out_ch
        h = (h - k) // stride + 1
        w_sp = (w_sp - k) // stride + 1
    start_dim = in_ch * h * w_sp                                         # == CNNCritic.calc_shape
    sp, c2 = h * w_sp, in_ch

    sizes = [start_dim + act_dim] + list(hidden_sizes) + [1]
    mlp_params = []
    for i in range(len(sizes) - 1):
        key, kw, kb = jax.random.split(key, 3)
        bound = 1.0 / np.sqrt(sizes[i])
        w = jax.random.uniform(kw, (sizes[i], sizes[i + 1]), jnp.float32, -bound, bound)
        b = jax.random.uniform(kb, (1, sizes[i + 1]), jnp.float32, -bound, bound)
        if i == 0:
            # Bake the NCHW-flatten permutation into the first MLP weight (free at init):
            # kernel feature order is (oh2, ow2, c2); torch .view order is (c2, oh2, ow2).
            ours = np.arange(start_dim)
            perm = (ours % c2) * sp + ours // c2
            w = jnp.concatenate([w[jnp.asarray(perm)], w[start_dim:]], axis=0)
        mlp_params.append((w, b))
    return {"conv": conv_params, "mlp": mlp_params}, start_dim


def cnn_critic_forward(params, obs, act, *, conv_cfg):
    """obs: (N, C, H, W) float32, act: (N, act_dim) float32 -> (N,) float32."""
    (_, k1, s1), (_, k2, s2) = conv_cfg
    obs = obs.astype(jnp.float32)
    N = obs.shape[0]
    (w1k, g1, be1), (w2k, g2, be2) = params["conv"]

    cols1, OH1, OW1 = im2col_nchw(obs, k1, s1)                 # (N*OH1*OW1, K1)
    idx, OH2, OW2 = conv2_patch_indices(N, OH1, OW1, k2, s2)   # static gather table
    cols2s = jnp.take(cols1, idx, axis=0)                      # (k2*k2, N*OH2*OW2, K1)

    y2 = conv_stack(cols1, cols2s, w1k, g1, be1, w2k, g2, be2)  # (N*OH2*OW2, C2)

    # Per-sample flatten in (oh2, ow2, c2) order; the matching row permutation of the first
    # MLP weight (done at init) makes this equivalent to torch's NCHW .view(-1, start_dim).
    flat = y2.reshape(N, OH2 * OW2 * y2.shape[1])
    h = jnp.concatenate([flat, act.astype(jnp.float32)], axis=-1)
    q = mlp_forward(h, params["mlp"])
    return jnp.squeeze(q, -1)                                   # torch.squeeze(q, -1)


# ---------------------------------------------------------------------------
# Main
# ---------------------------------------------------------------------------

if __name__ == "__main__":
    # Small shapes consistent with the module: obs_dim=(C,H,W), act_dim int.
    obs_dim = (4, 16, 16)
    act_dim = 6
    conv_layer_sizes = [(8, 3, 1), (16, 3, 2)]   # (out_channels, kernel, stride)
    hidden_sizes = [32, 32]
    batch = 2

    params, start_dim = init_params(
        jax.random.PRNGKey(42), obs_dim, act_dim, conv_layer_sizes, hidden_sizes
    )

    key = jax.random.PRNGKey(0)
    k_obs, k_act = jax.random.split(key)
    obs = jax.random.normal(k_obs, (batch,) + obs_dim, jnp.float32)
    act = jax.random.normal(k_act, (batch, act_dim), jnp.float32)

    fwd = jax.jit(functools.partial(cnn_critic_forward,
                                    conv_cfg=tuple(conv_layer_sizes)))
    q = fwd(params, obs, act)
    q = jax.block_until_ready(q)
    assert q.shape == (batch,), q.shape
    print("KERNEL_OK")
</pallas_src>

<mosaic_0001>
module attributes {stable_mosaic.version = 11 : i64} {
  func.func @conv_stack_kernel(%arg0: memref<392x36xf32, #tpu.memory_space<vmem>>, %arg1: memref<9x72x36xf32, #tpu.memory_space<vmem>>, %arg2: memref<36x8xf32, #tpu.memory_space<vmem>>, %arg3: memref<1x8xf32, #tpu.memory_space<vmem>>, %arg4: memref<1x8xf32, #tpu.memory_space<vmem>>, %arg5: memref<72x16xf32, #tpu.memory_space<vmem>>, %arg6: memref<1x16xf32, #tpu.memory_space<vmem>>, %arg7: memref<1x16xf32, #tpu.memory_space<vmem>>, %arg8: memref<72x16xf32, #tpu.memory_space<vmem>>) attributes {dimension_semantics = [], scalar_prefetch = 0 : i64, scratch_operands = 0 : i64, tpu.core_type = #tpu.core_type<tc>} {
    %c0 = arith.constant 0 : index
    %c0_0 = arith.constant 0 : index
    %0 = vector.load %arg2[%c0, %c0_0] : memref<36x8xf32, #tpu.memory_space<vmem>>, vector<36x8xf32>
    %c0_1 = arith.constant 0 : index
    %c0_2 = arith.constant 0 : index
    %1 = vector.load %arg0[%c0_1, %c0_2] : memref<392x36xf32, #tpu.memory_space<vmem>>, vector<392x36xf32>
    %cst = arith.constant dense<0.000000e+00> : vector<392x8xf32>
    %2 = tpu.matmul %1, %0, %cst {dimension_numbers = #tpu.dot_dimension_numbers<[1], [0], [0], [1], [0, 0, 1, 1], [], []>} : vector<392x36xf32>, vector<36x8xf32>, vector<392x8xf32> -> vector<392x8xf32>
    %cst_3 = arith.constant dense<0.000000e+00> : vector<8xf32>
    %3 = vector.multi_reduction <add>, %2, %cst_3 [0] : vector<392x8xf32> to vector<8xf32>
    %4 = vector.shape_cast %3 : vector<8xf32> to vector<1x8xf32>
    %5 = arith.mulf %2, %2 : vector<392x8xf32>
    %cst_4 = arith.constant dense<0.000000e+00> : vector<8xf32>
    %6 = vector.multi_reduction <add>, %5, %cst_4 [0] : vector<392x8xf32> to vector<8xf32>
    %7 = vector.shape_cast %6 : vector<8xf32> to vector<1x8xf32>
    %cst_5 = arith.constant 0.00255102036 : f32
    %8 = vector.broadcast %cst_5 : f32 to vector<1x8xf32>
    %9 = arith.mulf %4, %8 : vector<1x8xf32>
    %cst_6 = arith.constant 0.00255102036 : f32
    %10 = vector.broadcast %cst_6 : f32 to vector<1x8xf32>
    %11 = arith.mulf %7, %10 : vector<1x8xf32>
    %12 = arith.mulf %9, %9 : vector<1x8xf32>
    %13 = arith.subf %11, %12 : vector<1x8xf32>
    %cst_7 = arith.constant 0.000000e+00 : f32
    %14 = vector.broadcast %cst_7 : f32 to vector<1x8xf32>
    %15 = arith.maximumf %13, %14 : vector<1x8xf32>
    %cst_8 = arith.constant 9.99999974E-6 : f32
    %16 = vector.broadcast %cst_8 : f32 to vector<1x8xf32>
    %17 = arith.addf %15, %16 : vector<1x8xf32>
    %18 = math.rsqrt %17 : vector<1x8xf32>
    %c0_9 = arith.constant 0 : index
    %c0_10 = arith.constant 0 : index
    %19 = vector.load %arg3[%c0_9, %c0_10] : memref<1x8xf32, #tpu.memory_space<vmem>>, vector<1x8xf32>
    %20 = arith.mulf %18, %19 : vector<1x8xf32>
    %c0_11 = arith.constant 0 : index
    %c0_12 = arith.constant 0 : index
    %21 = vector.load %arg4[%c0_11, %c0_12] : memref<1x8xf32, #tpu.memory_space<vmem>>, vector<1x8xf32>
    %22 = arith.mulf %9, %20 : vector<1x8xf32>
    %23 = arith.subf %21, %22 : vector<1x8xf32>
    %c0_13 = arith.constant 0 : index
    %c0_14 = arith.constant 0 : index
    %24 = vector.load %arg5[%c0_13, %c0_14] : memref<72x16xf32, #tpu.memory_space<vmem>>, vector<72x16xf32>
    %cst_15 = arith.constant 0.000000e+00 : f32
    %25 = vector.broadcast %cst_15 : f32 to vector<72x16xf32>
    %c0_16 = arith.constant 0 : index
    %c0_17 = arith.constant 0 : index
    %c0_18 = arith.constant 0 : index
    %26 = vector.load %arg1[%c0_16, %c0_17, %c0_18] : memref<9x72x36xf32, #tpu.memory_space<vmem>>, vector<1x72x36xf32>
    %27 = vector.shape_cast %26 : vector<1x72x36xf32> to vector<72x36xf32>
    %cst_19 = arith.constant dense<0.000000e+00> : vector<72x8xf32>
    %28 = tpu.matmul %27, %0, %cst_19 {dimension_numbers = #tpu.dot_dimension_numbers<[1], [0], [0], [1], [0, 0, 1, 1], [], []>} : vector<72x36xf32>, vector<36x8xf32>, vector<72x8xf32> -> vector<72x8xf32>
    %29 = vector.broadcast %20 : vector<1x8xf32> to vector<72x8xf32>
    %30 = arith.mulf %28, %29 : vector<72x8xf32>
    %31 = vector.broadcast %23 : vector<1x8xf32> to vector<72x8xf32>
    %32 = arith.addf %30, %31 : vector<72x8xf32>
    %cst_20 = arith.constant 0.000000e+00 : f32
    %33 = vector.broadcast %cst_20 : f32 to vector<72x8xf32>
    %34 = arith.maximumf %32, %33 : vector<72x8xf32>
    %35 = vector.extract_strided_slice %24 {offsets = [0, 0], sizes = [8, 16], strides = [1, 1]} : vector<72x16xf32> to vector<8x16xf32>
    %cst_21 = arith.constant dense<0.000000e+00> : vector<72x16xf32>
    %36 = tpu.matmul %34, %35, %cst_21 {dimension_numbers = #tpu.dot_dimension_numbers<[1], [0], [0], [1], [0, 0, 1, 1], [], []>} : vector<72x8xf32>, vector<8x16xf32>, vector<72x16xf32> -> vector<72x16xf32>
    %37 = arith.addf %25, %36 : vector<72x16xf32>
    %c1 = arith.constant 1 : index
    %c0_22 = arith.constant 0 : index
    %c0_23 = arith.constant 0 : index
    %38 = vector.load %arg1[%c1, %c0_22, %c0_23] : memref<9x72x36xf32, #tpu.memory_space<vmem>>, vector<1x72x36xf32>
    %39 = vector.shape_cast %38 : vector<1x72x36xf32> to vector<72x36xf32>
    %cst_24 = arith.constant dense<0.000000e+00> : vector<72x8xf32>
    %40 = tpu.matmul %39, %0, %cst_24 {dimension_numbers = #tpu.dot_dimension_numbers<[1], [0], [0], [1], [0, 0, 1, 1], [], []>} : vector<72x36xf32>, vector<36x8xf32>, vector<72x8xf32> -> vector<72x8xf32>
    %41 = vector.broadcast %20 : vector<1x8xf32> to vector<72x8xf32>
    %42 = arith.mulf %40, %41 : vector<72x8xf32>
    %43 = vector.broadcast %23 : vector<1x8xf32> to vector<72x8xf32>
    %44 = arith.addf %42, %43 : vector<72x8xf32>
    %cst_25 = arith.constant 0.000000e+00 : f32
    %45 = vector.broadcast %cst_25 : f32 to vector<72x8xf32>
    %46 = arith.maximumf %44, %45 : vector<72x8xf32>
    %47 = vector.extract_strided_slice %24 {offsets = [8, 0], sizes = [8, 16], strides = [1, 1]} : vector<72x16xf32> to vector<8x16xf32>
    %cst_26 = arith.constant dense<0.000000e+00> : vector<72x16xf32>
    %48 = tpu.matmul %46, %47, %cst_26 {dimension_numbers = #tpu.dot_dimension_numbers<[1], [0], [0], [1], [0, 0, 1, 1], [], []>} : vector<72x8xf32>, vector<8x16xf32>, vector<72x16xf32> -> vector<72x16xf32>
    %49 = arith.addf %37, %48 : vector<72x16xf32>
    %c2 = arith.constant 2 : index
    %c0_27 = arith.constant 0 : index
    %c0_28 = arith.constant 0 : index
    %50 = vector.load %arg1[%c2, %c0_27, %c0_28] : memref<9x72x36xf32, #tpu.memory_space<vmem>>, vector<1x72x36xf32>
    %51 = vector.shape_cast %50 : vector<1x72x36xf32> to vector<72x36xf32>
    %cst_29 = arith.constant dense<0.000000e+00> : vector<72x8xf32>
    %52 = tpu.matmul %51, %0, %cst_29 {dimension_numbers = #tpu.dot_dimension_numbers<[1], [0], [0], [1], [0, 0, 1, 1], [], []>} : vector<72x36xf32>, vector<36x8xf32>, vector<72x8xf32> -> vector<72x8xf32>
    %53 = vector.broadcast %20 : vector<1x8xf32> to vector<72x8xf32>
    %54 = arith.mulf %52, %53 : vector<72x8xf32>
    %55 = vector.broadcast %23 : vector<1x8xf32> to vector<72x8xf32>
    %56 = arith.addf %54, %55 : vector<72x8xf32>
    %cst_30 = arith.constant 0.000000e+00 : f32
    %57 = vector.broadcast %cst_30 : f32 to vector<72x8xf32>
    %58 = arith.maximumf %56, %57 : vector<72x8xf32>
    %59 = vector.extract_strided_slice %24 {offsets = [16, 0], sizes = [8, 16], strides = [1, 1]} : vector<72x16xf32> to vector<8x16xf32>
    %cst_31 = arith.constant dense<0.000000e+00> : vector<72x16xf32>
    %60 = tpu.matmul %58, %59, %cst_31 {dimension_numbers = #tpu.dot_dimension_numbers<[1], [0], [0], [1], [0, 0, 1, 1], [], []>} : vector<72x8xf32>, vector<8x16xf32>, vector<72x16xf32> -> vector<72x16xf32>
    %61 = arith.addf %49, %60 : vector<72x16xf32>
    %c3 = arith.constant 3 : index
    %c0_32 = arith.constant 0 : index
    %c0_33 = arith.constant 0 : index
    %62 = vector.load %arg1[%c3, %c0_32, %c0_33] : memref<9x72x36xf32, #tpu.memory_space<vmem>>, vector<1x72x36xf32>
    %63 = vector.shape_cast %62 : vector<1x72x36xf32> to vector<72x36xf32>
    %cst_34 = arith.constant dense<0.000000e+00> : vector<72x8xf32>
    %64 = tpu.matmul %63, %0, %cst_34 {dimension_numbers = #tpu.dot_dimension_numbers<[1], [0], [0], [1], [0, 0, 1, 1], [], []>} : vector<72x36xf32>, vector<36x8xf32>, vector<72x8xf32> -> vector<72x8xf32>
    %65 = vector.broadcast %20 : vector<1x8xf32> to vector<72x8xf32>
    %66 = arith.mulf %64, %65 : vector<72x8xf32>
    %67 = vector.broadcast %23 : vector<1x8xf32> to vector<72x8xf32>
    %68 = arith.addf %66, %67 : vector<72x8xf32>
    %cst_35 = arith.constant 0.000000e+00 : f32
    %69 = vector.broadcast %cst_35 : f32 to vector<72x8xf32>
    %70 = arith.maximumf %68, %69 : vector<72x8xf32>
    %71 = vector.extract_strided_slice %24 {offsets = [24, 0], sizes = [8, 16], strides = [1, 1]} : vector<72x16xf32> to vector<8x16xf32>
    %cst_36 = arith.constant dense<0.000000e+00> : vector<72x16xf32>
    %72 = tpu.matmul %70, %71, %cst_36 {dimension_numbers = #tpu.dot_dimension_numbers<[1], [0], [0], [1], [0, 0, 1, 1], [], []>} : vector<72x8xf32>, vector<8x16xf32>, vector<72x16xf32> -> vector<72x16xf32>
    %73 = arith.addf %61, %72 : vector<72x16xf32>
    %c4 = arith.constant 4 : index
    %c0_37 = arith.constant 0 : index
    %c0_38 = arith.constant 0 : index
    %74 = vector.load %arg1[%c4, %c0_37, %c0_38] : memref<9x72x36xf32, #tpu.memory_space<vmem>>, vector<1x72x36xf32>
    %75 = vector.shape_cast %74 : vector<1x72x36xf32> to vector<72x36xf32>
    %cst_39 = arith.constant dense<0.000000e+00> : vector<72x8xf32>
    %76 = tpu.matmul %75, %0, %cst_39 {dimension_numbers = #tpu.dot_dimension_numbers<[1], [0], [0], [1], [0, 0, 1, 1], [], []>} : vector<72x36xf32>, vector<36x8xf32>, vector<72x8xf32> -> vector<72x8xf32>
    %77 = vector.broadcast %20 : vector<1x8xf32> to vector<72x8xf32>
    %78 = arith.mulf %76, %77 : vector<72x8xf32>
    %79 = vector.broadcast %23 : vector<1x8xf32> to vector<72x8xf32>
    %80 = arith.addf %78, %79 : vector<72x8xf32>
    %cst_40 = arith.constant 0.000000e+00 : f32
    %81 = vector.broadcast %cst_40 : f32 to vector<72x8xf32>
    %82 = arith.maximumf %80, %81 : vector<72x8xf32>
    %83 = vector.extract_strided_slice %24 {offsets = [32, 0], sizes = [8, 16], strides = [1, 1]} : vector<72x16xf32> to vector<8x16xf32>
    %cst_41 = arith.constant dense<0.000000e+00> : vector<72x16xf32>
    %84 = tpu.matmul %82, %83, %cst_41 {dimension_numbers = #tpu.dot_dimension_numbers<[1], [0], [0], [1], [0, 0, 1, 1], [], []>} : vector<72x8xf32>, vector<8x16xf32>, vector<72x16xf32> -> vector<72x16xf32>
    %85 = arith.addf %73, %84 : vector<72x16xf32>
    %c5 = arith.constant 5 : index
    %c0_42 = arith.constant 0 : index
    %c0_43 = arith.constant 0 : index
    %86 = vector.load %arg1[%c5, %c0_42, %c0_43] : memref<9x72x36xf32, #tpu.memory_space<vmem>>, vector<1x72x36xf32>
    %87 = vector.shape_cast %86 : vector<1x72x36xf32> to vector<72x36xf32>
    %cst_44 = arith.constant dense<0.000000e+00> : vector<72x8xf32>
    %88 = tpu.matmul %87, %0, %cst_44 {dimension_numbers = #tpu.dot_dimension_numbers<[1], [0], [0], [1], [0, 0, 1, 1], [], []>} : vector<72x36xf32>, vector<36x8xf32>, vector<72x8xf32> -> vector<72x8xf32>
    %89 = vector.broadcast %20 : vector<1x8xf32> to vector<72x8xf32>
    %90 = arith.mulf %88, %89 : vector<72x8xf32>
    %91 = vector.broadcast %23 : vector<1x8xf32> to vector<72x8xf32>
    %92 = arith.addf %90, %91 : vector<72x8xf32>
    %cst_45 = arith.constant 0.000000e+00 : f32
    %93 = vector.broadcast %cst_45 : f32 to vector<72x8xf32>
    %94 = arith.maximumf %92, %93 : vector<72x8xf32>
    %95 = vector.extract_strided_slice %24 {offsets = [40, 0], sizes = [8, 16], strides = [1, 1]} : vector<72x16xf32> to vector<8x16xf32>
    %cst_46 = arith.constant dense<0.000000e+00> : vector<72x16xf32>
    %96 = tpu.matmul %94, %95, %cst_46 {dimension_numbers = #tpu.dot_dimension_numbers<[1], [0], [0], [1], [0, 0, 1, 1], [], []>} : vector<72x8xf32>, vector<8x16xf32>, vector<72x16xf32> -> vector<72x16xf32>
    %97 = arith.addf %85, %96 : vector<72x16xf32>
    %c6 = arith.constant 6 : index
    %c0_47 = arith.constant 0 : index
    %c0_48 = arith.constant 0 : index
    %98 = vector.load %arg1[%c6, %c0_47, %c0_48] : memref<9x72x36xf32, #tpu.memory_space<vmem>>, vector<1x72x36xf32>
    %99 = vector.shape_cast %98 : vector<1x72x36xf32> to vector<72x36xf32>
    %cst_49 = arith.constant dense<0.000000e+00> : vector<72x8xf32>
    %100 = tpu.matmul %99, %0, %cst_49 {dimension_numbers = #tpu.dot_dimension_numbers<[1], [0], [0], [1], [0, 0, 1, 1], [], []>} : vector<72x36xf32>, vector<36x8xf32>, vector<72x8xf32> -> vector<72x8xf32>
    %101 = vector.broadcast %20 : vector<1x8xf32> to vector<72x8xf32>
    %102 = arith.mulf %100, %101 : vector<72x8xf32>
    %103 = vector.broadcast %23 : vector<1x8xf32> to vector<72x8xf32>
    %104 = arith.addf %102, %103 : vector<72x8xf32>
    %cst_50 = arith.constant 0.000000e+00 : f32
    %105 = vector.broadcast %cst_50 : f32 to vector<72x8xf32>
    %106 = arith.maximumf %104, %105 : vector<72x8xf32>
    %107 = vector.extract_strided_slice %24 {offsets = [48, 0], sizes = [8, 16], strides = [1, 1]} : vector<72x16xf32> to vector<8x16xf32>
    %cst_51 = arith.constant dense<0.000000e+00> : vector<72x16xf32>
    %108 = tpu.matmul %106, %107, %cst_51 {dimension_numbers = #tpu.dot_dimension_numbers<[1], [0], [0], [1], [0, 0, 1, 1], [], []>} : vector<72x8xf32>, vector<8x16xf32>, vector<72x16xf32> -> vector<72x16xf32>
    %109 = arith.addf %97, %108 : vector<72x16xf32>
    %c7 = arith.constant 7 : index
    %c0_52 = arith.constant 0 : index
    %c0_53 = arith.constant 0 : index
    %110 = vector.load %arg1[%c7, %c0_52, %c0_53] : memref<9x72x36xf32, #tpu.memory_space<vmem>>, vector<1x72x36xf32>
    %111 = vector.shape_cast %110 : vector<1x72x36xf32> to vector<72x36xf32>
    %cst_54 = arith.constant dense<0.000000e+00> : vector<72x8xf32>
    %112 = tpu.matmul %111, %0, %cst_54 {dimension_numbers = #tpu.dot_dimension_numbers<[1], [0], [0], [1], [0, 0, 1, 1], [], []>} : vector<72x36xf32>, vector<36x8xf32>, vector<72x8xf32> -> vector<72x8xf32>
    %113 = vector.broadcast %20 : vector<1x8xf32> to vector<72x8xf32>
    %114 = arith.mulf %112, %113 : vector<72x8xf32>
    %115 = vector.broadcast %23 : vector<1x8xf32> to vector<72x8xf32>
    %116 = arith.addf %114, %115 : vector<72x8xf32>
    %cst_55 = arith.constant 0.000000e+00 : f32
    %117 = vector.broadcast %cst_55 : f32 to vector<72x8xf32>
    %118 = arith.maximumf %116, %117 : vector<72x8xf32>
    %119 = vector.extract_strided_slice %24 {offsets = [56, 0], sizes = [8, 16], strides = [1, 1]} : vector<72x16xf32> to vector<8x16xf32>
    %cst_56 = arith.constant dense<0.000000e+00> : vector<72x16xf32>
    %120 = tpu.matmul %118, %119, %cst_56 {dimension_numbers = #tpu.dot_dimension_numbers<[1], [0], [0], [1], [0, 0, 1, 1], [], []>} : vector<72x8xf32>, vector<8x16xf32>, vector<72x16xf32> -> vector<72x16xf32>
    %121 = arith.addf %109, %120 : vector<72x16xf32>
    %c8 = arith.constant 8 : index
    %c0_57 = arith.constant 0 : index
    %c0_58 = arith.constant 0 : index
    %122 = vector.load %arg1[%c8, %c0_57, %c0_58] : memref<9x72x36xf32, #tpu.memory_space<vmem>>, vector<1x72x36xf32>
    %123 = vector.shape_cast %122 : vector<1x72x36xf32> to vector<72x36xf32>
    %cst_59 = arith.constant dense<0.000000e+00> : vector<72x8xf32>
    %124 = tpu.matmul %123, %0, %cst_59 {dimension_numbers = #tpu.dot_dimension_numbers<[1], [0], [0], [1], [0, 0, 1, 1], [], []>} : vector<72x36xf32>, vector<36x8xf32>, vector<72x8xf32> -> vector<72x8xf32>
    %125 = vector.broadcast %20 : vector<1x8xf32> to vector<72x8xf32>
    %126 = arith.mulf %124, %125 : vector<72x8xf32>
    %127 = vector.broadcast %23 : vector<1x8xf32> to vector<72x8xf32>
    %128 = arith.addf %126, %127 : vector<72x8xf32>
    %cst_60 = arith.constant 0.000000e+00 : f32
    %129 = vector.broadcast %cst_60 : f32 to vector<72x8xf32>
    %130 = arith.maximumf %128, %129 : vector<72x8xf32>
    %131 = vector.extract_strided_slice %24 {offsets = [64, 0], sizes = [8, 16], strides = [1, 1]} : vector<72x16xf32> to vector<8x16xf32>
    %cst_61 = arith.constant dense<0.000000e+00> : vector<72x16xf32>
    %132 = tpu.matmul %130, %131, %cst_61 {dimension_numbers = #tpu.dot_dimension_numbers<[1], [0], [0], [1], [0, 0, 1, 1], [], []>} : vector<72x8xf32>, vector<8x16xf32>, vector<72x16xf32> -> vector<72x16xf32>
    %133 = arith.addf %121, %132 : vector<72x16xf32>
    %cst_62 = arith.constant dense<0.000000e+00> : vector<16xf32>
    %134 = vector.multi_reduction <add>, %133, %cst_62 [0] : vector<72x16xf32> to vector<16xf32>
    %135 = vector.shape_cast %134 : vector<16xf32> to vector<1x16xf32>
    %136 = arith.mulf %133, %133 : vector<72x16xf32>
    %cst_63 = arith.constant dense<0.000000e+00> : vector<16xf32>
    %137 = vector.multi_reduction <add>, %136, %cst_63 [0] : vector<72x16xf32> to vector<16xf32>
    %138 = vector.shape_cast %137 : vector<16xf32> to vector<1x16xf32>
    %cst_64 = arith.constant 0.013888889 : f32
    %139 = vector.broadcast %cst_64 : f32 to vector<1x16xf32>
    %140 = arith.mulf %135, %139 : vector<1x16xf32>
    %cst_65 = arith.constant 0.013888889 : f32
    %141 = vector.broadcast %cst_65 : f32 to vector<1x16xf32>
    %142 = arith.mulf %138, %141 : vector<1x16xf32>
    %143 = arith.mulf %140, %140 : vector<1x16xf32>
    %144 = arith.subf %142, %143 : vector<1x16xf32>
    %cst_66 = arith.constant 0.000000e+00 : f32
    %145 = vector.broadcast %cst_66 : f32 to vector<1x16xf32>
    %146 = arith.maximumf %144, %145 : vector<1x16xf32>
    %cst_67 = arith.constant 9.99999974E-6 : f32
    %147 = vector.broadcast %cst_67 : f32 to vector<1x16xf32>
    %148 = arith.addf %146, %147 : vector<1x16xf32>
    %149 = math.rsqrt %148 : vector<1x16xf32>
    %c0_68 = arith.constant 0 : index
    %c0_69 = arith.constant 0 : index
    %150 = vector.load %arg6[%c0_68, %c0_69] : memref<1x16xf32, #tpu.memory_space<vmem>>, vector<1x16xf32>
    %151 = arith.mulf %149, %150 : vector<1x16xf32>
    %c0_70 = arith.constant 0 : index
    %c0_71 = arith.constant 0 : index
    %152 = vector.load %arg7[%c0_70, %c0_71] : memref<1x16xf32, #tpu.memory_space<vmem>>, vector<1x16xf32>
    %153 = arith.mulf %140, %151 : vector<1x16xf32>
    %154 = arith.subf %152, %153 : vector<1x16xf32>
    %155 = vector.broadcast %151 : vector<1x16xf32> to vector<72x16xf32>
    %156 = arith.mulf %133, %155 : vector<72x16xf32>
    %157 = vector.broadcast %154 : vector<1x16xf32> to vector<72x16xf32>
    %158 = arith.addf %156, %157 : vector<72x16xf32>
    %cst_72 = arith.constant 0.000000e+00 : f32
    %159 = vector.broadcast %cst_72 : f32 to vector<72x16xf32>
    %160 = arith.maximumf %158, %159 : vector<72x16xf32>
    %c0_73 = arith.constant 0 : index
    %c0_74 = arith.constant 0 : index
    %161 = vector.load %arg8[%c0_73, %c0_74] : memref<72x16xf32, #tpu.memory_space<vmem>>, vector<72x16xf32>
    tpu.vector_store %arg8[%c0_73, %c0_74], %160 {strides = array<i32>} : memref<72x16xf32, #tpu.memory_space<vmem>>, vector<72x16xf32>,
    return
  }
}

module attributes {stable_mosaic.version = 11 : i64} {
  func.func @mlp_kernel(%arg0: memref<2x582xf32, #tpu.memory_space<vmem>>, %arg1: memref<582x32xf32, #tpu.memory_space<vmem>>, %arg2: memref<1x32xf32, #tpu.memory_space<vmem>>, %arg3: memref<32x32xf32, #tpu.memory_space<vmem>>, %arg4: memref<1x32xf32, #tpu.memory_space<vmem>>, %arg5: memref<32x1xf32, #tpu.memory_space<vmem>>, %arg6: memref<1x1xf32, #tpu.memory_space<vmem>>, %arg7: memref<2x1xf32, #tpu.memory_space<vmem>>) attributes {dimension_semantics = [], scalar_prefetch = 0 : i64, scratch_operands = 0 : i64, tpu.core_type = #tpu.core_type<tc>} {
    %c0 = arith.constant 0 : index
    %c0_0 = arith.constant 0 : index
    %0 = vector.load %arg0[%c0, %c0_0] : memref<2x582xf32, #tpu.memory_space<vmem>>, vector<2x582xf32>
    %c0_1 = arith.constant 0 : index
    %c0_2 = arith.constant 0 : index
    %1 = vector.load %arg1[%c0_1, %c0_2] : memref<582x32xf32, #tpu.memory_space<vmem>>, vector<582x32xf32>
    %c0_3 = arith.constant 0 : index
    %c0_4 = arith.constant 0 : index
    %2 = vector.load %arg2[%c0_3, %c0_4] : memref<1x32xf32, #tpu.memory_space<vmem>>, vector<1x32xf32>
    %cst = arith.constant dense<0.000000e+00> : vector<2x32xf32>
    %3 = tpu.matmul %0, %1, %cst {dimension_numbers = #tpu.dot_dimension_numbers<[1], [0], [0], [1], [0, 0, 1, 1], [], []>} : vector<2x582xf32>, vector<582x32xf32>, vector<2x32xf32> -> vector<2x32xf32>
    %4 = vector.broadcast %2 : vector<1x32xf32> to vector<2x32xf32>
    %5 = arith.addf %3, %4 : vector<2x32xf32>
    %cst_5 = arith.constant 0.000000e+00 : f32
    %6 = vector.broadcast %cst_5 : f32 to vector<2x32xf32>
    %7 = arith.maximumf %5, %6 : vector<2x32xf32>
    %c0_6 = arith.constant 0 : index
    %c0_7 = arith.constant 0 : index
    %8 = vector.load %arg3[%c0_6, %c0_7] : memref<32x32xf32, #tpu.memory_space<vmem>>, vector<32x32xf32>
    %c0_8 = arith.constant 0 : index
    %c0_9 = arith.constant 0 : index
    %9 = vector.load %arg4[%c0_8, %c0_9] : memref<1x32xf32, #tpu.memory_space<vmem>>, vector<1x32xf32>
    %cst_10 = arith.constant dense<0.000000e+00> : vector<2x32xf32>
    %10 = tpu.matmul %7, %8, %cst_10 {dimension_numbers = #tpu.dot_dimension_numbers<[1], [0], [0], [1], [0, 0, 1, 1], [], []>} : vector<2x32xf32>, vector<32x32xf32>, vector<2x32xf32> -> vector<2x32xf32>
    %11 = vector.broadcast %9 : vector<1x32xf32> to vector<2x32xf32>
    %12 = arith.addf %10, %11 : vector<2x32xf32>
    %cst_11 = arith.constant 0.000000e+00 : f32
    %13 = vector.broadcast %cst_11 : f32 to vector<2x32xf32>
    %14 = arith.maximumf %12, %13 : vector<2x32xf32>
    %c0_12 = arith.constant 0 : index
    %c0_13 = arith.constant 0 : index
    %15 = vector.load %arg5[%c0_12, %c0_13] : memref<32x1xf32, #tpu.memory_space<vmem>>, vector<32x1xf32>
    %c0_14 = arith.constant 0 : index
    %c0_15 = arith.constant 0 : index
    %16 = vector.load %arg6[%c0_14, %c0_15] : memref<1x1xf32, #tpu.memory_space<vmem>>, vector<1x1xf32>
    %cst_16 = arith.constant dense<0.000000e+00> : vector<2x1xf32>
    %17 = tpu.matmul %14, %15, %cst_16 {dimension_numbers = #tpu.dot_dimension_numbers<[1], [0], [0], [1], [0, 0, 1, 1], [], []>} : vector<2x32xf32>, vector<32x1xf32>, vector<2x1xf32> -> vector<2x1xf32>
    %18 = vector.broadcast %16 : vector<1x1xf32> to vector<2x1xf32>
    %19 = arith.addf %17, %18 : vector<2x1xf32>
    %c0_17 = arith.constant 0 : index
    %c0_18 = arith.constant 0 : index
    %20 = vector.load %arg7[%c0_17, %c0_18] : memref<2x1xf32, #tpu.memory_space<vmem>>, vector<2x1xf32>
    tpu.vector_store %arg7[%c0_17, %c0_18], %19 {strides = array<i32>} : memref<2x1xf32, #tpu.memory_space<vmem>>, vector<2x1xf32>,
    return
  }
}

</mosaic_0001>

<llo_original>
// kernel: cnn_critic_forward.3
$region0: #{cnn_critic_forward.3}
  #allocation0 [shape = 'u32[]', space=smem, size = 0x4, offset = 0x4, fixed_abs, tag = 'smem constant byte address 0x4 - core index']
  #allocation1 [shape = 'u32[144,128]{1,0:T(1,128)}', space=vmem, size = 0x12000, scoped, tag = 'internal scratch']
  #allocation2 [shape = 'f32[1,1]{1,0:T(1,128)S(1)}', space=vmem, size = 0x200, scoped, tag = 'scoped memory for cnn_critic_forward.3']
  %s0 = inlined_call_operand.vmem [shape: f32[2,582], index: 0, kind: input, shape index: {}]
  %s1 = inlined_call_operand.vmem [shape: f32[582,32], index: 1, kind: input, shape index: {}]
  %s2 = inlined_call_operand.vmem [shape: f32[1,32], index: 2, kind: input, shape index: {}]
  %s3 = inlined_call_operand.vmem [shape: f32[32,32], index: 3, kind: input, shape index: {}]
  %s4 = inlined_call_operand.vmem [shape: f32[1,32], index: 4, kind: input, shape index: {}]
  %s5 = inlined_call_operand.vmem [shape: f32[32,1], index: 5, kind: input, shape index: {}]
  %s6 = inlined_call_operand.<no memory space> [shape: f32[1,1], index: 6, kind: input, shape index: {}]
  %s7 = inlined_call_operand.vmem [shape: f32[2,1], index: 7, kind: output, shape index: {}]
  %s8 = sld [smem:[#allocation0]]
  $region38: #{cnn_critic_forward.3} parent=0
    _
  %s10 = ssub.s32 1, %s8
  %s11 = scalar_select 0, %s10, %s8
  %v12 = vstv %s6
  %13 = vst [vmem:[#allocation2] sm:$0x1] %v12
  // Predicated region
  $region2: #{cnn_critic_forward.3} parent=0 // pred_check
    _
  $region3: #{cnn_critic_forward.3} parent=0 // pred_check_branch
    %15 = sbr.rel (0) target = $region5
  $region4: #{cnn_critic_forward.3} parent=0 // pred_region
    _
  $region5: #{cnn_critic_forward.3} parent=0 // pred_fallthru
    _
  // Predicated region
  $region6: #{cnn_critic_forward.3} parent=0 // pred_check
    _
  $region7: #{cnn_critic_forward.3} parent=0 // pred_check_branch
    %17 = sbr.rel (0) target = $region9
  $region8: #{cnn_critic_forward.3} parent=0 // pred_region
    _
  $region9: #{cnn_critic_forward.3} parent=0 // pred_fallthru
    _
  // Predicated region
  $region10: #{cnn_critic_forward.3} parent=0 // pred_check
    _
  $region11: #{cnn_critic_forward.3} parent=0 // pred_check_branch
    %19 = sbr.rel (0) target = $region13
  $region12: #{cnn_critic_forward.3} parent=0 // pred_region
    _
  $region13: #{cnn_critic_forward.3} parent=0 // pred_fallthru
    _
  // Predicated region
  $region14: #{cnn_critic_forward.3} parent=0 // pred_check
    _
  $region15: #{cnn_critic_forward.3} parent=0 // pred_check_branch
    %21 = sbr.rel (0) target = $region17
  $region16: #{cnn_critic_forward.3} parent=0 // pred_region
    _
  $region17: #{cnn_critic_forward.3} parent=0 // pred_fallthru
    _
  // Predicated region
  $region18: #{cnn_critic_forward.3} parent=0 // pred_check
    _
  $region19: #{cnn_critic_forward.3} parent=0 // pred_check_branch
    %23 = sbr.rel (0) target = $region21
  $region20: #{cnn_critic_forward.3} parent=0 // pred_region
    _
  $region21: #{cnn_critic_forward.3} parent=0 // pred_fallthru
    _
  // Predicated region
  $region22: #{cnn_critic_forward.3} parent=0 // pred_check
    _
  $region23: #{cnn_critic_forward.3} parent=0 // pred_check_branch
    %25 = sbr.rel (0) target = $region25
  $region24: #{cnn_critic_forward.3} parent=0 // pred_region
    _
  $region25: #{cnn_critic_forward.3} parent=0 // pred_fallthru
    _
  // Predicated region
  $region26: #{cnn_critic_forward.3} parent=0 // pred_check
    _
  $region27: #{cnn_critic_forward.3} parent=0 // pred_check_branch
    %27 = sbr.rel (0) target = $region29
  $region28: #{cnn_critic_forward.3} parent=0 // pred_region
    _
  $region29: #{cnn_critic_forward.3} parent=0 // pred_fallthru
    _
  %v28 = vld [vmem:[%s0] sm:$0xff]
  %v29 = vld [vmem:[%s0 + $0x8] sm:$0x3]
  %v30 = vld [vmem:[%s1] sm:$0xff]
  %v31 = vld [vmem:[%s1 + $0x8] sm:$0xff]
  %v32 = vld [vmem:[%s1 + $0x10] sm:$0xff]
  %v33 = vld [vmem:[%s1 + $0x18] sm:$0xff]
  %v34 = vld [vmem:[%s1 + $0x20] sm:$0xff]
  %v35 = vld [vmem:[%s1 + $0x28] sm:$0xff]
  %v36 = vld [vmem:[%s1 + $0x30] sm:$0xff]
  %v37 = vld [vmem:[%s1 + $0x38] sm:$0xff]
  %v38 = vld [vmem:[%s1 + $0x40] sm:$0xff]
  %v39 = vld [vmem:[%s1 + $0x48] sm:$0xff]
  %v40 = vld [vmem:[%s1 + $0x50] sm:$0xff]
  %v41 = vld [vmem:[%s1 + $0x58] sm:$0xff]
  %v42 = vld [vmem:[%s1 + $0x60] sm:$0xff]
  %v43 = vld [vmem:[%s1 + $0x68] sm:$0xff]
  %v44 = vld [vmem:[%s1 + $0x70] sm:$0xff]
  %v45 = vld [vmem:[%s1 + $0x78] sm:$0xff]
  %v46 = vld [vmem:[%s1 + $0x80] sm:$0xff]
  %v47 = vld [vmem:[%s1 + $0x88] sm:$0xff]
  %v48 = vld [vmem:[%s1 + $0x90] sm:$0xff]
  %v49 = vld [vmem:[%s1 + $0x98] sm:$0xff]
  %v50 = vld [vmem:[%s1 + $0xa0] sm:$0xff]
  %v51 = vld [vmem:[%s1 + $0xa8] sm:$0xff]
  %v52 = vld [vmem:[%s1 + $0xb0] sm:$0xff]
  %v53 = vld [vmem:[%s1 + $0xb8] sm:$0xff]
  %v54 = vld [vmem:[%s1 + $0xc0] sm:$0xff]
  %v55 = vld [vmem:[%s1 + $0xc8] sm:$0xff]
  %v56 = vld [vmem:[%s1 + $0xd0] sm:$0xff]
  %v57 = vld [vmem:[%s1 + $0xd8] sm:$0xff]
  %v58 = vld [vmem:[%s1 + $0xe0] sm:$0xff]
  %v59 = vld [vmem:[%s1 + $0xe8] sm:$0xff]
  %v60 = vld [vmem:[%s1 + $0xf0] sm:$0xff]
  %v61 = vld [vmem:[%s1 + $0xf8] sm:$0xff]
  %v62 = vld [vmem:[%s1 + $0x100] sm:$0xff]
  %v63 = vld [vmem:[%s1 + $0x108] sm:$0xff]
  %v64 = vld [vmem:[%s1 + $0x110] sm:$0xff]
  %v65 = vld [vmem:[%s1 + $0x118] sm:$0xff]
  %v66 = vld [vmem:[%s1 + $0x120] sm:$0xff]
  %v67 = vld [vmem:[%s1 + $0x128] sm:$0xff]
  %v68 = vld [vmem:[%s1 + $0x130] sm:$0xff]
  %v69 = vld [vmem:[%s1 + $0x138] sm:$0xff]
  %v70 = vld [vmem:[%s1 + $0x140] sm:$0xff]
  %v71 = vld [vmem:[%s1 + $0x148] sm:$0xff]
  %v72 = vld [vmem:[%s1 + $0x150] sm:$0xff]
  %v73 = vld [vmem:[%s1 + $0x158] sm:$0xff]
  %v74 = vld [vmem:[%s1 + $0x160] sm:$0xff]
  %v75 = vld [vmem:[%s1 + $0x168] sm:$0xff]
  %v76 = vld [vmem:[%s1 + $0x170] sm:$0xff]
  %v77 = vld [vmem:[%s1 + $0x178] sm:$0xff]
  %v78 = vld [vmem:[%s1 + $0x180] sm:$0xff]
  %v79 = vld [vmem:[%s1 + $0x188] sm:$0xff]
  %v80 = vld [vmem:[%s1 + $0x190] sm:$0xff]
  %v81 = vld [vmem:[%s1 + $0x198] sm:$0xff]
  %v82 = vld [vmem:[%s1 + $0x1a0] sm:$0xff]
  %v83 = vld [vmem:[%s1 + $0x1a8] sm:$0xff]
  %v84 = vld [vmem:[%s1 + $0x1b0] sm:$0xff]
  %v85 = vld [vmem:[%s1 + $0x1b8] sm:$0xff]
  %v86 = vld [vmem:[%s1 + $0x1c0] sm:$0xff]
  %v87 = vld [vmem:[%s1 + $0x1c8] sm:$0xff]
  %v88 = vld [vmem:[%s1 + $0x1d0] sm:$0xff]
  %v89 = vld [vmem:[%s1 + $0x1d8] sm:$0xff]
  %v90 = vld [vmem:[%s1 + $0x1e0] sm:$0xff]
  %v91 = vld [vmem:[%s1 + $0x1e8] sm:$0xff]
  %v92 = vld [vmem:[%s1 + $0x1f0] sm:$0xff]
  %v93 = vld [vmem:[%s1 + $0x1f8] sm:$0xff]
  %v94 = vld [vmem:[%s1 + $0x200] sm:$0xff]
  %v95 = vld [vmem:[%s1 + $0x208] sm:$0xff]
  %v96 = vld [vmem:[%s1 + $0x210] sm:$0xff]
  %v97 = vld [vmem:[%s1 + $0x218] sm:$0xff]
  %v98 = vld [vmem:[%s1 + $0x220] sm:$0xff]
  %v99 = vld [vmem:[%s1 + $0x228] sm:$0xff]
  %v100 = vld [vmem:[%s1 + $0x230] sm:$0xff]
  %v101 = vld [vmem:[%s1 + $0x238] sm:$0xff]
  %v102 = vld [vmem:[%s1 + $0x240] sm:$0x3f]
  %v103 = vld [vmem:[%s2] sm:$0x1]
  %v105 = vlaneseq
  %v106 = vshrl.u32 %v105, 7
  %v107 = vsub.s32 0, %v106
  %v108 = vrot.slane %v103, %v107
  %v112 = vcombine.high %v28, %v28
  %v114 = vunpack.c.l.s4 1983009808
  %v115 = vunpack.c.0.s8 %v114
  %v116 = vlaneseq
  %v117 = vshrl.u32 %v116, 7
  %v118 = vsub.s32 %v115, %v117
  %v119 = vrot.slane %v28, %v118
  %v121 = vunpack.c.l.s4 1983009808
  %v122 = vunpack.c.0.s8 %v121
  %v123 = vlaneseq
  %v124 = vshrl.u32 %v123, 7
  %v125 = vsub.s32 %v122, %v124
  %v126 = vrot.slane %v112, %v125
  %v127 = vcombine.high %v119, %v119
  %v128 = vcombine.high %v126, %v126
  %v130 = vunpack.c.l.s4 1983009808
  %v131 = vunpack.c.0.s8 %v130
  %v132 = vlaneseq
  %v133 = vshrl.u32 %v132, 7
  %v134 = vsub.s32 %v131, %v133
  %v135 = vrot.slane %v29, %v134
  %vm140 = vcmask 572416
  %v141 = vsel %vm140, %v135, 0
  %vm143 = vcmask 1045504
  %v145 = vsel %vm143, %v102, 0
  %147 = vmatprep.subr.mxu0 0.0
  %148 = vmatpush1.msra.mxu0 %v30
  %149 = vmatprep.subr.mxu0 0.0
  %150 = vmatpush1.msra.mxu0 %v31
  %151 = vmatprep.subr.mxu0 0.0
  %152 = vmatpush1.msra.mxu0 %v32
  %153 = vmatprep.subr.mxu0 0.0
  %154 = vmatpush1.msra.mxu0 %v33
  %155 = vmatprep.subr.mxu0 0.0
  %156 = vmatpush1.msra.mxu0 %v34
  %157 = vmatprep.subr.mxu0 0.0
  %158 = vmatpush1.msra.mxu0 %v35
  %159 = vmatprep.subr.mxu0 0.0
  %160 = vmatpush1.msra.mxu0 %v36
  %161 = vmatprep.subr.mxu0 0.0
  %162 = vmatpush1.msra.mxu0 %v37
  %163 = vmatprep.subr.mxu0 0.0
  %164 = vmatpush1.msra.mxu0 %v38
  %165 = vmatprep.subr.mxu0 0.0
  %166 = vmatpush1.msra.mxu0 %v39
  %167 = vmatprep.subr.mxu0 0.0
  %168 = vmatpush1.msra.mxu0 %v40
  %169 = vmatprep.subr.mxu0 0.0
  %170 = vmatpush1.msra.mxu0 %v41
  %171 = vmatprep.subr.mxu0 0.0
  %172 = vmatpush1.msra.mxu0 %v42
  %173 = vmatprep.subr.mxu0 0.0
  %174 = vmatpush1.msra.mxu0 %v43
  %175 = vmatprep.subr.mxu0 0.0
  %176 = vmatpush1.msra.mxu0 %v44
  %177 = vmatprep.subr.mxu0 0.0
  %178 = vmatpush1.msra.mxu0 %v45
  %179 = vmatprep.subr.mxu0 0.0
  %180 = vmatpush1.msra.mxu0 %v46
  %181 = vmatprep.subr.mxu0 0.0
  %182 = vmatpush1.msra.mxu0 %v47
  %183 = vmatprep.subr.mxu0 0.0
  %184 = vmatpush1.msra.mxu0 %v48
  %185 = vmatprep.subr.mxu0 0.0
  %186 = vmatpush1.msra.mxu0 %v49
  %187 = vmatprep.subr.mxu0 0.0
  %188 = vmatpush1.msra.mxu0 %v50
  %189 = vmatprep.subr.mxu0 0.0
  %190 = vmatpush1.msra.mxu0 %v51
  %191 = vmatprep.subr.mxu0 0.0
  %192 = vmatpush1.msra.mxu0 %v52
  %193 = vmatprep.subr.mxu0 0.0
  %194 = vmatpush1.msra.mxu0 %v53
  %195 = vmatprep.subr.mxu0 0.0
  %196 = vmatpush1.msra.mxu0 %v54
  %197 = vmatprep.subr.mxu0 0.0
  %198 = vmatpush1.msra.mxu0 %v55
  %199 = vmatprep.subr.mxu0 0.0
  %200 = vmatpush1.msra.mxu0 %v56
  %201 = vmatprep.subr.mxu0 0.0
  %202 = vmatpush1.msra.mxu0 %v57
  %203 = vmatprep.subr.mxu0 0.0
  %204 = vmatpush1.msra.mxu0 %v58
  %205 = vmatprep.subr.mxu0 0.0
  %206 = vmatpush1.msra.mxu0 %v59
  %207 = vmatprep.subr.mxu0 0.0
  %208 = vmatpush1.msra.mxu0 %v60
  %209 = vmatprep.subr.mxu0 0.0
  %210 = vmatpush1.msra.mxu0 %v61
  %211 = vmatprep.mubr.f32.mxu0 %v127
  %212 = vmatmul.mubr.f32.gmra.mrb[0].mxu0 %v119
  %v213 = vpop.f32.mrb[0].mxu0
  %v214 = vadd.f32 %v108, %v213
  %v215 = vpop.f32.mrb[0].mxu0
  %216 = vdwg.mxu0
  %217 = vmatprep.subr.mxu0 0.0
  %218 = vmatpush1.msra.mxu0 %v62
  %219 = vmatprep.subr.mxu0 0.0
  %220 = vmatpush1.msra.mxu0 %v63
  %221 = vmatprep.subr.mxu0 0.0
  %222 = vmatpush1.msra.mxu0 %v64
  %223 = vmatprep.subr.mxu0 0.0
  %224 = vmatpush1.msra.mxu0 %v65
  %225 = vmatprep.subr.mxu0 0.0
  %226 = vmatpush1.msra.mxu0 %v66
  %227 = vmatprep.subr.mxu0 0.0
  %228 = vmatpush1.msra.mxu0 %v67
  %229 = vmatprep.subr.mxu0 0.0
  %230 = vmatpush1.msra.mxu0 %v68
  %231 = vmatprep.subr.mxu0 0.0
  %232 = vmatpush1.msra.mxu0 %v69
  %233 = vmatprep.subr.mxu0 0.0
  %234 = vmatpush1.msra.mxu0 %v70
  %235 = vmatprep.subr.mxu0 0.0
  %236 = vmatpush1.msra.mxu0 %v71
  %237 = vmatprep.subr.mxu0 0.0
  %238 = vmatpush1.msra.mxu0 %v72
  %239 = vmatprep.subr.mxu0 0.0
  %240 = vmatpush1.msra.mxu0 %v73
  %241 = vmatprep.subr.mxu0 0.0
  %242 = vmatpush1.msra.mxu0 %v74
  %243 = vmatprep.subr.mxu0 0.0
  %244 = vmatpush1.msra.mxu0 %v75
  %245 = vmatprep.subr.mxu0 0.0
  %246 = vmatpush1.msra.mxu0 %v76
  %247 = vmatprep.subr.mxu0 0.0
  %248 = vmatpush1.msra.mxu0 %v77
  %249 = vmatprep.subr.mxu0 0.0
  %250 = vmatpush1.msra.mxu0 %v78
  %251 = vmatprep.subr.mxu0 0.0
  %252 = vmatpush1.msra.mxu0 %v79
  %253 = vmatprep.subr.mxu0 0.0
  %254 = vmatpush1.msra.mxu0 %v80
  %255 = vmatprep.subr.mxu0 0.0
  %256 = vmatpush1.msra.mxu0 %v81
  %257 = vmatprep.subr.mxu0 0.0
  %258 = vmatpush1.msra.mxu0 %v82
  %259 = vmatprep.subr.mxu0 0.0
  %260 = vmatpush1.msra.mxu0 %v83
  %261 = vmatprep.subr.mxu0 0.0
  %262 = vmatpush1.msra.mxu0 %v84
  %263 = vmatprep.subr.mxu0 0.0
  %264 = vmatpush1.msra.mxu0 %v85
  %265 = vmatprep.subr.mxu0 0.0
  %266 = vmatpush1.msra.mxu0 %v86
  %267 = vmatprep.subr.mxu0 0.0
  %268 = vmatpush1.msra.mxu0 %v87
  %269 = vmatprep.subr.mxu0 0.0
  %270 = vmatpush1.msra.mxu0 %v88
  %271 = vmatprep.subr.mxu0 0.0
  %272 = vmatpush1.msra.mxu0 %v89
  %273 = vmatprep.subr.mxu0 0.0
  %274 = vmatpush1.msra.mxu0 %v90
  %275 = vmatprep.subr.mxu0 0.0
  %276 = vmatpush1.msra.mxu0 %v91
  %277 = vmatprep.subr.mxu0 0.0
  %278 = vmatpush1.msra.mxu0 %v92
  %279 = vmatprep.subr.mxu0 0.0
  %280 = vmatpush1.msra.mxu0 %v93
  %281 = vmatprep.mubr.f32.mxu0 %v128
  %282 = vmatmul.mubr.f32.gmra.mrb[0].mxu0 %v126
  %v283 = vpop.f32.mrb[0].mxu0
  %v284 = vadd.f32 %v214, %v283
  %v285 = vpop.f32.mrb[0].mxu0
  %286 = vdwg.mxu0
  %287 = vmatprep.subr.mxu0 0.0
  %288 = vmatpush1.msra.mxu0 %v94
  %289 = vmatprep.subr.mxu0 0.0
  %290 = vmatpush1.msra.mxu0 %v95
  %291 = vmatprep.subr.mxu0 0.0
  %292 = vmatpush1.msra.mxu0 %v96
  %293 = vmatprep.subr.mxu0 0.0
  %294 = vmatpush1.msra.mxu0 %v97
  %295 = vmatprep.subr.mxu0 0.0
  %296 = vmatpush1.msra.mxu0 %v98
  %297 = vmatprep.subr.mxu0 0.0
  %298 = vmatpush1.msra.mxu0 %v99
  %299 = vmatprep.subr.mxu0 0.0
  %300 = vmatpush1.msra.mxu0 %v100
  %301 = vmatprep.subr.mxu0 0.0
  %302 = vmatpush1.msra.mxu0 %v101
  %303 = vmatprep.subr.mxu0 0.0
  %304 = vmatpush1.msra.mxu0 %v145
  %305 = vmatprep.subr.mxu0 0.0
  %306 = vmatpush1.msra.mxu0 0.0
  %307 = vmatprep.subr.mxu0 0.0
  %308 = vmatpush1.msra.mxu0 0.0
  %309 = vmatprep.subr.mxu0 0.0
  %310 = vmatpush1.msra.mxu0 0.0
  %311 = vmatprep.subr.mxu0 0.0
  %312 = vmatpush1.msra.mxu0 0.0
  %313 = vmatprep.subr.mxu0 0.0
  %314 = vmatpush1.msra.mxu0 0.0
  %315 = vmatprep.subr.mxu0 0.0
  %316 = vmatpush1.msra.mxu0 0.0
  %317 = vmatprep.subr.mxu0 0.0
  %318 = vmatpush1.msra.mxu0 0.0
  %319 = vmatprep.subr.mxu0 0.0
  %320 = vmatpush1.msra.mxu0 0.0
  %321 = vmatprep.subr.mxu0 0.0
  %322 = vmatpush1.msra.mxu0 0.0
  %323 = vmatprep.subr.mxu0 0.0
  %324 = vmatpush1.msra.mxu0 0.0
  %325 = vmatprep.subr.mxu0 0.0
  %326 = vmatpush1.msra.mxu0 0.0
  %327 = vmatprep.subr.mxu0 0.0
  %328 = vmatpush1.msra.mxu0 0.0
  %329 = vmatprep.subr.mxu0 0.0
  %330 = vmatpush1.msra.mxu0 0.0
  %331 = vmatprep.subr.mxu0 0.0
  %332 = vmatpush1.msra.mxu0 0.0
  %333 = vmatprep.subr.mxu0 0.0
  %334 = vmatpush1.msra.mxu0 0.0
  %335 = vmatprep.subr.mxu0 0.0
  %336 = vmatpush1.msra.mxu0 0.0
  %337 = vmatprep.subr.mxu0 0.0
  %338 = vmatpush1.msra.mxu0 0.0
  %339 = vmatprep.subr.mxu0 0.0
  %340 = vmatpush1.msra.mxu0 0.0
  %341 = vmatprep.subr.mxu0 0.0
  %342 = vmatpush1.msra.mxu0 0.0
  %343 = vmatprep.subr.mxu0 0.0
  %344 = vmatpush1.msra.mxu0 0.0
  %345 = vmatprep.subr.mxu0 0.0
  %346 = vmatpush1.msra.mxu0 0.0
  %347 = vmatprep.subr.mxu0 0.0
  %348 = vmatpush1.msra.mxu0 0.0
  %349 = vmatprep.subr.mxu0 0.0
  %350 = vmatpush1.msra.mxu0 0.0
  %351 = vmatprep.mubr.f32.mxu0 0.0
  %352 = vmatmul.mubr.f32.gmra.mrb[0].mxu0 %v141
  %v353 = vpop.f32.mrb[0].mxu0
  %v354 = vadd.f32 %v284, %v353
  %v355 = vpop.f32.mrb[0].mxu0
  %356 = vdwg.mxu0
  %v357 = vmax.f32 %v354, 0.0
  %v358 = vld [vmem:[%s3] sm:$0xff]
  %v359 = vld [vmem:[%s3 + $0x8] sm:$0xff]
  %v360 = vld [vmem:[%s3 + $0x10] sm:$0xff]
  %v361 = vld [vmem:[%s3 + $0x18] sm:$0xff]
  %v362 = vld [vmem:[%s4] sm:$0x1]
  %v364 = vlaneseq
  %v365 = vshrl.u32 %v364, 7
  %v366 = vsub.s32 0, %v365
  %v367 = vrot.slane %v362, %v366
  %vm369 = vcmask 261120
  %v371 = vsel %vm369, %v357, 0
  %373 = vmatprep.subr.mxu0 0.0
  %374 = vmatpush1.msra.mxu0 %v358
  %375 = vmatprep.subr.mxu0 0.0
  %376 = vmatpush1.msra.mxu0 %v359
  %377 = vmatprep.subr.mxu0 0.0
  %378 = vmatpush1.msra.mxu0 %v360
  %379 = vmatprep.subr.mxu0 0.0
  %380 = vmatpush1.msra.mxu0 %v361
  %381 = vmatprep.subr.mxu0 0.0
  %382 = vmatpush1.msra.mxu0 0.0
  %383 = vmatprep.subr.mxu0 0.0
  %384 = vmatpush1.msra.mxu0 0.0
  %385 = vmatprep.subr.mxu0 0.0
  %386 = vmatpush1.msra.mxu0 0.0
  %387 = vmatprep.subr.mxu0 0.0
  %388 = vmatpush1.msra.mxu0 0.0
  %389 = vmatprep.subr.mxu0 0.0
  %390 = vmatpush1.msra.mxu0 0.0
  %391 = vmatprep.subr.mxu0 0.0
  %392 = vmatpush1.msra.mxu0 0.0
  %393 = vmatprep.subr.mxu0 0.0
  %394 = vmatpush1.msra.mxu0 0.0
  %395 = vmatprep.subr.mxu0 0.0
  %396 = vmatpush1.msra.mxu0 0.0
  %397 = vmatprep.subr.mxu0 0.0
  %398 = vmatpush1.msra.mxu0 0.0
  %399 = vmatprep.subr.mxu0 0.0
  %400 = vmatpush1.msra.mxu0 0.0
  %401 = vmatprep.subr.mxu0 0.0
  %402 = vmatpush1.msra.mxu0 0.0
  %403 = vmatprep.subr.mxu0 0.0
  %404 = vmatpush1.msra.mxu0 0.0
  %405 = vmatprep.subr.mxu0 0.0
  %406 = vmatpush1.msra.mxu0 0.0
  %407 = vmatprep.subr.mxu0 0.0
  %408 = vmatpush1.msra.mxu0 0.0
  %409 = vmatprep.subr.mxu0 0.0
  %410 = vmatpush1.msra.mxu0 0.0
  %411 = vmatprep.subr.mxu0 0.0
  %412 = vmatpush1.msra.mxu0 0.0
  %413 = vmatprep.subr.mxu0 0.0
  %414 = vmatpush1.msra.mxu0 0.0
  %415 = vmatprep.subr.mxu0 0.0
  %416 = vmatpush1.msra.mxu0 0.0
  %417 = vmatprep.subr.mxu0 0.0
  %418 = vmatpush1.msra.mxu0 0.0
  %419 = vmatprep.subr.mxu0 0.0
  %420 = vmatpush1.msra.mxu0 0.0
  %421 = vmatprep.subr.mxu0 0.0
  %422 = vmatpush1.msra.mxu0 0.0
  %423 = vmatprep.subr.mxu0 0.0
  %424 = vmatpush1.msra.mxu0 0.0
  %425 = vmatprep.subr.mxu0 0.0
  %426 = vmatpush1.msra.mxu0 0.0
  %427 = vmatprep.subr.mxu0 0.0
  %428 = vmatpush1.msra.mxu0 0.0
  %429 = vmatprep.subr.mxu0 0.0
  %430 = vmatpush1.msra.mxu0 0.0
  %431 = vmatprep.subr.mxu0 0.0
  %432 = vmatpush1.msra.mxu0 0.0
  %433 = vmatprep.subr.mxu0 0.0
  %434 = vmatpush1.msra.mxu0 0.0
  %435 = vmatprep.subr.mxu0 0.0
  %436 = vmatpush1.msra.mxu0 0.0
  %437 = vmatprep.mubr.f32.mxu0 0.0
  %438 = vmatmul.mubr.f32.gmra.mrb[0].mxu0 %v371
  %v439 = vpop.f32.mrb[0].mxu0
  %v440 = vadd.f32 %v367, %v439
  %v441 = vpop.f32.mrb[0].mxu0
  %442 = vdwg.mxu0
  %v443 = vmax.f32 %v440, 0.0
  %v444 = vld [vmem:[%s5] sm:$0xff]
  %v445 = vld [vmem:[%s5 + $0x8] sm:$0xff]
  %v446 = vld [vmem:[%s5 + $0x10] sm:$0xff]
  %v447 = vld [vmem:[%s5 + $0x18] sm:$0xff]
  %v448 = vld [vmem:[#allocation2] sm:$0x1]
  %v450 = vlaneseq
  %v451 = vshrl.u32 %v450, 7
  %v452 = vsub.s32 0, %v451
  %v453 = vrot.slane %v448, %v452
  %v456 = vsel %vm369, %v443, 0
  %458 = vmatprep.subr.mxu0 0.0
  %459 = vmatpush1.msra.mxu0 %v444
  %460 = vmatprep.subr.mxu0 0.0
  %461 = vmatpush1.msra.mxu0 %v445
  %462 = vmatprep.subr.mxu0 0.0
  %463 = vmatpush1.msra.mxu0 %v446
  %464 = vmatprep.subr.mxu0 0.0
  %465 = vmatpush1.msra.mxu0 %v447
  %466 = vmatprep.subr.mxu0 0.0
  %467 = vmatpush1.msra.mxu0 0.0
  %468 = vmatprep.subr.mxu0 0.0
  %469 = vmatpush1.msra.mxu0 0.0
  %470 = vmatprep.subr.mxu0 0.0
  %471 = vmatpush1.msra.mxu0 0.0
  %472 = vmatprep.subr.mxu0 0.0
  %473 = vmatpush1.msra.mxu0 0.0
  %474 = vmatprep.subr.mxu0 0.0
  %475 = vmatpush1.msra.mxu0 0.0
  %476 = vmatprep.subr.mxu0 0.0
  %477 = vmatpush1.msra.mxu0 0.0
  %478 = vmatprep.subr.mxu0 0.0
  %479 = vmatpush1.msra.mxu0 0.0
  %480 = vmatprep.subr.mxu0 0.0
  %481 = vmatpush1.msra.mxu0 0.0
  %482 = vmatprep.subr.mxu0 0.0
  %483 = vmatpush1.msra.mxu0 0.0
  %484 = vmatprep.subr.mxu0 0.0
  %485 = vmatpush1.msra.mxu0 0.0
  %486 = vmatprep.subr.mxu0 0.0
  %487 = vmatpush1.msra.mxu0 0.0
  %488 = vmatprep.subr.mxu0 0.0
  %489 = vmatpush1.msra.mxu0 0.0
  %490 = vmatprep.subr.mxu0 0.0
  %491 = vmatpush1.msra.mxu0 0.0
  %492 = vmatprep.subr.mxu0 0.0
  %493 = vmatpush1.msra.mxu0 0.0
  %494 = vmatprep.subr.mxu0 0.0
  %495 = vmatpush1.msra.mxu0 0.0
  %496 = vmatprep.subr.mxu0 0.0
  %497 = vmatpush1.msra.mxu0 0.0
  %498 = vmatprep.subr.mxu0 0.0
  %499 = vmatpush1.msra.mxu0 0.0
  %500 = vmatprep.subr.mxu0 0.0
  %501 = vmatpush1.msra.mxu0 0.0
  %502 = vmatprep.subr.mxu0 0.0
  %503 = vmatpush1.msra.mxu0 0.0
  %504 = vmatprep.subr.mxu0 0.0
  %505 = vmatpush1.msra.mxu0 0.0
  %506 = vmatprep.subr.mxu0 0.0
  %507 = vmatpush1.msra.mxu0 0.0
  %508 = vmatprep.subr.mxu0 0.0
  %509 = vmatpush1.msra.mxu0 0.0
  %510 = vmatprep.subr.mxu0 0.0
  %511 = vmatpush1.msra.mxu0 0.0
  %512 = vmatprep.subr.mxu0 0.0
  %513 = vmatpush1.msra.mxu0 0.0
  %514 = vmatprep.subr.mxu0 0.0
  %515 = vmatpush1.msra.mxu0 0.0
  %516 = vmatprep.subr.mxu0 0.0
  %517 = vmatpush1.msra.mxu0 0.0
  %518 = vmatprep.subr.mxu0 0.0
  %519 = vmatpush1.msra.mxu0 0.0
  %520 = vmatprep.subr.mxu0 0.0
  %521 = vmatpush1.msra.mxu0 0.0
  %522 = vmatprep.mubr.f32.mxu0 0.0
  %523 = vmatmul.mubr.f32.gmra.mrb[0].mxu0 %v456
  %v524 = vpop.f32.mrb[0].mxu0
  %v525 = vadd.f32 %v453, %v524
  %v526 = vpop.f32.mrb[0].mxu0
  %527 = vdwg.mxu0
  %vm528 = vcmask 1024
  %529 = vst.msk [vmem:[%s7] sm:$0x3] %vm528, %v525
  // Predicated region
  $region30: #{cnn_critic_forward.3} parent=0 // pred_check
    _
  $region31: #{cnn_critic_forward.3} parent=0 // pred_check_branch
    %531 = sbr.rel (0) target = $region33
  $region32: #{cnn_critic_forward.3} parent=0 // pred_region
    _
  $region33: #{cnn_critic_forward.3} parent=0 // pred_fallthru
    _
  // Predicated region
  $region34: #{cnn_critic_forward.3} parent=0 // pred_check
    _
  $region35: #{cnn_critic_forward.3} parent=0 // pred_check_branch
    %533 = sbr.rel (0) target = $region37
  $region36: #{cnn_critic_forward.3} parent=0 // pred_region
    _
  $region37: #{cnn_critic_forward.3} parent=0 // pred_fallthru
    _

// kernel: cnn_critic_forward.2
$region0: #{cnn_critic_forward.2}
  #allocation0 [shape = 'u32[]', space=smem, size = 0x4, offset = 0x4, fixed_abs, tag = 'smem constant byte address 0x4 - core index']
  #allocation1 [shape = 'u32[144,128]{1,0:T(1,128)}', space=vmem, size = 0x12000, scoped, tag = 'internal scratch']
  %s0 = inlined_call_operand.vmem [shape: f32[392,36], index: 0, kind: input, shape index: {}]
  %s1 = inlined_call_operand.vmem [shape: f32[9,72,36], index: 1, kind: input, shape index: {}]
  %s2 = inlined_call_operand.vmem [shape: f32[36,8], index: 2, kind: input, shape index: {}]
  %s3 = inlined_call_operand.vmem [shape: f32[1,8], index: 3, kind: input, shape index: {}]
  %s4 = inlined_call_operand.vmem [shape: f32[1,8], index: 4, kind: input, shape index: {}]
  %s5 = inlined_call_operand.vmem [shape: f32[72,16], index: 5, kind: input, shape index: {}]
  %s6 = inlined_call_operand.vmem [shape: f32[1,16], index: 6, kind: input, shape index: {}]
  %s7 = inlined_call_operand.vmem [shape: f32[1,16], index: 7, kind: input, shape index: {}]
  %s8 = inlined_call_operand.vmem [shape: f32[72,16], index: 8, kind: output, shape index: {}]
  %s9 = sld [smem:[#allocation0]]
  $region42: #{cnn_critic_forward.2} parent=0
    _
  %s11 = ssub.s32 1, %s9
  %s12 = scalar_select 0, %s11, %s9
  // Predicated region
  $region2: #{cnn_critic_forward.2} parent=0 // pred_check
    _
  $region3: #{cnn_critic_forward.2} parent=0 // pred_check_branch
    %14 = sbr.rel (0) target = $region5
  $region4: #{cnn_critic_forward.2} parent=0 // pred_region
    _
  $region5: #{cnn_critic_forward.2} parent=0 // pred_fallthru
    _
  // Predicated region
  $region6: #{cnn_critic_forward.2} parent=0 // pred_check
    _
  $region7: #{cnn_critic_forward.2} parent=0 // pred_check_branch
    %16 = sbr.rel (0) target = $region9
  $region8: #{cnn_critic_forward.2} parent=0 // pred_region
    _
  $region9: #{cnn_critic_forward.2} parent=0 // pred_fallthru
    _
  // Predicated region
  $region10: #{cnn_critic_forward.2} parent=0 // pred_check
    _
  $region11: #{cnn_critic_forward.2} parent=0 // pred_check_branch
    %18 = sbr.rel (0) target = $region13
  $region12: #{cnn_critic_forward.2} parent=0 // pred_region
    _
  $region13: #{cnn_critic_forward.2} parent=0 // pred_fallthru
    _
  // Predicated region
  $region14: #{cnn_critic_forward.2} parent=0 // pred_check
    _
  $region15: #{cnn_critic_forward.2} parent=0 // pred_check_branch
    %20 = sbr.rel (0) target = $region17
  $region16: #{cnn_critic_forward.2} parent=0 // pred_region
    _
  $region17: #{cnn_critic_forward.2} parent=0 // pred_fallthru
    _
  // Predicated region
  $region18: #{cnn_critic_forward.2} parent=0 // pred_check
    _
  $region19: #{cnn_critic_forward.2} parent=0 // pred_check_branch
    %22 = sbr.rel (0) target = $region21
  $region20: #{cnn_critic_forward.2} parent=0 // pred_region
    _
  $region21: #{cnn_critic_forward.2} parent=0 // pred_fallthru
    _
  // Predicated region
  $region22: #{cnn_critic_forward.2} parent=0 // pred_check
    _
  $region23: #{cnn_critic_forward.2} parent=0 // pred_check_branch
    %24 = sbr.rel (0) target = $region25
  $region24: #{cnn_critic_forward.2} parent=0 // pred_region
    _
  $region25: #{cnn_critic_forward.2} parent=0 // pred_fallthru
    _
  // Predicated region
  $region26: #{cnn_critic_forward.2} parent=0 // pred_check
    _
  $region27: #{cnn_critic_forward.2} parent=0 // pred_check_branch
    %26 = sbr.rel (0) target = $region29
  $region28: #{cnn_critic_forward.2} parent=0 // pred_region
    _
  $region29: #{cnn_critic_forward.2} parent=0 // pred_fallthru
    _
  // Predicated region
  $region30: #{cnn_critic_forward.2} parent=0 // pred_check
    _
  $region31: #{cnn_critic_forward.2} parent=0 // pred_check_branch
    %28 = sbr.rel (0) target = $region33
  $region32: #{cnn_critic_forward.2} parent=0 // pred_region
    _
  $region33: #{cnn_critic_forward.2} parent=0 // pred_fallthru
    _
  %v29 = vld [vmem:[%s2] sm:$0xff]
  %v30 = vld [vmem:[%s2 + $0x8] sm:$0xff]
  %v31 = vld [vmem:[%s2 + $0x10] sm:$0xff]
  %v32 = vld [vmem:[%s2 + $0x18] sm:$0xff]
  %v33 = vld [vmem:[%s2 + $0x20] sm:$0xf]
  %v34 = vld [vmem:[%s0] sm:$0xff]
  %v35 = vld [vmem:[%s0 + $0x8] sm:$0xff]
  %v36 = vld [vmem:[%s0 + $0x10] sm:$0xff]
  %v37 = vld [vmem:[%s0 + $0x18] sm:$0xff]
  %v38 = vld [vmem:[%s0 + $0x20] sm:$0xff]
  %v39 = vld [vmem:[%s0 + $0x28] sm:$0xff]
  %v40 = vld [vmem:[%s0 + $0x30] sm:$0xff]
  %v41 = vld [vmem:[%s0 + $0x38] sm:$0xff]
  %v42 = vld [vmem:[%s0 + $0x40] sm:$0xff]
  %v43 = vld [vmem:[%s0 + $0x48] sm:$0xff]
  %v44 = vld [vmem:[%s0 + $0x50] sm:$0xff]
  %v45 = vld [vmem:[%s0 + $0x58] sm:$0xff]
  %v46 = vld [vmem:[%s0 + $0x60] sm:$0xff]
  %v47 = vld [vmem:[%s0 + $0x68] sm:$0xff]
  %v48 = vld [vmem:[%s0 + $0x70] sm:$0xff]
  %v49 = vld [vmem:[%s0 + $0x78] sm:$0xff]
  %v50 = vld [vmem:[%s0 + $0x80] sm:$0xff]
  %v51 = vld [vmem:[%s0 + $0x88] sm:$0xff]
  %v52 = vld [vmem:[%s0 + $0x90] sm:$0xff]
  %v53 = vld [vmem:[%s0 + $0x98] sm:$0xff]
  %v54 = vld [vmem:[%s0 + $0xa0] sm:$0xff]
  %v55 = vld [vmem:[%s0 + $0xa8] sm:$0xff]
  %v56 = vld [vmem:[%s0 + $0xb0] sm:$0xff]
  %v57 = vld [vmem:[%s0 + $0xb8] sm:$0xff]
  %v58 = vld [vmem:[%s0 + $0xc0] sm:$0xff]
  %v59 = vld [vmem:[%s0 + $0xc8] sm:$0xff]
  %v60 = vld [vmem:[%s0 + $0xd0] sm:$0xff]
  %v61 = vld [vmem:[%s0 + $0xd8] sm:$0xff]
  %v62 = vld [vmem:[%s0 + $0xe0] sm:$0xff]
  %v63 = vld [vmem:[%s0 + $0xe8] sm:$0xff]
  %v64 = vld [vmem:[%s0 + $0xf0] sm:$0xff]
  %v65 = vld [vmem:[%s0 + $0xf8] sm:$0xff]
  %v66 = vld [vmem:[%s0 + $0x100] sm:$0xff]
  %v67 = vld [vmem:[%s0 + $0x108] sm:$0xff]
  %v68 = vld [vmem:[%s0 + $0x110] sm:$0xff]
  %v69 = vld [vmem:[%s0 + $0x118] sm:$0xff]
  %v70 = vld [vmem:[%s0 + $0x120] sm:$0xff]
  %v71 = vld [vmem:[%s0 + $0x128] sm:$0xff]
  %v72 = vld [vmem:[%s0 + $0x130] sm:$0xff]
  %v73 = vld [vmem:[%s0 + $0x138] sm:$0xff]
  %v74 = vld [vmem:[%s0 + $0x140] sm:$0xff]
  %v75 = vld [vmem:[%s0 + $0x148] sm:$0xff]
  %v76 = vld [vmem:[%s0 + $0x150] sm:$0xff]
  %v77 = vld [vmem:[%s0 + $0x158] sm:$0xff]
  %v78 = vld [vmem:[%s0 + $0x160] sm:$0xff]
  %v79 = vld [vmem:[%s0 + $0x168] sm:$0xff]
  %v80 = vld [vmem:[%s0 + $0x170] sm:$0xff]
  %v81 = vld [vmem:[%s0 + $0x178] sm:$0xff]
  %v82 = vld [vmem:[%s0 + $0x180] sm:$0xff]
  %vm83 = vcmask 293888
  %v85 = vsel %vm83, %v34, 0
  %v88 = vsel %vm83, %v35, 0
  %v91 = vsel %vm83, %v36, 0
  %v94 = vsel %vm83, %v37, 0
  %v97 = vsel %vm83, %v38, 0
  %v100 = vsel %vm83, %v39, 0
  %v103 = vsel %vm83, %v40, 0
  %v106 = vsel %vm83, %v41, 0
  %v109 = vsel %vm83, %v42, 0
  %v112 = vsel %vm83, %v43, 0
  %v115 = vsel %vm83, %v44, 0
  %v118 = vsel %vm83, %v45, 0
  %v121 = vsel %vm83, %v46, 0
  %v124 = vsel %vm83, %v47, 0
  %v127 = vsel %vm83, %v48, 0
  %v130 = vsel %vm83, %v49, 0
  %v133 = vsel %vm83, %v50, 0
  %v136 = vsel %vm83, %v51, 0
  %v139 = vsel %vm83, %v52, 0
  %v142 = vsel %vm83, %v53, 0
  %v145 = vsel %vm83, %v54, 0
  %v148 = vsel %vm83, %v55, 0
  %v151 = vsel %vm83, %v56, 0
  %v154 = vsel %vm83, %v57, 0
  %v157 = vsel %vm83, %v58, 0
  %v160 = vsel %vm83, %v59, 0
  %v163 = vsel %vm83, %v60, 0
  %v166 = vsel %vm83, %v61, 0
  %v169 = vsel %vm83, %v62, 0
  %v172 = vsel %vm83, %v63, 0
  %v175 = vsel %vm83, %v64, 0
  %v178 = vsel %vm83, %v65, 0
  %v181 = vsel %vm83, %v66, 0
  %v184 = vsel %vm83, %v67, 0
  %v187 = vsel %vm83, %v68, 0
  %v190 = vsel %vm83, %v69, 0
  %v193 = vsel %vm83, %v70, 0
  %v196 = vsel %vm83, %v71, 0
  %v199 = vsel %vm83, %v72, 0
  %v202 = vsel %vm83, %v73, 0
  %v205 = vsel %vm83, %v74, 0
  %v208 = vsel %vm83, %v75, 0
  %v211 = vsel %vm83, %v76, 0
  %v214 = vsel %vm83, %v77, 0
  %v217 = vsel %vm83, %v78, 0
  %v220 = vsel %vm83, %v79, 0
  %v223 = vsel %vm83, %v80, 0
  %v226 = vsel %vm83, %v81, 0
  %v229 = vsel %vm83, %v82, 0
  %vm231 = vcmask 1043456
  %v233 = vsel %vm231, %v33, 0
  %235 = vmatprep.subr.mxu0 0.0
  %236 = vmatpush1.msra.mxu0 %v29
  %237 = vmatprep.subr.mxu0 0.0
  %238 = vmatpush1.msra.mxu0 %v30
  %239 = vmatprep.subr.mxu0 0.0
  %240 = vmatpush1.msra.mxu0 %v31
  %241 = vmatprep.subr.mxu0 0.0
  %242 = vmatpush1.msra.mxu0 %v32
  %243 = vmatprep.subr.mxu0 0.0
  %244 = vmatpush1.msra.mxu0 %v233
  %245 = vmatprep.subr.mxu0 0.0
  %246 = vmatpush1.msra.mxu0 0.0
  %247 = vmatprep.subr.mxu0 0.0
  %248 = vmatpush1.msra.mxu0 0.0
  %249 = vmatprep.subr.mxu0 0.0
  %250 = vmatpush1.msra.mxu0 0.0
  %251 = vmatprep.subr.mxu0 0.0
  %252 = vmatpush1.msra.mxu0 0.0
  %253 = vmatprep.subr.mxu0 0.0
  %254 = vmatpush1.msra.mxu0 0.0
  %255 = vmatprep.subr.mxu0 0.0
  %256 = vmatpush1.msra.mxu0 0.0
  %257 = vmatprep.subr.mxu0 0.0
  %258 = vmatpush1.msra.mxu0 0.0
  %259 = vmatprep.subr.mxu0 0.0
  %260 = vmatpush1.msra.mxu0 0.0
  %261 = vmatprep.subr.mxu0 0.0
  %262 = vmatpush1.msra.mxu0 0.0
  %263 = vmatprep.subr.mxu0 0.0
  %264 = vmatpush1.msra.mxu0 0.0
  %265 = vmatprep.subr.mxu0 0.0
  %266 = vmatpush1.msra.mxu0 0.0
  %267 = vmatprep.subr.mxu0 0.0
  %268 = vmatpush1.msra.mxu0 0.0
  %269 = vmatprep.subr.mxu0 0.0
  %270 = vmatpush1.msra.mxu0 0.0
  %271 = vmatprep.subr.mxu0 0.0
  %272 = vmatpush1.msra.mxu0 0.0
  %273 = vmatprep.subr.mxu0 0.0
  %274 = vmatpush1.msra.mxu0 0.0
  %275 = vmatprep.subr.mxu0 0.0
  %276 = vmatpush1.msra.mxu0 0.0
  %277 = vmatprep.subr.mxu0 0.0
  %278 = vmatpush1.msra.mxu0 0.0
  %279 = vmatprep.subr.mxu0 0.0
  %280 = vmatpush1.msra.mxu0 0.0
  %281 = vmatprep.subr.mxu0 0.0
  %282 = vmatpush1.msra.mxu0 0.0
  %283 = vmatprep.subr.mxu0 0.0
  %284 = vmatpush1.msra.mxu0 0.0
  %285 = vmatprep.subr.mxu0 0.0
  %286 = vmatpush1.msra.mxu0 0.0
  %287 = vmatprep.subr.mxu0 0.0
  %288 = vmatpush1.msra.mxu0 0.0
  %289 = vmatprep.subr.mxu0 0.0
  %290 = vmatpush1.msra.mxu0 0.0
  %291 = vmatprep.subr.mxu0 0.0
  %292 = vmatpush1.msra.mxu0 0.0
  %293 = vmatprep.subr.mxu0 0.0
  %294 = vmatpush1.msra.mxu0 0.0
  %295 = vmatprep.subr.mxu0 0.0
  %296 = vmatpush1.msra.mxu0 0.0
  %297 = vmatprep.subr.mxu0 0.0
  %298 = vmatpush1.msra.mxu0 0.0
  %299 = vmatprep.mubr.f32.mxu0 0.0
  %300 = vmatmul.mubr.f32.gmra.mrb[0].mxu0 %v85
  %v301 = vpop.f32.mrb[0].mxu0
  %v302 = vadd.f32 0.0, %v301
  %v303 = vpop.f32.mrb[0].mxu0
  %304 = vmatprep.mubr.f32.mxu0 0.0
  %305 = vmatmul.mubr.f32.gmra.mrb[0].mxu0 %v88
  %v306 = vpop.f32.mrb[0].mxu0
  %v307 = vadd.f32 0.0, %v306
  %v308 = vpop.f32.mrb[0].mxu0
  %309 = vmatprep.mubr.f32.mxu0 0.0
  %310 = vmatmul.mubr.f32.gmra.mrb[0].mxu0 %v91
  %v311 = vpop.f32.mrb[0].mxu0
  %v312 = vadd.f32 0.0, %v311
  %v313 = vpop.f32.mrb[0].mxu0
  %314 = vmatprep.mubr.f32.mxu0 0.0
  %315 = vmatmul.mubr.f32.gmra.mrb[0].mxu0 %v94
  %v316 = vpop.f32.mrb[0].mxu0
  %v317 = vadd.f32 0.0, %v316
  %v318 = vpop.f32.mrb[0].mxu0
  %319 = vmatprep.mubr.f32.mxu0 0.0
  %320 = vmatmul.mubr.f32.gmra.mrb[0].mxu0 %v97
  %v321 = vpop.f32.mrb[0].mxu0
  %v322 = vadd.f32 0.0, %v321
  %v323 = vpop.f32.mrb[0].mxu0
  %324 = vmatprep.mubr.f32.mxu0 0.0
  %325 = vmatmul.mubr.f32.gmra.mrb[0].mxu0 %v100
  %v326 = vpop.f32.mrb[0].mxu0
  %v327 = vadd.f32 0.0, %v326
  %v328 = vpop.f32.mrb[0].mxu0
  %329 = vmatprep.mubr.f32.mxu0 0.0
  %330 = vmatmul.mubr.f32.gmra.mrb[0].mxu0 %v103
  %v331 = vpop.f32.mrb[0].mxu0
  %v332 = vadd.f32 0.0, %v331
  %v333 = vpop.f32.mrb[0].mxu0
  %334 = vmatprep.mubr.f32.mxu0 0.0
  %335 = vmatmul.mubr.f32.gmra.mrb[0].mxu0 %v106
  %v336 = vpop.f32.mrb[0].mxu0
  %v337 = vadd.f32 0.0, %v336
  %v338 = vpop.f32.mrb[0].mxu0
  %339 = vmatprep.mubr.f32.mxu0 0.0
  %340 = vmatmul.mubr.f32.gmra.mrb[0].mxu0 %v109
  %v341 = vpop.f32.mrb[0].mxu0
  %v342 = vadd.f32 0.0, %v341
  %v343 = vpop.f32.mrb[0].mxu0
  %344 = vmatprep.mubr.f32.mxu0 0.0
  %345 = vmatmul.mubr.f32.gmra.mrb[0].mxu0 %v112
  %v346 = vpop.f32.mrb[0].mxu0
  %v347 = vadd.f32 0.0, %v346
  %v348 = vpop.f32.mrb[0].mxu0
  %349 = vmatprep.mubr.f32.mxu0 0.0
  %350 = vmatmul.mubr.f32.gmra.mrb[0].mxu0 %v115
  %v351 = vpop.f32.mrb[0].mxu0
  %v352 = vadd.f32 0.0, %v351
  %v353 = vpop.f32.mrb[0].mxu0
  %354 = vmatprep.mubr.f32.mxu0 0.0
  %355 = vmatmul.mubr.f32.gmra.mrb[0].mxu0 %v118
  %v356 = vpop.f32.mrb[0].mxu0
  %v357 = vadd.f32 0.0, %v356
  %v358 = vpop.f32.mrb[0].mxu0
  %359 = vmatprep.mubr.f32.mxu0 0.0
  %360 = vmatmul.mubr.f32.gmra.mrb[0].mxu0 %v121
  %v361 = vpop.f32.mrb[0].mxu0
  %v362 = vadd.f32 0.0, %v361
  %v363 = vpop.f32.mrb[0].mxu0
  %364 = vmatprep.mubr.f32.mxu0 0.0
  %365 = vmatmul.mubr.f32.gmra.mrb[0].mxu0 %v124
  %v366 = vpop.f32.mrb[0].mxu0
  %v367 = vadd.f32 0.0, %v366
  %v368 = vpop.f32.mrb[0].mxu0
  %369 = vmatprep.mubr.f32.mxu0 0.0
  %370 = vmatmul.mubr.f32.gmra.mrb[0].mxu0 %v127
  %v371 = vpop.f32.mrb[0].mxu0
  %v372 = vadd.f32 0.0, %v371
  %v373 = vpop.f32.mrb[0].mxu0
  %374 = vmatprep.mubr.f32.mxu0 0.0
  %375 = vmatmul.mubr.f32.gmra.mrb[0].mxu0 %v130
  %v376 = vpop.f32.mrb[0].mxu0
  %v377 = vadd.f32 0.0, %v376
  %v378 = vpop.f32.mrb[0].mxu0
  %379 = vmatprep.mubr.f32.mxu0 0.0
  %380 = vmatmul.mubr.f32.gmra.mrb[0].mxu0 %v133
  %v381 = vpop.f32.mrb[0].mxu0
  %v382 = vadd.f32 0.0, %v381
  %v383 = vpop.f32.mrb[0].mxu0
  %384 = vmatprep.mubr.f32.mxu0 0.0
  %385 = vmatmul.mubr.f32.gmra.mrb[0].mxu0 %v136
  %v386 = vpop.f32.mrb[0].mxu0
  %v387 = vadd.f32 0.0, %v386
  %v388 = vpop.f32.mrb[0].mxu0
  %389 = vmatprep.mubr.f32.mxu0 0.0
  %390 = vmatmul.mubr.f32.gmra.mrb[0].mxu0 %v139
  %v391 = vpop.f32.mrb[0].mxu0
  %v392 = vadd.f32 0.0, %v391
  %v393 = vpop.f32.mrb[0].mxu0
  %394 = vmatprep.mubr.f32.mxu0 0.0
  %395 = vmatmul.mubr.f32.gmra.mrb[0].mxu0 %v142
  %v396 = vpop.f32.mrb[0].mxu0
  %v397 = vadd.f32 0.0, %v396
  %v398 = vpop.f32.mrb[0].mxu0
  %399 = vmatprep.mubr.f32.mxu0 0.0
  %400 = vmatmul.mubr.f32.gmra.mrb[0].mxu0 %v145
  %v401 = vpop.f32.mrb[0].mxu0
  %v402 = vadd.f32 0.0, %v401
  %v403 = vpop.f32.mrb[0].mxu0
  %404 = vmatprep.mubr.f32.mxu0 0.0
  %405 = vmatmul.mubr.f32.gmra.mrb[0].mxu0 %v148
  %v406 = vpop.f32.mrb[0].mxu0
  %v407 = vadd.f32 0.0, %v406
  %v408 = vpop.f32.mrb[0].mxu0
  %409 = vmatprep.mubr.f32.mxu0 0.0
  %410 = vmatmul.mubr.f32.gmra.mrb[0].mxu0 %v151
  %v411 = vpop.f32.mrb[0].mxu0
  %v412 = vadd.f32 0.0, %v411
  %v413 = vpop.f32.mrb[0].mxu0
  %414 = vmatprep.mubr.f32.mxu0 0.0
  %415 = vmatmul.mubr.f32.gmra.mrb[0].mxu0 %v154
  %v416 = vpop.f32.mrb[0].mxu0
  %v417 = vadd.f32 0.0, %v416
  %v418 = vpop.f32.mrb[0].mxu0
  %419 = vmatprep.mubr.f32.mxu0 0.0
  %420 = vmatmul.mubr.f32.gmra.mrb[0].mxu0 %v157
  %v421 = vpop.f32.mrb[0].mxu0
  %v422 = vadd.f32 0.0, %v421
  %v423 = vpop.f32.mrb[0].mxu0
  %424 = vmatprep.mubr.f32.mxu0 0.0
  %425 = vmatmul.mubr.f32.gmra.mrb[0].mxu0 %v160
  %v426 = vpop.f32.mrb[0].mxu0
  %v427 = vadd.f32 0.0, %v426
  %v428 = vpop.f32.mrb[0].mxu0
  %429 = vmatprep.mubr.f32.mxu0 0.0
  %430 = vmatmul.mubr.f32.gmra.mrb[0].mxu0 %v163
  %v431 = vpop.f32.mrb[0].mxu0
  %v432 = vadd.f32 0.0, %v431
  %v433 = vpop.f32.mrb[0].mxu0
  %434 = vmatprep.mubr.f32.mxu0 0.0
  %435 = vmatmul.mubr.f32.gmra.mrb[0].mxu0 %v166
  %v436 = vpop.f32.mrb[0].mxu0
  %v437 = vadd.f32 0.0, %v436
  %v438 = vpop.f32.mrb[0].mxu0
  %439 = vmatprep.mubr.f32.mxu0 0.0
  %440 = vmatmul.mubr.f32.gmra.mrb[0].mxu0 %v169
  %v441 = vpop.f32.mrb[0].mxu0
  %v442 = vadd.f32 0.0, %v441
  %v443 = vpop.f32.mrb[0].mxu0
  %444 = vmatprep.mubr.f32.mxu0 0.0
  %445 = vmatmul.mubr.f32.gmra.mrb[0].mxu0 %v172
  %v446 = vpop.f32.mrb[0].mxu0
  %v447 = vadd.f32 0.0, %v446
  %v448 = vpop.f32.mrb[0].mxu0
  %449 = vmatprep.mubr.f32.mxu0 0.0
  %450 = vmatmul.mubr.f32.gmra.mrb[0].mxu0 %v175
  %v451 = vpop.f32.mrb[0].mxu0
  %v452 = vadd.f32 0.0, %v451
  %v453 = vpop.f32.mrb[0].mxu0
  %454 = vmatprep.mubr.f32.mxu0 0.0
  %455 = vmatmul.mubr.f32.gmra.mrb[0].mxu0 %v178
  %v456 = vpop.f32.mrb[0].mxu0
  %v457 = vadd.f32 0.0, %v456
  %v458 = vpop.f32.mrb[0].mxu0
  %459 = vmatprep.mubr.f32.mxu0 0.0
  %460 = vmatmul.mubr.f32.gmra.mrb[0].mxu0 %v181
  %v461 = vpop.f32.mrb[0].mxu0
  %v462 = vadd.f32 0.0, %v461
  %v463 = vpop.f32.mrb[0].mxu0
  %464 = vmatprep.mubr.f32.mxu0 0.0
  %465 = vmatmul.mubr.f32.gmra.mrb[0].mxu0 %v184
  %v466 = vpop.f32.mrb[0].mxu0
  %v467 = vadd.f32 0.0, %v466
  %v468 = vpop.f32.mrb[0].mxu0
  %469 = vmatprep.mubr.f32.mxu0 0.0
  %470 = vmatmul.mubr.f32.gmra.mrb[0].mxu0 %v187
  %v471 = vpop.f32.mrb[0].mxu0
  %v472 = vadd.f32 0.0, %v471
  %v473 = vpop.f32.mrb[0].mxu0
  %474 = vmatprep.mubr.f32.mxu0 0.0
  %475 = vmatmul.mubr.f32.gmra.mrb[0].mxu0 %v190
  %v476 = vpop.f32.mrb[0].mxu0
  %v477 = vadd.f32 0.0, %v476
  %v478 = vpop.f32.mrb[0].mxu0
  %479 = vmatprep.mubr.f32.mxu0 0.0
  %480 = vmatmul.mubr.f32.gmra.mrb[0].mxu0 %v193
  %v481 = vpop.f32.mrb[0].mxu0
  %v482 = vadd.f32 0.0, %v481
  %v483 = vpop.f32.mrb[0].mxu0
  %484 = vmatprep.mubr.f32.mxu0 0.0
  %485 = vmatmul.mubr.f32.gmra.mrb[0].mxu0 %v196
  %v486 = vpop.f32.mrb[0].mxu0
  %v487 = vadd.f32 0.0, %v486
  %v488 = vpop.f32.mrb[0].mxu0
  %489 = vmatprep.mubr.f32.mxu0 0.0
  %490 = vmatmul.mubr.f32.gmra.mrb[0].mxu0 %v199
  %v491 = vpop.f32.mrb[0].mxu0
  %v492 = vadd.f32 0.0, %v491
  %v493 = vpop.f32.mrb[0].mxu0
  %494 = vmatprep.mubr.f32.mxu0 0.0
  %495 = vmatmul.mubr.f32.gmra.mrb[0].mxu0 %v202
  %v496 = vpop.f32.mrb[0].mxu0
  %v497 = vadd.f32 0.0, %v496
  %v498 = vpop.f32.mrb[0].mxu0
  %499 = vmatprep.mubr.f32.mxu0 0.0
  %500 = vmatmul.mubr.f32.gmra.mrb[0].mxu0 %v205
  %v501 = vpop.f32.mrb[0].mxu0
  %v502 = vadd.f32 0.0, %v501
  %v503 = vpop.f32.mrb[0].mxu0
  %504 = vmatprep.mubr.f32.mxu0 0.0
  %505 = vmatmul.mubr.f32.gmra.mrb[0].mxu0 %v208
  %v506 = vpop.f32.mrb[0].mxu0
  %v507 = vadd.f32 0.0, %v506
  %v508 = vpop.f32.mrb[0].mxu0
  %509 = vmatprep.mubr.f32.mxu0 0.0
  %510 = vmatmul.mubr.f32.gmra.mrb[0].mxu0 %v211
  %v511 = vpop.f32.mrb[0].mxu0
  %v512 = vadd.f32 0.0, %v511
  %v513 = vpop.f32.mrb[0].mxu0
  %514 = vmatprep.mubr.f32.mxu0 0.0
  %515 = vmatmul.mubr.f32.gmra.mrb[0].mxu0 %v214
  %v516 = vpop.f32.mrb[0].mxu0
  %v517 = vadd.f32 0.0, %v516
  %v518 = vpop.f32.mrb[0].mxu0
  %519 = vmatprep.mubr.f32.mxu0 0.0
  %520 = vmatmul.mubr.f32.gmra.mrb[0].mxu0 %v217
  %v521 = vpop.f32.mrb[0].mxu0
  %v522 = vadd.f32 0.0, %v521
  %v523 = vpop.f32.mrb[0].mxu0
  %524 = vmatprep.mubr.f32.mxu0 0.0
  %525 = vmatmul.mubr.f32.gmra.mrb[0].mxu0 %v220
  %v526 = vpop.f32.mrb[0].mxu0
  %v527 = vadd.f32 0.0, %v526
  %v528 = vpop.f32.mrb[0].mxu0
  %529 = vmatprep.mubr.f32.mxu0 0.0
  %530 = vmatmul.mubr.f32.gmra.mrb[0].mxu0 %v223
  %v531 = vpop.f32.mrb[0].mxu0
  %v532 = vadd.f32 0.0, %v531
  %v533 = vpop.f32.mrb[0].mxu0
  %534 = vmatprep.mubr.f32.mxu0 0.0
  %535 = vmatmul.mubr.f32.gmra.mrb[0].mxu0 %v226
  %v536 = vpop.f32.mrb[0].mxu0
  %v537 = vadd.f32 0.0, %v536
  %v538 = vpop.f32.mrb[0].mxu0
  %539 = vmatprep.mubr.f32.mxu0 0.0
  %540 = vmatmul.mubr.f32.gmra.mrb[0].mxu0 %v229
  %v541 = vpop.f32.mrb[0].mxu0
  %v542 = vadd.f32 0.0, %v541
  %v543 = vpop.f32.mrb[0].mxu0
  %544 = vdwg.mxu0
  %vm545 = vcmask 64512
  %v546 = vsel %vm545, %v302, 0.0
  %v547 = vsel %vm545, %v307, 0.0
  %v548 = vadd.f32 %v546, %v547
  %v549 = vsel %vm545, %v312, 0.0
  %v550 = vadd.f32 %v548, %v549
  %v551 = vsel %vm545, %v317, 0.0
  %v552 = vadd.f32 %v550, %v551
  %v553 = vsel %vm545, %v322, 0.0
  %v554 = vadd.f32 %v552, %v553
  %v555 = vsel %vm545, %v327, 0.0
  %v556 = vadd.f32 %v554, %v555
  %v557 = vsel %vm545, %v332, 0.0
  %v558 = vadd.f32 %v556, %v557
  %v559 = vsel %vm545, %v337, 0.0
  %v560 = vadd.f32 %v558, %v559
  %v561 = vsel %vm545, %v342, 0.0
  %v562 = vadd.f32 %v560, %v561
  %v563 = vsel %vm545, %v347, 0.0
  %v564 = vadd.f32 %v562, %v563
  %v565 = vsel %vm545, %v352, 0.0
  %v566 = vadd.f32 %v564, %v565
  %v567 = vsel %vm545, %v357, 0.0
  %v568 = vadd.f32 %v566, %v567
  %v569 = vsel %vm545, %v362, 0.0
  %v570 = vadd.f32 %v568, %v569
  %v571 = vsel %vm545, %v367, 0.0
  %v572 = vadd.f32 %v570, %v571
  %v573 = vsel %vm545, %v372, 0.0
  %v574 = vadd.f32 %v572, %v573
  %v575 = vsel %vm545, %v377, 0.0
  %v576 = vadd.f32 %v574, %v575
  %v577 = vsel %vm545, %v382, 0.0
  %v578 = vadd.f32 %v576, %v577
  %v579 = vsel %vm545, %v387, 0.0
  %v580 = vadd.f32 %v578, %v579
  %v581 = vsel %vm545, %v392, 0.0
  %v582 = vadd.f32 %v580, %v581
  %v583 = vsel %vm545, %v397, 0.0
  %v584 = vadd.f32 %v582, %v583
  %v585 = vsel %vm545, %v402, 0.0
  %v586 = vadd.f32 %v584, %v585
  %v587 = vsel %vm545, %v407, 0.0
  %v588 = vadd.f32 %v586, %v587
  %v589 = vsel %vm545, %v412, 0.0
  %v590 = vadd.f32 %v588, %v589
  %v591 = vsel %vm545, %v417, 0.0
  %v592 = vadd.f32 %v590, %v591
  %v593 = vsel %vm545, %v422, 0.0
  %v594 = vadd.f32 %v592, %v593
  %v595 = vsel %vm545, %v427, 0.0
  %v596 = vadd.f32 %v594, %v595
  %v597 = vsel %vm545, %v432, 0.0
  %v598 = vadd.f32 %v596, %v597
  %v599 = vsel %vm545, %v437, 0.0
  %v600 = vadd.f32 %v598, %v599
  %v601 = vsel %vm545, %v442, 0.0
  %v602 = vadd.f32 %v600, %v601
  %v603 = vsel %vm545, %v447, 0.0
  %v604 = vadd.f32 %v602, %v603
  %v605 = vsel %vm545, %v452, 0.0
  %v606 = vadd.f32 %v604, %v605
  %v607 = vsel %vm545, %v457, 0.0
  %v608 = vadd.f32 %v606, %v607
  %v609 = vsel %vm545, %v462, 0.0
  %v610 = vadd.f32 %v608, %v609
  %v611 = vsel %vm545, %v467, 0.0
  %v612 = vadd.f32 %v610, %v611
  %v613 = vsel %vm545, %v472, 0.0
  %v614 = vadd.f32 %v612, %v613
  %v615 = vsel %vm545, %v477, 0.0
  %v616 = vadd.f32 %v614, %v615
  %v617 = vsel %vm545, %v482, 0.0
  %v618 = vadd.f32 %v616, %v617
  %v619 = vsel %vm545, %v487, 0.0
  %v620 = vadd.f32 %v618, %v619
  %v621 = vsel %vm545, %v492, 0.0
  %v622 = vadd.f32 %v620, %v621
  %v623 = vsel %vm545, %v497, 0.0
  %v624 = vadd.f32 %v622, %v623
  %v625 = vsel %vm545, %v502, 0.0
  %v626 = vadd.f32 %v624, %v625
  %v627 = vsel %vm545, %v507, 0.0
  %v628 = vadd.f32 %v626, %v627
  %v629 = vsel %vm545, %v512, 0.0
  %v630 = vadd.f32 %v628, %v629
  %v631 = vsel %vm545, %v517, 0.0
  %v632 = vadd.f32 %v630, %v631
  %v633 = vsel %vm545, %v522, 0.0
  %v634 = vadd.f32 %v632, %v633
  %v635 = vsel %vm545, %v527, 0.0
  %v636 = vadd.f32 %v634, %v635
  %v637 = vsel %vm545, %v532, 0.0
  %v638 = vadd.f32 %v636, %v637
  %v639 = vsel %vm545, %v537, 0.0
  %v640 = vadd.f32 %v638, %v639
  %v641 = vsel %vm545, %v542, 0.0
  %v642 = vadd.f32 %v640, %v641
  %v643 = vrot.slane %v642, 4
  %v644 = vadd.f32 %v642, %v643
  %v645 = vrot.slane %v644, 2
  %v646 = vadd.f32 %v644, %v645
  %v647 = vrot.slane %v646, 1
  %v648 = vadd.f32 %v646, %v647
  %v649 = vmul.f32 %v302, %v302
  %v650 = vmul.f32 %v307, %v307
  %v651 = vmul.f32 %v312, %v312
  %v652 = vmul.f32 %v317, %v317
  %v653 = vmul.f32 %v322, %v322
  %v654 = vmul.f32 %v327, %v327
  %v655 = vmul.f32 %v332, %v332
  %v656 = vmul.f32 %v337, %v337
  %v657 = vmul.f32 %v342, %v342
  %v658 = vmul.f32 %v347, %v347
  %v659 = vmul.f32 %v352, %v352
  %v660 = vmul.f32 %v357, %v357
  %v661 = vmul.f32 %v362, %v362
  %v662 = vmul.f32 %v367, %v367
  %v663 = vmul.f32 %v372, %v372
  %v664 = vmul.f32 %v377, %v377
  %v665 = vmul.f32 %v382, %v382
  %v666 = vmul.f32 %v387, %v387
  %v667 = vmul.f32 %v392, %v392
  %v668 = vmul.f32 %v397, %v397
  %v669 = vmul.f32 %v402, %v402
  %v670 = vmul.f32 %v407, %v407
  %v671 = vmul.f32 %v412, %v412
  %v672 = vmul.f32 %v417, %v417
  %v673 = vmul.f32 %v422, %v422
  %v674 = vmul.f32 %v427, %v427
  %v675 = vmul.f32 %v432, %v432
  %v676 = vmul.f32 %v437, %v437
  %v677 = vmul.f32 %v442, %v442
  %v678 = vmul.f32 %v447, %v447
  %v679 = vmul.f32 %v452, %v452
  %v680 = vmul.f32 %v457, %v457
  %v681 = vmul.f32 %v462, %v462
  %v682 = vmul.f32 %v467, %v467
  %v683 = vmul.f32 %v472, %v472
  %v684 = vmul.f32 %v477, %v477
  %v685 = vmul.f32 %v482, %v482
  %v686 = vmul.f32 %v487, %v487
  %v687 = vmul.f32 %v492, %v492
  %v688 = vmul.f32 %v497, %v497
  %v689 = vmul.f32 %v502, %v502
  %v690 = vmul.f32 %v507, %v507
  %v691 = vmul.f32 %v512, %v512
  %v692 = vmul.f32 %v517, %v517
  %v693 = vmul.f32 %v522, %v522
  %v694 = vmul.f32 %v527, %v527
  %v695 = vmul.f32 %v532, %v532
  %v696 = vmul.f32 %v537, %v537
  %v697 = vmul.f32 %v542, %v542
  %v698 = vsel %vm545, %v649, 0.0
  %v699 = vsel %vm545, %v650, 0.0
  %v700 = vadd.f32 %v698, %v699
  %v701 = vsel %vm545, %v651, 0.0
  %v702 = vadd.f32 %v700, %v701
  %v703 = vsel %vm545, %v652, 0.0
  %v704 = vadd.f32 %v702, %v703
  %v705 = vsel %vm545, %v653, 0.0
  %v706 = vadd.f32 %v704, %v705
  %v707 = vsel %vm545, %v654, 0.0
  %v708 = vadd.f32 %v706, %v707
  %v709 = vsel %vm545, %v655, 0.0
  %v710 = vadd.f32 %v708, %v709
  %v711 = vsel %vm545, %v656, 0.0
  %v712 = vadd.f32 %v710, %v711
  %v713 = vsel %vm545, %v657, 0.0
  %v714 = vadd.f32 %v712, %v713
  %v715 = vsel %vm545, %v658, 0.0
  %v716 = vadd.f32 %v714, %v715
  %v717 = vsel %vm545, %v659, 0.0
  %v718 = vadd.f32 %v716, %v717
  %v719 = vsel %vm545, %v660, 0.0
  %v720 = vadd.f32 %v718, %v719
  %v721 = vsel %vm545, %v661, 0.0
  %v722 = vadd.f32 %v720, %v721
  %v723 = vsel %vm545, %v662, 0.0
  %v724 = vadd.f32 %v722, %v723
  %v725 = vsel %vm545, %v663, 0.0
  %v726 = vadd.f32 %v724, %v725
  %v727 = vsel %vm545, %v664, 0.0
  %v728 = vadd.f32 %v726, %v727
  %v729 = vsel %vm545, %v665, 0.0
  %v730 = vadd.f32 %v728, %v729
  %v731 = vsel %vm545, %v666, 0.0
  %v732 = vadd.f32 %v730, %v731
  %v733 = vsel %vm545, %v667, 0.0
  %v734 = vadd.f32 %v732, %v733
  %v735 = vsel %vm545, %v668, 0.0
  %v736 = vadd.f32 %v734, %v735
  %v737 = vsel %vm545, %v669, 0.0
  %v738 = vadd.f32 %v736, %v737
  %v739 = vsel %vm545, %v670, 0.0
  %v740 = vadd.f32 %v738, %v739
  %v741 = vsel %vm545, %v671, 0.0
  %v742 = vadd.f32 %v740, %v741
  %v743 = vsel %vm545, %v672, 0.0
  %v744 = vadd.f32 %v742, %v743
  %v745 = vsel %vm545, %v673, 0.0
  %v746 = vadd.f32 %v744, %v745
  %v747 = vsel %vm545, %v674, 0.0
  %v748 = vadd.f32 %v746, %v747
  %v749 = vsel %vm545, %v675, 0.0
  %v750 = vadd.f32 %v748, %v749
  %v751 = vsel %vm545, %v676, 0.0
  %v752 = vadd.f32 %v750, %v751
  %v753 = vsel %vm545, %v677, 0.0
  %v754 = vadd.f32 %v752, %v753
  %v755 = vsel %vm545, %v678, 0.0
  %v756 = vadd.f32 %v754, %v755
  %v757 = vsel %vm545, %v679, 0.0
  %v758 = vadd.f32 %v756, %v757
  %v759 = vsel %vm545, %v680, 0.0
  %v760 = vadd.f32 %v758, %v759
  %v761 = vsel %vm545, %v681, 0.0
  %v762 = vadd.f32 %v760, %v761
  %v763 = vsel %vm545, %v682, 0.0
  %v764 = vadd.f32 %v762, %v763
  %v765 = vsel %vm545, %v683, 0.0
  %v766 = vadd.f32 %v764, %v765
  %v767 = vsel %vm545, %v684, 0.0
  %v768 = vadd.f32 %v766, %v767
  %v769 = vsel %vm545, %v685, 0.0
  %v770 = vadd.f32 %v768, %v769
  %v771 = vsel %vm545, %v686, 0.0
  %v772 = vadd.f32 %v770, %v771
  %v773 = vsel %vm545, %v687, 0.0
  %v774 = vadd.f32 %v772, %v773
  %v775 = vsel %vm545, %v688, 0.0
  %v776 = vadd.f32 %v774, %v775
  %v777 = vsel %vm545, %v689, 0.0
  %v778 = vadd.f32 %v776, %v777
  %v779 = vsel %vm545, %v690, 0.0
  %v780 = vadd.f32 %v778, %v779
  %v781 = vsel %vm545, %v691, 0.0
  %v782 = vadd.f32 %v780, %v781
  %v783 = vsel %vm545, %v692, 0.0
  %v784 = vadd.f32 %v782, %v783
  %v785 = vsel %vm545, %v693, 0.0
  %v786 = vadd.f32 %v784, %v785
  %v787 = vsel %vm545, %v694, 0.0
  %v788 = vadd.f32 %v786, %v787
  %v789 = vsel %vm545, %v695, 0.0
  %v790 = vadd.f32 %v788, %v789
  %v791 = vsel %vm545, %v696, 0.0
  %v792 = vadd.f32 %v790, %v791
  %v793 = vsel %vm545, %v697, 0.0
  %v794 = vadd.f32 %v792, %v793
  %v795 = vrot.slane %v794, 4
  %v796 = vadd.f32 %v794, %v795
  %v797 = vrot.slane %v796, 2
  %v798 = vadd.f32 %v796, %v797
  %v799 = vrot.slane %v798, 1
  %v800 = vadd.f32 %v798, %v799
  %v801 = vmul.f32 %v648, 0.0025510204
  %v802 = vmul.f32 %v800, 0.0025510204
  %v803 = vmul.f32 %v801, %v801
  %v804 = vsub.f32 %v802, %v803
  %v805 = vmax.f32 %v804, 0.0
  %v806 = vadd.f32 %v805, 1e-05
  %v807 = vrsqrt.pop %v806
  %v808 = vld [vmem:[%s3] sm:$0x1]
  %v809 = vmul.f32 %v807, %v808
  %v810 = vld [vmem:[%s4] sm:$0x1]
  %v811 = vmul.f32 %v801, %v809
  %v812 = vsub.f32 %v810, %v811
  %v813 = vld [vmem:[%s5] sm:$0xff]
  %v814 = vld [vmem:[%s5 + $0x8] sm:$0xff]
  %v815 = vld [vmem:[%s5 + $0x10] sm:$0xff]
  %v816 = vld [vmem:[%s5 + $0x18] sm:$0xff]
  %v817 = vld [vmem:[%s5 + $0x20] sm:$0xff]
  %v818 = vld [vmem:[%s5 + $0x28] sm:$0xff]
  %v819 = vld [vmem:[%s5 + $0x30] sm:$0xff]
  %v820 = vld [vmem:[%s5 + $0x38] sm:$0xff]
  %v821 = vld [vmem:[%s5 + $0x40] sm:$0xff]
  %v822 = vld [vmem:[%s1] sm:$0xff]
  %v823 = vld [vmem:[%s1 + $0x8] sm:$0xff]
  %v824 = vld [vmem:[%s1 + $0x10] sm:$0xff]
  %v825 = vld [vmem:[%s1 + $0x18] sm:$0xff]
  %v826 = vld [vmem:[%s1 + $0x20] sm:$0xff]
  %v827 = vld [vmem:[%s1 + $0x28] sm:$0xff]
  %v828 = vld [vmem:[%s1 + $0x30] sm:$0xff]
  %v829 = vld [vmem:[%s1 + $0x38] sm:$0xff]
  %v830 = vld [vmem:[%s1 + $0x40] sm:$0xff]
  %v832 = vsel %vm83, %v822, 0
  %v835 = vsel %vm83, %v823, 0
  %v838 = vsel %vm83, %v824, 0
  %v841 = vsel %vm83, %v825, 0
  %v844 = vsel %vm83, %v826, 0
  %v847 = vsel %vm83, %v827, 0
  %v850 = vsel %vm83, %v828, 0
  %v853 = vsel %vm83, %v829, 0
  %v856 = vsel %vm83, %v830, 0
  %858 = vmatprep.subr.mxu0 0.0
  %859 = vmatpush1.msra.mxu0 %v29
  %860 = vmatprep.subr.mxu0 0.0
  %861 = vmatpush1.msra.mxu0 %v30
  %862 = vmatprep.subr.mxu0 0.0
  %863 = vmatpush1.msra.mxu0 %v31
  %864 = vmatprep.subr.mxu0 0.0
  %865 = vmatpush1.msra.mxu0 %v32
  %866 = vmatprep.subr.mxu0 0.0
  %867 = vmatpush1.msra.mxu0 %v233
  %868 = vmatprep.subr.mxu0 0.0
  %869 = vmatpush1.msra.mxu0 0.0
  %870 = vmatprep.subr.mxu0 0.0
  %871 = vmatpush1.msra.mxu0 0.0
  %872 = vmatprep.subr.mxu0 0.0
  %873 = vmatpush1.msra.mxu0 0.0
  %874 = vmatprep.subr.mxu0 0.0
  %875 = vmatpush1.msra.mxu0 0.0
  %876 = vmatprep.subr.mxu0 0.0
  %877 = vmatpush1.msra.mxu0 0.0
  %878 = vmatprep.subr.mxu0 0.0
  %879 = vmatpush1.msra.mxu0 0.0
  %880 = vmatprep.subr.mxu0 0.0
  %881 = vmatpush1.msra.mxu0 0.0
  %882 = vmatprep.subr.mxu0 0.0
  %883 = vmatpush1.msra.mxu0 0.0
  %884 = vmatprep.subr.mxu0 0.0
  %885 = vmatpush1.msra.mxu0 0.0
  %886 = vmatprep.subr.mxu0 0.0
  %887 = vmatpush1.msra.mxu0 0.0
  %888 = vmatprep.subr.mxu0 0.0
  %889 = vmatpush1.msra.mxu0 0.0
  %890 = vmatprep.subr.mxu0 0.0
  %891 = vmatpush1.msra.mxu0 0.0
  %892 = vmatprep.subr.mxu0 0.0
  %893 = vmatpush1.msra.mxu0 0.0
  %894 = vmatprep.subr.mxu0 0.0
  %895 = vmatpush1.msra.mxu0 0.0
  %896 = vmatprep.subr.mxu0 0.0
  %897 = vmatpush1.msra.mxu0 0.0
  %898 = vmatprep.subr.mxu0 0.0
  %899 = vmatpush1.msra.mxu0 0.0
  %900 = vmatprep.subr.mxu0 0.0
  %901 = vmatpush1.msra.mxu0 0.0
  %902 = vmatprep.subr.mxu0 0.0
  %903 = vmatpush1.msra.mxu0 0.0
  %904 = vmatprep.subr.mxu0 0.0
  %905 = vmatpush1.msra.mxu0 0.0
  %906 = vmatprep.subr.mxu0 0.0
  %907 = vmatpush1.msra.mxu0 0.0
  %908 = vmatprep.subr.mxu0 0.0
  %909 = vmatpush1.msra.mxu0 0.0
  %910 = vmatprep.subr.mxu0 0.0
  %911 = vmatpush1.msra.mxu0 0.0
  %912 = vmatprep.subr.mxu0 0.0
  %913 = vmatpush1.msra.mxu0 0.0
  %914 = vmatprep.subr.mxu0 0.0
  %915 = vmatpush1.msra.mxu0 0.0
  %916 = vmatprep.subr.mxu0 0.0
  %917 = vmatpush1.msra.mxu0 0.0
  %918 = vmatprep.subr.mxu0 0.0
  %919 = vmatpush1.msra.mxu0 0.0
  %920 = vmatprep.subr.mxu0 0.0
  %921 = vmatpush1.msra.mxu0 0.0
  %922 = vmatprep.mubr.f32.mxu0 0.0
  %923 = vmatmul.mubr.f32.gmra.mrb[0].mxu0 %v832
  %v924 = vpop.f32.mrb[0].mxu0
  %v925 = vadd.f32 0.0, %v924
  %v926 = vpop.f32.mrb[0].mxu0
  %927 = vmatprep.mubr.f32.mxu0 0.0
  %928 = vmatmul.mubr.f32.gmra.mrb[0].mxu0 %v835
  %v929 = vpop.f32.mrb[0].mxu0
  %v930 = vadd.f32 0.0, %v929
  %v931 = vpop.f32.mrb[0].mxu0
  %932 = vmatprep.mubr.f32.mxu0 0.0
  %933 = vmatmul.mubr.f32.gmra.mrb[0].mxu0 %v838
  %v934 = vpop.f32.mrb[0].mxu0
  %v935 = vadd.f32 0.0, %v934
  %v936 = vpop.f32.mrb[0].mxu0
  %937 = vmatprep.mubr.f32.mxu0 0.0
  %938 = vmatmul.mubr.f32.gmra.mrb[0].mxu0 %v841
  %v939 = vpop.f32.mrb[0].mxu0
  %v940 = vadd.f32 0.0, %v939
  %v941 = vpop.f32.mrb[0].mxu0
  %942 = vmatprep.mubr.f32.mxu0 0.0
  %943 = vmatmul.mubr.f32.gmra.mrb[0].mxu0 %v844
  %v944 = vpop.f32.mrb[0].mxu0
  %v945 = vadd.f32 0.0, %v944
  %v946 = vpop.f32.mrb[0].mxu0
  %947 = vmatprep.mubr.f32.mxu0 0.0
  %948 = vmatmul.mubr.f32.gmra.mrb[0].mxu0 %v847
  %v949 = vpop.f32.mrb[0].mxu0
  %v950 = vadd.f32 0.0, %v949
  %v951 = vpop.f32.mrb[0].mxu0
  %952 = vmatprep.mubr.f32.mxu0 0.0
  %953 = vmatmul.mubr.f32.gmra.mrb[0].mxu0 %v850
  %v954 = vpop.f32.mrb[0].mxu0
  %v955 = vadd.f32 0.0, %v954
  %v956 = vpop.f32.mrb[0].mxu0
  %957 = vmatprep.mubr.f32.mxu0 0.0
  %958 = vmatmul.mubr.f32.gmra.mrb[0].mxu0 %v853
  %v959 = vpop.f32.mrb[0].mxu0
  %v960 = vadd.f32 0.0, %v959
  %v961 = vpop.f32.mrb[0].mxu0
  %962 = vmatprep.mubr.f32.mxu0 0.0
  %963 = vmatmul.mubr.f32.gmra.mrb[0].mxu0 %v856
  %v964 = vpop.f32.mrb[0].mxu0
  %v965 = vadd.f32 0.0, %v964
  %v966 = vpop.f32.mrb[0].mxu0
  %967 = vdwg.mxu0
  %v968 = vlaneseq
  %v969 = vshrl.u32 %v968, 7
  %v970 = vsub.s32 0, %v969
  %v971 = vrot.slane %v809, %v970
  %v972 = vmul.f32 %v925, %v971
  %v973 = vmul.f32 %v930, %v971
  %v974 = vmul.f32 %v935, %v971
  %v975 = vmul.f32 %v940, %v971
  %v976 = vmul.f32 %v945, %v971
  %v977 = vmul.f32 %v950, %v971
  %v978 = vmul.f32 %v955, %v971
  %v979 = vmul.f32 %v960, %v971
  %v980 = vmul.f32 %v965, %v971
  %v982 = vlaneseq
  %v983 = vshrl.u32 %v982, 7
  %v984 = vsub.s32 0, %v983
  %v985 = vrot.slane %v812, %v984
  %v987 = vadd.f32 %v972, %v985
  %v988 = vadd.f32 %v973, %v985
  %v989 = vadd.f32 %v974, %v985
  %v990 = vadd.f32 %v975, %v985
  %v991 = vadd.f32 %v976, %v985
  %v992 = vadd.f32 %v977, %v985
  %v993 = vadd.f32 %v978, %v985
  %v994 = vadd.f32 %v979, %v985
  %v995 = vadd.f32 %v980, %v985
  %v996 = vmax.f32 %v987, 0.0
  %v997 = vmax.f32 %v988, 0.0
  %v998 = vmax.f32 %v989, 0.0
  %v999 = vmax.f32 %v990, 0.0
  %v1000 = vmax.f32 %v991, 0.0
  %v1001 = vmax.f32 %v992, 0.0
  %v1002 = vmax.f32 %v993, 0.0
  %v1003 = vmax.f32 %v994, 0.0
  %v1004 = vmax.f32 %v995, 0.0
  %s1005 = scalar_lea.vmem %s1, 72
  %v1006 = vld [vmem:[%s1005] sm:$0xff]
  %v1007 = vld [vmem:[%s1005 + $0x8] sm:$0xff]
  %v1008 = vld [vmem:[%s1005 + $0x10] sm:$0xff]
  %v1009 = vld [vmem:[%s1005 + $0x18] sm:$0xff]
  %v1010 = vld [vmem:[%s1005 + $0x20] sm:$0xff]
  %v1011 = vld [vmem:[%s1005 + $0x28] sm:$0xff]
  %v1012 = vld [vmem:[%s1005 + $0x30] sm:$0xff]
  %v1013 = vld [vmem:[%s1005 + $0x38] sm:$0xff]
  %v1014 = vld [vmem:[%s1005 + $0x40] sm:$0xff]
  %v1016 = vsel %vm83, %v1006, 0
  %v1019 = vsel %vm83, %v1007, 0
  %v1022 = vsel %vm83, %v1008, 0
  %v1025 = vsel %vm83, %v1009, 0
  %v1028 = vsel %vm83, %v1010, 0
  %v1031 = vsel %vm83, %v1011, 0
  %v1034 = vsel %vm83, %v1012, 0
  %v1037 = vsel %vm83, %v1013, 0
  %v1040 = vsel %vm83, %v1014, 0
  %1042 = vmatprep.subr.mxu0 0.0
  %1043 = vmatpush1.msra.mxu0 %v29
  %1044 = vmatprep.subr.mxu0 0.0
  %1045 = vmatpush1.msra.mxu0 %v30
  %1046 = vmatprep.subr.mxu0 0.0
  %1047 = vmatpush1.msra.mxu0 %v31
  %1048 = vmatprep.subr.mxu0 0.0
  %1049 = vmatpush1.msra.mxu0 %v32
  %1050 = vmatprep.subr.mxu0 0.0
  %1051 = vmatpush1.msra.mxu0 %v233
  %1052 = vmatprep.subr.mxu0 0.0
  %1053 = vmatpush1.msra.mxu0 0.0
  %1054 = vmatprep.subr.mxu0 0.0
  %1055 = vmatpush1.msra.mxu0 0.0
  %1056 = vmatprep.subr.mxu0 0.0
  %1057 = vmatpush1.msra.mxu0 0.0
  %1058 = vmatprep.subr.mxu0 0.0
  %1059 = vmatpush1.msra.mxu0 0.0
  %1060 = vmatprep.subr.mxu0 0.0
  %1061 = vmatpush1.msra.mxu0 0.0
  %1062 = vmatprep.subr.mxu0 0.0
  %1063 = vmatpush1.msra.mxu0 0.0
  %1064 = vmatprep.subr.mxu0 0.0
  %1065 = vmatpush1.msra.mxu0 0.0
  %1066 = vmatprep.subr.mxu0 0.0
  %1067 = vmatpush1.msra.mxu0 0.0
  %1068 = vmatprep.subr.mxu0 0.0
  %1069 = vmatpush1.msra.mxu0 0.0
  %1070 = vmatprep.subr.mxu0 0.0
  %1071 = vmatpush1.msra.mxu0 0.0
  %1072 = vmatprep.subr.mxu0 0.0
  %1073 = vmatpush1.msra.mxu0 0.0
  %1074 = vmatprep.subr.mxu0 0.0
  %1075 = vmatpush1.msra.mxu0 0.0
  %1076 = vmatprep.subr.mxu0 0.0
  %1077 = vmatpush1.msra.mxu0 0.0
  %1078 = vmatprep.subr.mxu0 0.0
  %1079 = vmatpush1.msra.mxu0 0.0
  %1080 = vmatprep.subr.mxu0 0.0
  %1081 = vmatpush1.msra.mxu0 0.0
  %1082 = vmatprep.subr.mxu0 0.0
  %1083 = vmatpush1.msra.mxu0 0.0
  %1084 = vmatprep.subr.mxu0 0.0
  %1085 = vmatpush1.msra.mxu0 0.0
  %1086 = vmatprep.subr.mxu0 0.0
  %1087 = vmatpush1.msra.mxu0 0.0
  %1088 = vmatprep.subr.mxu0 0.0
  %1089 = vmatpush1.msra.mxu0 0.0
  %1090 = vmatprep.subr.mxu0 0.0
  %1091 = vmatpush1.msra.mxu0 0.0
  %1092 = vmatprep.subr.mxu0 0.0
  %1093 = vmatpush1.msra.mxu0 0.0
  %1094 = vmatprep.subr.mxu0 0.0
  %1095 = vmatpush1.msra.mxu0 0.0
  %1096 = vmatprep.subr.mxu0 0.0
  %1097 = vmatpush1.msra.mxu0 0.0
  %1098 = vmatprep.subr.mxu0 0.0
  %1099 = vmatpush1.msra.mxu0 0.0
  %1100 = vmatprep.subr.mxu0 0.0
  %1101 = vmatpush1.msra.mxu0 0.0
  %1102 = vmatprep.subr.mxu0 0.0
  %1103 = vmatpush1.msra.mxu0 0.0
  %1104 = vmatprep.subr.mxu0 0.0
  %1105 = vmatpush1.msra.mxu0 0.0
  %1106 = vmatprep.mubr.f32.mxu0 0.0
  %1107 = vmatmul.mubr.f32.gmra.mrb[0].mxu0 %v1016
  %v1108 = vpop.f32.mrb[0].mxu0
  %v1109 = vadd.f32 0.0, %v1108
  %v1110 = vpop.f32.mrb[0].mxu0
  %1111 = vmatprep.mubr.f32.mxu0 0.0
  %1112 = vmatmul.mubr.f32.gmra.mrb[0].mxu0 %v1019
  %v1113 = vpop.f32.mrb[0].mxu0
  %v1114 = vadd.f32 0.0, %v1113
  %v1115 = vpop.f32.mrb[0].mxu0
  %1116 = vmatprep.mubr.f32.mxu0 0.0
  %1117 = vmatmul.mubr.f32.gmra.mrb[0].mxu0 %v1022
  %v1118 = vpop.f32.mrb[0].mxu0
  %v1119 = vadd.f32 0.0, %v1118
  %v1120 = vpop.f32.mrb[0].mxu0
  %1121 = vmatprep.mubr.f32.mxu0 0.0
  %1122 = vmatmul.mubr.f32.gmra.mrb[0].mxu0 %v1025
  %v1123 = vpop.f32.mrb[0].mxu0
  %v1124 = vadd.f32 0.0, %v1123
  %v1125 = vpop.f32.mrb[0].mxu0
  %1126 = vmatprep.mubr.f32.mxu0 0.0
  %1127 = vmatmul.mubr.f32.gmra.mrb[0].mxu0 %v1028
  %v1128 = vpop.f32.mrb[0].mxu0
  %v1129 = vadd.f32 0.0, %v1128
  %v1130 = vpop.f32.mrb[0].mxu0
  %1131 = vmatprep.mubr.f32.mxu0 0.0
  %1132 = vmatmul.mubr.f32.gmra.mrb[0].mxu0 %v1031
  %v1133 = vpop.f32.mrb[0].mxu0
  %v1134 = vadd.f32 0.0, %v1133
  %v1135 = vpop.f32.mrb[0].mxu0
  %1136 = vmatprep.mubr.f32.mxu0 0.0
  %1137 = vmatmul.mubr.f32.gmra.mrb[0].mxu0 %v1034
  %v1138 = vpop.f32.mrb[0].mxu0
  %v1139 = vadd.f32 0.0, %v1138
  %v1140 = vpop.f32.mrb[0].mxu0
  %1141 = vmatprep.mubr.f32.mxu0 0.0
  %1142 = vmatmul.mubr.f32.gmra.mrb[0].mxu0 %v1037
  %v1143 = vpop.f32.mrb[0].mxu0
  %v1144 = vadd.f32 0.0, %v1143
  %v1145 = vpop.f32.mrb[0].mxu0
  %1146 = vmatprep.mubr.f32.mxu0 0.0
  %1147 = vmatmul.mubr.f32.gmra.mrb[0].mxu0 %v1040
  %v1148 = vpop.f32.mrb[0].mxu0
  %v1149 = vadd.f32 0.0, %v1148
  %v1150 = vpop.f32.mrb[0].mxu0
  %1151 = vdwg.mxu0
  %v1152 = vmul.f32 %v1109, %v971
  %v1153 = vmul.f32 %v1114, %v971
  %v1154 = vmul.f32 %v1119, %v971
  %v1155 = vmul.f32 %v1124, %v971
  %v1156 = vmul.f32 %v1129, %v971
  %v1157 = vmul.f32 %v1134, %v971
  %v1158 = vmul.f32 %v1139, %v971
  %v1159 = vmul.f32 %v1144, %v971
  %v1160 = vmul.f32 %v1149, %v971
  %v1161 = vadd.f32 %v1152, %v985
  %v1162 = vadd.f32 %v1153, %v985
  %v1163 = vadd.f32 %v1154, %v985
  %v1164 = vadd.f32 %v1155, %v985
  %v1165 = vadd.f32 %v1156, %v985
  %v1166 = vadd.f32 %v1157, %v985
  %v1167 = vadd.f32 %v1158, %v985
  %v1168 = vadd.f32 %v1159, %v985
  %v1169 = vadd.f32 %v1160, %v985
  %v1170 = vmax.f32 %v1161, 0.0
  %v1171 = vmax.f32 %v1162, 0.0
  %v1172 = vmax.f32 %v1163, 0.0
  %v1173 = vmax.f32 %v1164, 0.0
  %v1174 = vmax.f32 %v1165, 0.0
  %v1175 = vmax.f32 %v1166, 0.0
  %v1176 = vmax.f32 %v1167, 0.0
  %v1177 = vmax.f32 %v1168, 0.0
  %v1178 = vmax.f32 %v1169, 0.0
  %v1180 = vsel %vm545, %v1170, 0
  %v1183 = vsel %vm545, %v1171, 0
  %v1186 = vsel %vm545, %v1172, 0
  %v1189 = vsel %vm545, %v1173, 0
  %v1192 = vsel %vm545, %v1174, 0
  %v1195 = vsel %vm545, %v1175, 0
  %v1198 = vsel %vm545, %v1176, 0
  %v1201 = vsel %vm545, %v1177, 0
  %v1204 = vsel %vm545, %v1178, 0
  %1206 = vmatprep.subr.mxu0 0.0
  %1207 = vmatpush1.msra.mxu0 %v814
  %1208 = vmatprep.subr.mxu0 0.0
  %1209 = vmatpush1.msra.mxu0 0.0
  %1210 = vmatprep.subr.mxu0 0.0
  %1211 = vmatpush1.msra.mxu0 0.0
  %1212 = vmatprep.subr.mxu0 0.0
  %1213 = vmatpush1.msra.mxu0 0.0
  %1214 = vmatprep.subr.mxu0 0.0
  %1215 = vmatpush1.msra.mxu0 0.0
  %1216 = vmatprep.subr.mxu0 0.0
  %1217 = vmatpush1.msra.mxu0 0.0
  %1218 = vmatprep.subr.mxu0 0.0
  %1219 = vmatpush1.msra.mxu0 0.0
  %1220 = vmatprep.subr.mxu0 0.0
  %1221 = vmatpush1.msra.mxu0 0.0
  %1222 = vmatprep.subr.mxu0 0.0
  %1223 = vmatpush1.msra.mxu0 0.0
  %1224 = vmatprep.subr.mxu0 0.0
  %1225 = vmatpush1.msra.mxu0 0.0
  %1226 = vmatprep.subr.mxu0 0.0
  %1227 = vmatpush1.msra.mxu0 0.0
  %1228 = vmatprep.subr.mxu0 0.0
  %1229 = vmatpush1.msra.mxu0 0.0
  %1230 = vmatprep.subr.mxu0 0.0
  %1231 = vmatpush1.msra.mxu0 0.0
  %1232 = vmatprep.subr.mxu0 0.0
  %1233 = vmatpush1.msra.mxu0 0.0
  %1234 = vmatprep.subr.mxu0 0.0
  %1235 = vmatpush1.msra.mxu0 0.0
  %1236 = vmatprep.subr.mxu0 0.0
  %1237 = vmatpush1.msra.mxu0 0.0
  %1238 = vmatprep.subr.mxu0 0.0
  %1239 = vmatpush1.msra.mxu0 0.0
  %1240 = vmatprep.subr.mxu0 0.0
  %1241 = vmatpush1.msra.mxu0 0.0
  %1242 = vmatprep.subr.mxu0 0.0
  %1243 = vmatpush1.msra.mxu0 0.0
  %1244 = vmatprep.subr.mxu0 0.0
  %1245 = vmatpush1.msra.mxu0 0.0
  %1246 = vmatprep.subr.mxu0 0.0
  %1247 = vmatpush1.msra.mxu0 0.0
  %1248 = vmatprep.subr.mxu0 0.0
  %1249 = vmatpush1.msra.mxu0 0.0
  %1250 = vmatprep.subr.mxu0 0.0
  %1251 = vmatpush1.msra.mxu0 0.0
  %1252 = vmatprep.subr.mxu0 0.0
  %1253 = vmatpush1.msra.mxu0 0.0
  %1254 = vmatprep.subr.mxu0 0.0
  %1255 = vmatpush1.msra.mxu0 0.0
  %1256 = vmatprep.subr.mxu0 0.0
  %1257 = vmatpush1.msra.mxu0 0.0
  %1258 = vmatprep.subr.mxu0 0.0
  %1259 = vmatpush1.msra.mxu0 0.0
  %1260 = vmatprep.subr.mxu0 0.0
  %1261 = vmatpush1.msra.mxu0 0.0
  %1262 = vmatprep.subr.mxu0 0.0
  %1263 = vmatpush1.msra.mxu0 0.0
  %1264 = vmatprep.subr.mxu0 0.0
  %1265 = vmatpush1.msra.mxu0 0.0
  %1266 = vmatprep.subr.mxu0 0.0
  %1267 = vmatpush1.msra.mxu0 0.0
  %1268 = vmatprep.subr.mxu0 0.0
  %1269 = vmatpush1.msra.mxu0 0.0
  %1270 = vmatprep.mubr.f32.mxu0 0.0
  %1271 = vmatmul.mubr.f32.gmra.mrb[0].mxu0 %v1180
  %v1272 = vpop.f32.mrb[0].mxu0
  %v1273 = vadd.f32 0.0, %v1272
  %v1274 = vpop.f32.mrb[0].mxu0
  %1275 = vmatprep.mubr.f32.mxu0 0.0
  %1276 = vmatmul.mubr.f32.gmra.mrb[0].mxu0 %v1183
  %v1277 = vpop.f32.mrb[0].mxu0
  %v1278 = vadd.f32 0.0, %v1277
  %v1279 = vpop.f32.mrb[0].mxu0
  %1280 = vmatprep.mubr.f32.mxu0 0.0
  %1281 = vmatmul.mubr.f32.gmra.mrb[0].mxu0 %v1186
  %v1282 = vpop.f32.mrb[0].mxu0
  %v1283 = vadd.f32 0.0, %v1282
  %v1284 = vpop.f32.mrb[0].mxu0
  %1285 = vmatprep.mubr.f32.mxu0 0.0
  %1286 = vmatmul.mubr.f32.gmra.mrb[0].mxu0 %v1189
  %v1287 = vpop.f32.mrb[0].mxu0
  %v1288 = vadd.f32 0.0, %v1287
  %v1289 = vpop.f32.mrb[0].mxu0
  %1290 = vmatprep.mubr.f32.mxu0 0.0
  %1291 = vmatmul.mubr.f32.gmra.mrb[0].mxu0 %v1192
  %v1292 = vpop.f32.mrb[0].mxu0
  %v1293 = vadd.f32 0.0, %v1292
  %v1294 = vpop.f32.mrb[0].mxu0
  %1295 = vmatprep.mubr.f32.mxu0 0.0
  %1296 = vmatmul.mubr.f32.gmra.mrb[0].mxu0 %v1195
  %v1297 = vpop.f32.mrb[0].mxu0
  %v1298 = vadd.f32 0.0, %v1297
  %v1299 = vpop.f32.mrb[0].mxu0
  %1300 = vmatprep.mubr.f32.mxu0 0.0
  %1301 = vmatmul.mubr.f32.gmra.mrb[0].mxu0 %v1198
  %v1302 = vpop.f32.mrb[0].mxu0
  %v1303 = vadd.f32 0.0, %v1302
  %v1304 = vpop.f32.mrb[0].mxu0
  %1305 = vmatprep.mubr.f32.mxu0 0.0
  %1306 = vmatmul.mubr.f32.gmra.mrb[0].mxu0 %v1201
  %v1307 = vpop.f32.mrb[0].mxu0
  %v1308 = vadd.f32 0.0, %v1307
  %v1309 = vpop.f32.mrb[0].mxu0
  %1310 = vmatprep.mubr.f32.mxu0 0.0
  %1311 = vmatmul.mubr.f32.gmra.mrb[0].mxu0 %v1204
  %v1312 = vpop.f32.mrb[0].mxu0
  %v1313 = vadd.f32 0.0, %v1312
  %v1314 = vpop.f32.mrb[0].mxu0
  %1315 = vdwg.mxu0
  %v1317 = vsel %vm545, %v996, 0
  %v1320 = vsel %vm545, %v997, 0
  %v1323 = vsel %vm545, %v998, 0
  %v1326 = vsel %vm545, %v999, 0
  %v1329 = vsel %vm545, %v1000, 0
  %v1332 = vsel %vm545, %v1001, 0
  %v1335 = vsel %vm545, %v1002, 0
  %v1338 = vsel %vm545, %v1003, 0
  %v1341 = vsel %vm545, %v1004, 0
  %1343 = vmatprep.subr.mxu0 0.0
  %1344 = vmatpush1.msra.mxu0 %v813
  %1345 = vmatprep.subr.mxu0 0.0
  %1346 = vmatpush1.msra.mxu0 0.0
  %1347 = vmatprep.subr.mxu0 0.0
  %1348 = vmatpush1.msra.mxu0 0.0
  %1349 = vmatprep.subr.mxu0 0.0
  %1350 = vmatpush1.msra.mxu0 0.0
  %1351 = vmatprep.subr.mxu0 0.0
  %1352 = vmatpush1.msra.mxu0 0.0
  %1353 = vmatprep.subr.mxu0 0.0
  %1354 = vmatpush1.msra.mxu0 0.0
  %1355 = vmatprep.subr.mxu0 0.0
  %1356 = vmatpush1.msra.mxu0 0.0
  %1357 = vmatprep.subr.mxu0 0.0
  %1358 = vmatpush1.msra.mxu0 0.0
  %1359 = vmatprep.subr.mxu0 0.0
  %1360 = vmatpush1.msra.mxu0 0.0
  %1361 = vmatprep.subr.mxu0 0.0
  %1362 = vmatpush1.msra.mxu0 0.0
  %1363 = vmatprep.subr.mxu0 0.0
  %1364 = vmatpush1.msra.mxu0 0.0
  %1365 = vmatprep.subr.mxu0 0.0
  %1366 = vmatpush1.msra.mxu0 0.0
  %1367 = vmatprep.subr.mxu0 0.0
  %1368 = vmatpush1.msra.mxu0 0.0
  %1369 = vmatprep.subr.mxu0 0.0
  %1370 = vmatpush1.msra.mxu0 0.0
  %1371 = vmatprep.subr.mxu0 0.0
  %1372 = vmatpush1.msra.mxu0 0.0
  %1373 = vmatprep.subr.mxu0 0.0
  %1374 = vmatpush1.msra.mxu0 0.0
  %1375 = vmatprep.subr.mxu0 0.0
  %1376 = vmatpush1.msra.mxu0 0.0
  %1377 = vmatprep.subr.mxu0 0.0
  %1378 = vmatpush1.msra.mxu0 0.0
  %1379 = vmatprep.subr.mxu0 0.0
  %1380 = vmatpush1.msra.mxu0 0.0
  %1381 = vmatprep.subr.mxu0 0.0
  %1382 = vmatpush1.msra.mxu0 0.0
  %1383 = vmatprep.subr.mxu0 0.0
  %1384 = vmatpush1.msra.mxu0 0.0
  %1385 = vmatprep.subr.mxu0 0.0
  %1386 = vmatpush1.msra.mxu0 0.0
  %1387 = vmatprep.subr.mxu0 0.0
  %1388 = vmatpush1.msra.mxu0 0.0
  %1389 = vmatprep.subr.mxu0 0.0
  %1390 = vmatpush1.msra.mxu0 0.0
  %1391 = vmatprep.subr.mxu0 0.0
  %1392 = vmatpush1.msra.mxu0 0.0
  %1393 = vmatprep.subr.mxu0 0.0
  %1394 = vmatpush1.msra.mxu0 0.0
  %1395 = vmatprep.subr.mxu0 0.0
  %1396 = vmatpush1.msra.mxu0 0.0
  %1397 = vmatprep.subr.mxu0 0.0
  %1398 = vmatpush1.msra.mxu0 0.0
  %1399 = vmatprep.subr.mxu0 0.0
  %1400 = vmatpush1.msra.mxu0 0.0
  %1401 = vmatprep.subr.mxu0 0.0
  %1402 = vmatpush1.msra.mxu0 0.0
  %1403 = vmatprep.subr.mxu0 0.0
  %1404 = vmatpush1.msra.mxu0 0.0
  %1405 = vmatprep.subr.mxu0 0.0
  %1406 = vmatpush1.msra.mxu0 0.0
  %1407 = vmatprep.mubr.f32.mxu0 0.0
  %1408 = vmatmul.mubr.f32.gmra.mrb[0].mxu0 %v1317
  %v1409 = vpop.f32.mrb[0].mxu0
  %v1410 = vadd.f32 %v1273, %v1409
  %v1411 = vpop.f32.mrb[0].mxu0
  %1412 = vmatprep.mubr.f32.mxu0 0.0
  %1413 = vmatmul.mubr.f32.gmra.mrb[0].mxu0 %v1320
  %v1414 = vpop.f32.mrb[0].mxu0
  %v1415 = vadd.f32 %v1278, %v1414
  %v1416 = vpop.f32.mrb[0].mxu0
  %1417 = vmatprep.mubr.f32.mxu0 0.0
  %1418 = vmatmul.mubr.f32.gmra.mrb[0].mxu0 %v1323
  %v1419 = vpop.f32.mrb[0].mxu0
  %v1420 = vadd.f32 %v1283, %v1419
  %v1421 = vpop.f32.mrb[0].mxu0
  %1422 = vmatprep.mubr.f32.mxu0 0.0
  %1423 = vmatmul.mubr.f32.gmra.mrb[0].mxu0 %v1326
  %v1424 = vpop.f32.mrb[0].mxu0
  %v1425 = vadd.f32 %v1288, %v1424
  %v1426 = vpop.f32.mrb[0].mxu0
  %1427 = vmatprep.mubr.f32.mxu0 0.0
  %1428 = vmatmul.mubr.f32.gmra.mrb[0].mxu0 %v1329
  %v1429 = vpop.f32.mrb[0].mxu0
  %v1430 = vadd.f32 %v1293, %v1429
  %v1431 = vpop.f32.mrb[0].mxu0
  %1432 = vmatprep.mubr.f32.mxu0 0.0
  %1433 = vmatmul.mubr.f32.gmra.mrb[0].mxu0 %v1332
  %v1434 = vpop.f32.mrb[0].mxu0
  %v1435 = vadd.f32 %v1298, %v1434
  %v1436 = vpop.f32.mrb[0].mxu0
  %1437 = vmatprep.mubr.f32.mxu0 0.0
  %1438 = vmatmul.mubr.f32.gmra.mrb[0].mxu0 %v1335
  %v1439 = vpop.f32.mrb[0].mxu0
  %v1440 = vadd.f32 %v1303, %v1439
  %v1441 = vpop.f32.mrb[0].mxu0
  %1442 = vmatprep.mubr.f32.mxu0 0.0
  %1443 = vmatmul.mubr.f32.gmra.mrb[0].mxu0 %v1338
  %v1444 = vpop.f32.mrb[0].mxu0
  %v1445 = vadd.f32 %v1308, %v1444
  %v1446 = vpop.f32.mrb[0].mxu0
  %1447 = vmatprep.mubr.f32.mxu0 0.0
  %1448 = vmatmul.mubr.f32.gmra.mrb[0].mxu0 %v1341
  %v1449 = vpop.f32.mrb[0].mxu0
  %v1450 = vadd.f32 %v1313, %v1449
  %v1451 = vpop.f32.mrb[0].mxu0
  %1452 = vdwg.mxu0
  %s1453 = scalar_lea.vmem %s1, 144
  %v1454 = vld [vmem:[%s1453] sm:$0xff]
  %v1455 = vld [vmem:[%s1453 + $0x8] sm:$0xff]
  %v1456 = vld [vmem:[%s1453 + $0x10] sm:$0xff]
  %v1457 = vld [vmem:[%s1453 + $0x18] sm:$0xff]
  %v1458 = vld [vmem:[%s1453 + $0x20] sm:$0xff]
  %v1459 = vld [vmem:[%s1453 + $0x28] sm:$0xff]
  %v1460 = vld [vmem:[%s1453 + $0x30] sm:$0xff]
  %v1461 = vld [vmem:[%s1453 + $0x38] sm:$0xff]
  %v1462 = vld [vmem:[%s1453 + $0x40] sm:$0xff]
  %v1464 = vsel %vm83, %v1454, 0
  %v1467 = vsel %vm83, %v1455, 0
  %v1470 = vsel %vm83, %v1456, 0
  %v1473 = vsel %vm83, %v1457, 0
  %v1476 = vsel %vm83, %v1458, 0
  %v1479 = vsel %vm83, %v1459, 0
  %v1482 = vsel %vm83, %v1460, 0
  %v1485 = vsel %vm83, %v1461, 0
  %v1488 = vsel %vm83, %v1462, 0
  %1490 = vmatprep.subr.mxu0 0.0
  %1491 = vmatpush1.msra.mxu0 %v29
  %1492 = vmatprep.subr.mxu0 0.0
  %1493 = vmatpush1.msra.mxu0 %v30
  %1494 = vmatprep.subr.mxu0 0.0
  %1495 = vmatpush1.msra.mxu0 %v31
  %1496 = vmatprep.subr.mxu0 0.0
  %1497 = vmatpush1.msra.mxu0 %v32
  %1498 = vmatprep.subr.mxu0 0.0
  %1499 = vmatpush1.msra.mxu0 %v233
  %1500 = vmatprep.subr.mxu0 0.0
  %1501 = vmatpush1.msra.mxu0 0.0
  %1502 = vmatprep.subr.mxu0 0.0
  %1503 = vmatpush1.msra.mxu0 0.0
  %1504 = vmatprep.subr.mxu0 0.0
  %1505 = vmatpush1.msra.mxu0 0.0
  %1506 = vmatprep.subr.mxu0 0.0
  %1507 = vmatpush1.msra.mxu0 0.0
  %1508 = vmatprep.subr.mxu0 0.0
  %1509 = vmatpush1.msra.mxu0 0.0
  %1510 = vmatprep.subr.mxu0 0.0
  %1511 = vmatpush1.msra.mxu0 0.0
  %1512 = vmatprep.subr.mxu0 0.0
  %1513 = vmatpush1.msra.mxu0 0.0
  %1514 = vmatprep.subr.mxu0 0.0
  %1515 = vmatpush1.msra.mxu0 0.0
  %1516 = vmatprep.subr.mxu0 0.0
  %1517 = vmatpush1.msra.mxu0 0.0
  %1518 = vmatprep.subr.mxu0 0.0
  %1519 = vmatpush1.msra.mxu0 0.0
  %1520 = vmatprep.subr.mxu0 0.0
  %1521 = vmatpush1.msra.mxu0 0.0
  %1522 = vmatprep.subr.mxu0 0.0
  %1523 = vmatpush1.msra.mxu0 0.0
  %1524 = vmatprep.subr.mxu0 0.0
  %1525 = vmatpush1.msra.mxu0 0.0
  %1526 = vmatprep.subr.mxu0 0.0
  %1527 = vmatpush1.msra.mxu0 0.0
  %1528 = vmatprep.subr.mxu0 0.0
  %1529 = vmatpush1.msra.mxu0 0.0
  %1530 = vmatprep.subr.mxu0 0.0
  %1531 = vmatpush1.msra.mxu0 0.0
  %1532 = vmatprep.subr.mxu0 0.0
  %1533 = vmatpush1.msra.mxu0 0.0
  %1534 = vmatprep.subr.mxu0 0.0
  %1535 = vmatpush1.msra.mxu0 0.0
  %1536 = vmatprep.subr.mxu0 0.0
  %1537 = vmatpush1.msra.mxu0 0.0
  %1538 = vmatprep.subr.mxu0 0.0
  %1539 = vmatpush1.msra.mxu0 0.0
  %1540 = vmatprep.subr.mxu0 0.0
  %1541 = vmatpush1.msra.mxu0 0.0
  %1542 = vmatprep.subr.mxu0 0.0
  %1543 = vmatpush1.msra.mxu0 0.0
  %1544 = vmatprep.subr.mxu0 0.0
  %1545 = vmatpush1.msra.mxu0 0.0
  %1546 = vmatprep.subr.mxu0 0.0
  %1547 = vmatpush1.msra.mxu0 0.0
  %1548 = vmatprep.subr.mxu0 0.0
  %1549 = vmatpush1.msra.mxu0 0.0
  %1550 = vmatprep.subr.mxu0 0.0
  %1551 = vmatpush1.msra.mxu0 0.0
  %1552 = vmatprep.subr.mxu0 0.0
  %1553 = vmatpush1.msra.mxu0 0.0
  %1554 = vmatprep.mubr.f32.mxu0 0.0
  %1555 = vmatmul.mubr.f32.gmra.mrb[0].mxu0 %v1464
  %v1556 = vpop.f32.mrb[0].mxu0
  %v1557 = vadd.f32 0.0, %v1556
  %v1558 = vpop.f32.mrb[0].mxu0
  %1559 = vmatprep.mubr.f32.mxu0 0.0
  %1560 = vmatmul.mubr.f32.gmra.mrb[0].mxu0 %v1467
  %v1561 = vpop.f32.mrb[0].mxu0
  %v1562 = vadd.f32 0.0, %v1561
  %v1563 = vpop.f32.mrb[0].mxu0
  %1564 = vmatprep.mubr.f32.mxu0 0.0
  %1565 = vmatmul.mubr.f32.gmra.mrb[0].mxu0 %v1470
  %v1566 = vpop.f32.mrb[0].mxu0
  %v1567 = vadd.f32 0.0, %v1566
  %v1568 = vpop.f32.mrb[0].mxu0
  %1569 = vmatprep.mubr.f32.mxu0 0.0
  %1570 = vmatmul.mubr.f32.gmra.mrb[0].mxu0 %v1473
  %v1571 = vpop.f32.mrb[0].mxu0
  %v1572 = vadd.f32 0.0, %v1571
  %v1573 = vpop.f32.mrb[0].mxu0
  %1574 = vmatprep.mubr.f32.mxu0 0.0
  %1575 = vmatmul.mubr.f32.gmra.mrb[0].mxu0 %v1476
  %v1576 = vpop.f32.mrb[0].mxu0
  %v1577 = vadd.f32 0.0, %v1576
  %v1578 = vpop.f32.mrb[0].mxu0
  %1579 = vmatprep.mubr.f32.mxu0 0.0
  %1580 = vmatmul.mubr.f32.gmra.mrb[0].mxu0 %v1479
  %v1581 = vpop.f32.mrb[0].mxu0
  %v1582 = vadd.f32 0.0, %v1581
  %v1583 = vpop.f32.mrb[0].mxu0
  %1584 = vmatprep.mubr.f32.mxu0 0.0
  %1585 = vmatmul.mubr.f32.gmra.mrb[0].mxu0 %v1482
  %v1586 = vpop.f32.mrb[0].mxu0
  %v1587 = vadd.f32 0.0, %v1586
  %v1588 = vpop.f32.mrb[0].mxu0
  %1589 = vmatprep.mubr.f32.mxu0 0.0
  %1590 = vmatmul.mubr.f32.gmra.mrb[0].mxu0 %v1485
  %v1591 = vpop.f32.mrb[0].mxu0
  %v1592 = vadd.f32 0.0, %v1591
  %v1593 = vpop.f32.mrb[0].mxu0
  %1594 = vmatprep.mubr.f32.mxu0 0.0
  %1595 = vmatmul.mubr.f32.gmra.mrb[0].mxu0 %v1488
  %v1596 = vpop.f32.mrb[0].mxu0
  %v1597 = vadd.f32 0.0, %v1596
  %v1598 = vpop.f32.mrb[0].mxu0
  %1599 = vdwg.mxu0
  %v1600 = vmul.f32 %v1557, %v971
  %v1601 = vmul.f32 %v1562, %v971
  %v1602 = vmul.f32 %v1567, %v971
  %v1603 = vmul.f32 %v1572, %v971
  %v1604 = vmul.f32 %v1577, %v971
  %v1605 = vmul.f32 %v1582, %v971
  %v1606 = vmul.f32 %v1587, %v971
  %v1607 = vmul.f32 %v1592, %v971
  %v1608 = vmul.f32 %v1597, %v971
  %v1609 = vadd.f32 %v1600, %v985
  %v1610 = vadd.f32 %v1601, %v985
  %v1611 = vadd.f32 %v1602, %v985
  %v1612 = vadd.f32 %v1603, %v985
  %v1613 = vadd.f32 %v1604, %v985
  %v1614 = vadd.f32 %v1605, %v985
  %v1615 = vadd.f32 %v1606, %v985
  %v1616 = vadd.f32 %v1607, %v985
  %v1617 = vadd.f32 %v1608, %v985
  %v1618 = vmax.f32 %v1609, 0.0
  %v1619 = vmax.f32 %v1610, 0.0
  %v1620 = vmax.f32 %v1611, 0.0
  %v1621 = vmax.f32 %v1612, 0.0
  %v1622 = vmax.f32 %v1613, 0.0
  %v1623 = vmax.f32 %v1614, 0.0
  %v1624 = vmax.f32 %v1615, 0.0
  %v1625 = vmax.f32 %v1616, 0.0
  %v1626 = vmax.f32 %v1617, 0.0
  %v1628 = vsel %vm545, %v1618, 0
  %v1631 = vsel %vm545, %v1619, 0
  %v1634 = vsel %vm545, %v1620, 0
  %v1637 = vsel %vm545, %v1621, 0
  %v1640 = vsel %vm545, %v1622, 0
  %v1643 = vsel %vm545, %v1623, 0
  %v1646 = vsel %vm545, %v1624, 0
  %v1649 = vsel %vm545, %v1625, 0
  %v1652 = vsel %vm545, %v1626, 0
  %1654 = vmatprep.subr.mxu0 0.0
  %1655 = vmatpush1.msra.mxu0 %v815
  %1656 = vmatprep.subr.mxu0 0.0
  %1657 = vmatpush1.msra.mxu0 0.0
  %1658 = vmatprep.subr.mxu0 0.0
  %1659 = vmatpush1.msra.mxu0 0.0
  %1660 = vmatprep.subr.mxu0 0.0
  %1661 = vmatpush1.msra.mxu0 0.0
  %1662 = vmatprep.subr.mxu0 0.0
  %1663 = vmatpush1.msra.mxu0 0.0
  %1664 = vmatprep.subr.mxu0 0.0
  %1665 = vmatpush1.msra.mxu0 0.0
  %1666 = vmatprep.subr.mxu0 0.0
  %1667 = vmatpush1.msra.mxu0 0.0
  %1668 = vmatprep.subr.mxu0 0.0
  %1669 = vmatpush1.msra.mxu0 0.0
  %1670 = vmatprep.subr.mxu0 0.0
  %1671 = vmatpush1.msra.mxu0 0.0
  %1672 = vmatprep.subr.mxu0 0.0
  %1673 = vmatpush1.msra.mxu0 0.0
  %1674 = vmatprep.subr.mxu0 0.0
  %1675 = vmatpush1.msra.mxu0 0.0
  %1676 = vmatprep.subr.mxu0 0.0
  %1677 = vmatpush1.msra.mxu0 0.0
  %1678 = vmatprep.subr.mxu0 0.0
  %1679 = vmatpush1.msra.mxu0 0.0
  %1680 = vmatprep.subr.mxu0 0.0
  %1681 = vmatpush1.msra.mxu0 0.0
  %1682 = vmatprep.subr.mxu0 0.0
  %1683 = vmatpush1.msra.mxu0 0.0
  %1684 = vmatprep.subr.mxu0 0.0
  %1685 = vmatpush1.msra.mxu0 0.0
  %1686 = vmatprep.subr.mxu0 0.0
  %1687 = vmatpush1.msra.mxu0 0.0
  %1688 = vmatprep.subr.mxu0 0.0
  %1689 = vmatpush1.msra.mxu0 0.0
  %1690 = vmatprep.subr.mxu0 0.0
  %1691 = vmatpush1.msra.mxu0 0.0
  %1692 = vmatprep.subr.mxu0 0.0
  %1693 = vmatpush1.msra.mxu0 0.0
  %1694 = vmatprep.subr.mxu0 0.0
  %1695 = vmatpush1.msra.mxu0 0.0
  %1696 = vmatprep.subr.mxu0 0.0
  %1697 = vmatpush1.msra.mxu0 0.0
  %1698 = vmatprep.subr.mxu0 0.0
  %1699 = vmatpush1.msra.mxu0 0.0
  %1700 = vmatprep.subr.mxu0 0.0
  %1701 = vmatpush1.msra.mxu0 0.0
  %1702 = vmatprep.subr.mxu0 0.0
  %1703 = vmatpush1.msra.mxu0 0.0
  %1704 = vmatprep.subr.mxu0 0.0
  %1705 = vmatpush1.msra.mxu0 0.0
  %1706 = vmatprep.subr.mxu0 0.0
  %1707 = vmatpush1.msra.mxu0 0.0
  %1708 = vmatprep.subr.mxu0 0.0
  %1709 = vmatpush1.msra.mxu0 0.0
  %1710 = vmatprep.subr.mxu0 0.0
  %1711 = vmatpush1.msra.mxu0 0.0
  %1712 = vmatprep.subr.mxu0 0.0
  %1713 = vmatpush1.msra.mxu0 0.0
  %1714 = vmatprep.subr.mxu0 0.0
  %1715 = vmatpush1.msra.mxu0 0.0
  %1716 = vmatprep.subr.mxu0 0.0
  %1717 = vmatpush1.msra.mxu0 0.0
  %1718 = vmatprep.mubr.f32.mxu0 0.0
  %1719 = vmatmul.mubr.f32.gmra.mrb[0].mxu0 %v1628
  %v1720 = vpop.f32.mrb[0].mxu0
  %v1721 = vadd.f32 0.0, %v1720
  %v1722 = vpop.f32.mrb[0].mxu0
  %1723 = vmatprep.mubr.f32.mxu0 0.0
  %1724 = vmatmul.mubr.f32.gmra.mrb[0].mxu0 %v1631
  %v1725 = vpop.f32.mrb[0].mxu0
  %v1726 = vadd.f32 0.0, %v1725
  %v1727 = vpop.f32.mrb[0].mxu0
  %1728 = vmatprep.mubr.f32.mxu0 0.0
  %1729 = vmatmul.mubr.f32.gmra.mrb[0].mxu0 %v1634
  %v1730 = vpop.f32.mrb[0].mxu0
  %v1731 = vadd.f32 0.0, %v1730
  %v1732 = vpop.f32.mrb[0].mxu0
  %1733 = vmatprep.mubr.f32.mxu0 0.0
  %1734 = vmatmul.mubr.f32.gmra.mrb[0].mxu0 %v1637
  %v1735 = vpop.f32.mrb[0].mxu0
  %v1736 = vadd.f32 0.0, %v1735
  %v1737 = vpop.f32.mrb[0].mxu0
  %1738 = vmatprep.mubr.f32.mxu0 0.0
  %1739 = vmatmul.mubr.f32.gmra.mrb[0].mxu0 %v1640
  %v1740 = vpop.f32.mrb[0].mxu0
  %v1741 = vadd.f32 0.0, %v1740
  %v1742 = vpop.f32.mrb[0].mxu0
  %1743 = vmatprep.mubr.f32.mxu0 0.0
  %1744 = vmatmul.mubr.f32.gmra.mrb[0].mxu0 %v1643
  %v1745 = vpop.f32.mrb[0].mxu0
  %v1746 = vadd.f32 0.0, %v1745
  %v1747 = vpop.f32.mrb[0].mxu0
  %1748 = vmatprep.mubr.f32.mxu0 0.0
  %1749 = vmatmul.mubr.f32.gmra.mrb[0].mxu0 %v1646
  %v1750 = vpop.f32.mrb[0].mxu0
  %v1751 = vadd.f32 0.0, %v1750
  %v1752 = vpop.f32.mrb[0].mxu0
  %1753 = vmatprep.mubr.f32.mxu0 0.0
  %1754 = vmatmul.mubr.f32.gmra.mrb[0].mxu0 %v1649
  %v1755 = vpop.f32.mrb[0].mxu0
  %v1756 = vadd.f32 0.0, %v1755
  %v1757 = vpop.f32.mrb[0].mxu0
  %1758 = vmatprep.mubr.f32.mxu0 0.0
  %1759 = vmatmul.mubr.f32.gmra.mrb[0].mxu0 %v1652
  %v1760 = vpop.f32.mrb[0].mxu0
  %v1761 = vadd.f32 0.0, %v1760
  %v1762 = vpop.f32.mrb[0].mxu0
  %1763 = vdwg.mxu0
  %v1764 = vadd.f32 %v1410, %v1721
  %v1765 = vadd.f32 %v1415, %v1726
  %v1766 = vadd.f32 %v1420, %v1731
  %v1767 = vadd.f32 %v1425, %v1736
  %v1768 = vadd.f32 %v1430, %v1741
  %v1769 = vadd.f32 %v1435, %v1746
  %v1770 = vadd.f32 %v1440, %v1751
  %v1771 = vadd.f32 %v1445, %v1756
  %v1772 = vadd.f32 %v1450, %v1761
  %s1773 = scalar_lea.vmem %s1, 216
  %v1774 = vld [vmem:[%s1773] sm:$0xff]
  %v1775 = vld [vmem:[%s1773 + $0x8] sm:$0xff]
  %v1776 = vld [vmem:[%s1773 + $0x10] sm:$0xff]
  %v1777 = vld [vmem:[%s1773 + $0x18] sm:$0xff]
  %v1778 = vld [vmem:[%s1773 + $0x20] sm:$0xff]
  %v1779 = vld [vmem:[%s1773 + $0x28] sm:$0xff]
  %v1780 = vld [vmem:[%s1773 + $0x30] sm:$0xff]
  %v1781 = vld [vmem:[%s1773 + $0x38] sm:$0xff]
  %v1782 = vld [vmem:[%s1773 + $0x40] sm:$0xff]
  %v1784 = vsel %vm83, %v1774, 0
  %v1787 = vsel %vm83, %v1775, 0
  %v1790 = vsel %vm83, %v1776, 0
  %v1793 = vsel %vm83, %v1777, 0
  %v1796 = vsel %vm83, %v1778, 0
  %v1799 = vsel %vm83, %v1779, 0
  %v1802 = vsel %vm83, %v1780, 0
  %v1805 = vsel %vm83, %v1781, 0
  %v1808 = vsel %vm83, %v1782, 0
  %1810 = vmatprep.subr.mxu0 0.0
  %1811 = vmatpush1.msra.mxu0 %v29
  %1812 = vmatprep.subr.mxu0 0.0
  %1813 = vmatpush1.msra.mxu0 %v30
  %1814 = vmatprep.subr.mxu0 0.0
  %1815 = vmatpush1.msra.mxu0 %v31
  %1816 = vmatprep.subr.mxu0 0.0
  %1817 = vmatpush1.msra.mxu0 %v32
  %1818 = vmatprep.subr.mxu0 0.0
  %1819 = vmatpush1.msra.mxu0 %v233
  %1820 = vmatprep.subr.mxu0 0.0
  %1821 = vmatpush1.msra.mxu0 0.0
  %1822 = vmatprep.subr.mxu0 0.0
  %1823 = vmatpush1.msra.mxu0 0.0
  %1824 = vmatprep.subr.mxu0 0.0
  %1825 = vmatpush1.msra.mxu0 0.0
  %1826 = vmatprep.subr.mxu0 0.0
  %1827 = vmatpush1.msra.mxu0 0.0
  %1828 = vmatprep.subr.mxu0 0.0
  %1829 = vmatpush1.msra.mxu0 0.0
  %1830 = vmatprep.subr.mxu0 0.0
  %1831 = vmatpush1.msra.mxu0 0.0
  %1832 = vmatprep.subr.mxu0 0.0
  %1833 = vmatpush1.msra.mxu0 0.0
  %1834 = vmatprep.subr.mxu0 0.0
  %1835 = vmatpush1.msra.mxu0 0.0
  %1836 = vmatprep.subr.mxu0 0.0
  %1837 = vmatpush1.msra.mxu0 0.0
  %1838 = vmatprep.subr.mxu0 0.0
  %1839 = vmatpush1.msra.mxu0 0.0
  %1840 = vmatprep.subr.mxu0 0.0
  %1841 = vmatpush1.msra.mxu0 0.0
  %1842 = vmatprep.subr.mxu0 0.0
  %1843 = vmatpush1.msra.mxu0 0.0
  %1844 = vmatprep.subr.mxu0 0.0
  %1845 = vmatpush1.msra.mxu0 0.0
  %1846 = vmatprep.subr.mxu0 0.0
  %1847 = vmatpush1.msra.mxu0 0.0
  %1848 = vmatprep.subr.mxu0 0.0
  %1849 = vmatpush1.msra.mxu0 0.0
  %1850 = vmatprep.subr.mxu0 0.0
  %1851 = vmatpush1.msra.mxu0 0.0
  %1852 = vmatprep.subr.mxu0 0.0
  %1853 = vmatpush1.msra.mxu0 0.0
  %1854 = vmatprep.subr.mxu0 0.0
  %1855 = vmatpush1.msra.mxu0 0.0
  %1856 = vmatprep.subr.mxu0 0.0
  %1857 = vmatpush1.msra.mxu0 0.0
  %1858 = vmatprep.subr.mxu0 0.0
  %1859 = vmatpush1.msra.mxu0 0.0
  %1860 = vmatprep.subr.mxu0 0.0
  %1861 = vmatpush1.msra.mxu0 0.0
  %1862 = vmatprep.subr.mxu0 0.0
  %1863 = vmatpush1.msra.mxu0 0.0
  %1864 = vmatprep.subr.mxu0 0.0
  %1865 = vmatpush1.msra.mxu0 0.0
  %1866 = vmatprep.subr.mxu0 0.0
  %1867 = vmatpush1.msra.mxu0 0.0
  %1868 = vmatprep.subr.mxu0 0.0
  %1869 = vmatpush1.msra.mxu0 0.0
  %1870 = vmatprep.subr.mxu0 0.0
  %1871 = vmatpush1.msra.mxu0 0.0
  %1872 = vmatprep.subr.mxu0 0.0
  %1873 = vmatpush1.msra.mxu0 0.0
  %1874 = vmatprep.mubr.f32.mxu0 0.0
  %1875 = vmatmul.mubr.f32.gmra.mrb[0].mxu0 %v1784
  %v1876 = vpop.f32.mrb[0].mxu0
  %v1877 = vadd.f32 0.0, %v1876
  %v1878 = vpop.f32.mrb[0].mxu0
  %1879 = vmatprep.mubr.f32.mxu0 0.0
  %1880 = vmatmul.mubr.f32.gmra.mrb[0].mxu0 %v1787
  %v1881 = vpop.f32.mrb[0].mxu0
  %v1882 = vadd.f32 0.0, %v1881
  %v1883 = vpop.f32.mrb[0].mxu0
  %1884 = vmatprep.mubr.f32.mxu0 0.0
  %1885 = vmatmul.mubr.f32.gmra.mrb[0].mxu0 %v1790
  %v1886 = vpop.f32.mrb[0].mxu0
  %v1887 = vadd.f32 0.0, %v1886
  %v1888 = vpop.f32.mrb[0].mxu0
  %1889 = vmatprep.mubr.f32.mxu0 0.0
  %1890 = vmatmul.mubr.f32.gmra.mrb[0].mxu0 %v1793
  %v1891 = vpop.f32.mrb[0].mxu0
  %v1892 = vadd.f32 0.0, %v1891
  %v1893 = vpop.f32.mrb[0].mxu0
  %1894 = vmatprep.mubr.f32.mxu0 0.0
  %1895 = vmatmul.mubr.f32.gmra.mrb[0].mxu0 %v1796
  %v1896 = vpop.f32.mrb[0].mxu0
  %v1897 = vadd.f32 0.0, %v1896
  %v1898 = vpop.f32.mrb[0].mxu0
  %1899 = vmatprep.mubr.f32.mxu0 0.0
  %1900 = vmatmul.mubr.f32.gmra.mrb[0].mxu0 %v1799
  %v1901 = vpop.f32.mrb[0].mxu0
  %v1902 = vadd.f32 0.0, %v1901
  %v1903 = vpop.f32.mrb[0].mxu0
  %1904 = vmatprep.mubr.f32.mxu0 0.0
  %1905 = vmatmul.mubr.f32.gmra.mrb[0].mxu0 %v1802
  %v1906 = vpop.f32.mrb[0].mxu0
  %v1907 = vadd.f32 0.0, %v1906
  %v1908 = vpop.f32.mrb[0].mxu0
  %1909 = vmatprep.mubr.f32.mxu0 0.0
  %1910 = vmatmul.mubr.f32.gmra.mrb[0].mxu0 %v1805
  %v1911 = vpop.f32.mrb[0].mxu0
  %v1912 = vadd.f32 0.0, %v1911
  %v1913 = vpop.f32.mrb[0].mxu0
  %1914 = vmatprep.mubr.f32.mxu0 0.0
  %1915 = vmatmul.mubr.f32.gmra.mrb[0].mxu0 %v1808
  %v1916 = vpop.f32.mrb[0].mxu0
  %v1917 = vadd.f32 0.0, %v1916
  %v1918 = vpop.f32.mrb[0].mxu0
  %1919 = vdwg.mxu0
  %v1920 = vmul.f32 %v1877, %v971
  %v1921 = vmul.f32 %v1882, %v971
  %v1922 = vmul.f32 %v1887, %v971
  %v1923 = vmul.f32 %v1892, %v971
  %v1924 = vmul.f32 %v1897, %v971
  %v1925 = vmul.f32 %v1902, %v971
  %v1926 = vmul.f32 %v1907, %v971
  %v1927 = vmul.f32 %v1912, %v971
  %v1928 = vmul.f32 %v1917, %v971
  %v1929 = vadd.f32 %v1920, %v985
  %v1930 = vadd.f32 %v1921, %v985
  %v1931 = vadd.f32 %v1922, %v985
  %v1932 = vadd.f32 %v1923, %v985
  %v1933 = vadd.f32 %v1924, %v985
  %v1934 = vadd.f32 %v1925, %v985
  %v1935 = vadd.f32 %v1926, %v985
  %v1936 = vadd.f32 %v1927, %v985
  %v1937 = vadd.f32 %v1928, %v985
  %v1938 = vmax.f32 %v1929, 0.0
  %v1939 = vmax.f32 %v1930, 0.0
  %v1940 = vmax.f32 %v1931, 0.0
  %v1941 = vmax.f32 %v1932, 0.0
  %v1942 = vmax.f32 %v1933, 0.0
  %v1943 = vmax.f32 %v1934, 0.0
  %v1944 = vmax.f32 %v1935, 0.0
  %v1945 = vmax.f32 %v1936, 0.0
  %v1946 = vmax.f32 %v1937, 0.0
  %v1948 = vsel %vm545, %v1938, 0
  %v1951 = vsel %vm545, %v1939, 0
  %v1954 = vsel %vm545, %v1940, 0
  %v1957 = vsel %vm545, %v1941, 0
  %v1960 = vsel %vm545, %v1942, 0
  %v1963 = vsel %vm545, %v1943, 0
  %v1966 = vsel %vm545, %v1944, 0
  %v1969 = vsel %vm545, %v1945, 0
  %v1972 = vsel %vm545, %v1946, 0
  %1974 = vmatprep.subr.mxu0 0.0
  %1975 = vmatpush1.msra.mxu0 %v816
  %1976 = vmatprep.subr.mxu0 0.0
  %1977 = vmatpush1.msra.mxu0 0.0
  %1978 = vmatprep.subr.mxu0 0.0
  %1979 = vmatpush1.msra.mxu0 0.0
  %1980 = vmatprep.subr.mxu0 0.0
  %1981 = vmatpush1.msra.mxu0 0.0
  %1982 = vmatprep.subr.mxu0 0.0
  %1983 = vmatpush1.msra.mxu0 0.0
  %1984 = vmatprep.subr.mxu0 0.0
  %1985 = vmatpush1.msra.mxu0 0.0
  %1986 = vmatprep.subr.mxu0 0.0
  %1987 = vmatpush1.msra.mxu0 0.0
  %1988 = vmatprep.subr.mxu0 0.0
  %1989 = vmatpush1.msra.mxu0 0.0
  %1990 = vmatprep.subr.mxu0 0.0
  %1991 = vmatpush1.msra.mxu0 0.0
  %1992 = vmatprep.subr.mxu0 0.0
  %1993 = vmatpush1.msra.mxu0 0.0
  %1994 = vmatprep.subr.mxu0 0.0
  %1995 = vmatpush1.msra.mxu0 0.0
  %1996 = vmatprep.subr.mxu0 0.0
  %1997 = vmatpush1.msra.mxu0 0.0
  %1998 = vmatprep.subr.mxu0 0.0
  %1999 = vmatpush1.msra.mxu0 0.0
  %2000 = vmatprep.subr.mxu0 0.0
  %2001 = vmatpush1.msra.mxu0 0.0
  %2002 = vmatprep.subr.mxu0 0.0
  %2003 = vmatpush1.msra.mxu0 0.0
  %2004 = vmatprep.subr.mxu0 0.0
  %2005 = vmatpush1.msra.mxu0 0.0
  %2006 = vmatprep.subr.mxu0 0.0
  %2007 = vmatpush1.msra.mxu0 0.0
  %2008 = vmatprep.subr.mxu0 0.0
  %2009 = vmatpush1.msra.mxu0 0.0
  %2010 = vmatprep.subr.mxu0 0.0
  %2011 = vmatpush1.msra.mxu0 0.0
  %2012 = vmatprep.subr.mxu0 0.0
  %2013 = vmatpush1.msra.mxu0 0.0
  %2014 = vmatprep.subr.mxu0 0.0
  %2015 = vmatpush1.msra.mxu0 0.0
  %2016 = vmatprep.subr.mxu0 0.0
  %2017 = vmatpush1.msra.mxu0 0.0
  %2018 = vmatprep.subr.mxu0 0.0
  %2019 = vmatpush1.msra.mxu0 0.0
  %2020 = vmatprep.subr.mxu0 0.0
  %2021 = vmatpush1.msra.mxu0 0.0
  %2022 = vmatprep.subr.mxu0 0.0
  %2023 = vmatpush1.msra.mxu0 0.0
  %2024 = vmatprep.subr.mxu0 0.0
  %2025 = vmatpush1.msra.mxu0 0.0
  %2026 = vmatprep.subr.mxu0 0.0
  %2027 = vmatpush1.msra.mxu0 0.0
  %2028 = vmatprep.subr.mxu0 0.0
  %2029 = vmatpush1.msra.mxu0 0.0
  %2030 = vmatprep.subr.mxu0 0.0
  %2031 = vmatpush1.msra.mxu0 0.0
  %2032 = vmatprep.subr.mxu0 0.0
  %2033 = vmatpush1.msra.mxu0 0.0
  %2034 = vmatprep.subr.mxu0 0.0
  %2035 = vmatpush1.msra.mxu0 0.0
  %2036 = vmatprep.subr.mxu0 0.0
  %2037 = vmatpush1.msra.mxu0 0.0
  %2038 = vmatprep.mubr.f32.mxu0 0.0
  %2039 = vmatmul.mubr.f32.gmra.mrb[0].mxu0 %v1948
  %v2040 = vpop.f32.mrb[0].mxu0
  %v2041 = vadd.f32 0.0, %v2040
  %v2042 = vpop.f32.mrb[0].mxu0
  %2043 = vmatprep.mubr.f32.mxu0 0.0
  %2044 = vmatmul.mubr.f32.gmra.mrb[0].mxu0 %v1951
  %v2045 = vpop.f32.mrb[0].mxu0
  %v2046 = vadd.f32 0.0, %v2045
  %v2047 = vpop.f32.mrb[0].mxu0
  %2048 = vmatprep.mubr.f32.mxu0 0.0
  %2049 = vmatmul.mubr.f32.gmra.mrb[0].mxu0 %v1954
  %v2050 = vpop.f32.mrb[0].mxu0
  %v2051 = vadd.f32 0.0, %v2050
  %v2052 = vpop.f32.mrb[0].mxu0
  %2053 = vmatprep.mubr.f32.mxu0 0.0
  %2054 = vmatmul.mubr.f32.gmra.mrb[0].mxu0 %v1957
  %v2055 = vpop.f32.mrb[0].mxu0
  %v2056 = vadd.f32 0.0, %v2055
  %v2057 = vpop.f32.mrb[0].mxu0
  %2058 = vmatprep.mubr.f32.mxu0 0.0
  %2059 = vmatmul.mubr.f32.gmra.mrb[0].mxu0 %v1960
  %v2060 = vpop.f32.mrb[0].mxu0
  %v2061 = vadd.f32 0.0, %v2060
  %v2062 = vpop.f32.mrb[0].mxu0
  %2063 = vmatprep.mubr.f32.mxu0 0.0
  %2064 = vmatmul.mubr.f32.gmra.mrb[0].mxu0 %v1963
  %v2065 = vpop.f32.mrb[0].mxu0
  %v2066 = vadd.f32 0.0, %v2065
  %v2067 = vpop.f32.mrb[0].mxu0
  %2068 = vmatprep.mubr.f32.mxu0 0.0
  %2069 = vmatmul.mubr.f32.gmra.mrb[0].mxu0 %v1966
  %v2070 = vpop.f32.mrb[0].mxu0
  %v2071 = vadd.f32 0.0, %v2070
  %v2072 = vpop.f32.mrb[0].mxu0
  %2073 = vmatprep.mubr.f32.mxu0 0.0
  %2074 = vmatmul.mubr.f32.gmra.mrb[0].mxu0 %v1969
  %v2075 = vpop.f32.mrb[0].mxu0
  %v2076 = vadd.f32 0.0, %v2075
  %v2077 = vpop.f32.mrb[0].mxu0
  %2078 = vmatprep.mubr.f32.mxu0 0.0
  %2079 = vmatmul.mubr.f32.gmra.mrb[0].mxu0 %v1972
  %v2080 = vpop.f32.mrb[0].mxu0
  %v2081 = vadd.f32 0.0, %v2080
  %v2082 = vpop.f32.mrb[0].mxu0
  %2083 = vdwg.mxu0
  %v2084 = vadd.f32 %v1764, %v2041
  %v2085 = vadd.f32 %v1765, %v2046
  %v2086 = vadd.f32 %v1766, %v2051
  %v2087 = vadd.f32 %v1767, %v2056
  %v2088 = vadd.f32 %v1768, %v2061
  %v2089 = vadd.f32 %v1769, %v2066
  %v2090 = vadd.f32 %v1770, %v2071
  %v2091 = vadd.f32 %v1771, %v2076
  %v2092 = vadd.f32 %v1772, %v2081
  %s2093 = scalar_lea.vmem %s1, 288
  %v2094 = vld [vmem:[%s2093] sm:$0xff]
  %v2095 = vld [vmem:[%s2093 + $0x8] sm:$0xff]
  %v2096 = vld [vmem:[%s2093 + $0x10] sm:$0xff]
  %v2097 = vld [vmem:[%s2093 + $0x18] sm:$0xff]
  %v2098 = vld [vmem:[%s2093 + $0x20] sm:$0xff]
  %v2099 = vld [vmem:[%s2093 + $0x28] sm:$0xff]
  %v2100 = vld [vmem:[%s2093 + $0x30] sm:$0xff]
  %v2101 = vld [vmem:[%s2093 + $0x38] sm:$0xff]
  %v2102 = vld [vmem:[%s2093 + $0x40] sm:$0xff]
  %v2104 = vsel %vm83, %v2094, 0
  %v2107 = vsel %vm83, %v2095, 0
  %v2110 = vsel %vm83, %v2096, 0
  %v2113 = vsel %vm83, %v2097, 0
  %v2116 = vsel %vm83, %v2098, 0
  %v2119 = vsel %vm83, %v2099, 0
  %v2122 = vsel %vm83, %v2100, 0
  %v2125 = vsel %vm83, %v2101, 0
  %v2128 = vsel %vm83, %v2102, 0
  %2130 = vmatprep.subr.mxu0 0.0
  %2131 = vmatpush1.msra.mxu0 %v29
  %2132 = vmatprep.subr.mxu0 0.0
  %2133 = vmatpush1.msra.mxu0 %v30
  %2134 = vmatprep.subr.mxu0 0.0
  %2135 = vmatpush1.msra.mxu0 %v31
  %2136 = vmatprep.subr.mxu0 0.0
  %2137 = vmatpush1.msra.mxu0 %v32
  %2138 = vmatprep.subr.mxu0 0.0
  %2139 = vmatpush1.msra.mxu0 %v233
  %2140 = vmatprep.subr.mxu0 0.0
  %2141 = vmatpush1.msra.mxu0 0.0
  %2142 = vmatprep.subr.mxu0 0.0
  %2143 = vmatpush1.msra.mxu0 0.0
  %2144 = vmatprep.subr.mxu0 0.0
  %2145 = vmatpush1.msra.mxu0 0.0
  %2146 = vmatprep.subr.mxu0 0.0
  %2147 = vmatpush1.msra.mxu0 0.0
  %2148 = vmatprep.subr.mxu0 0.0
  %2149 = vmatpush1.msra.mxu0 0.0
  %2150 = vmatprep.subr.mxu0 0.0
  %2151 = vmatpush1.msra.mxu0 0.0
  %2152 = vmatprep.subr.mxu0 0.0
  %2153 = vmatpush1.msra.mxu0 0.0
  %2154 = vmatprep.subr.mxu0 0.0
  %2155 = vmatpush1.msra.mxu0 0.0
  %2156 = vmatprep.subr.mxu0 0.0
  %2157 = vmatpush1.msra.mxu0 0.0
  %2158 = vmatprep.subr.mxu0 0.0
  %2159 = vmatpush1.msra.mxu0 0.0
  %2160 = vmatprep.subr.mxu0 0.0
  %2161 = vmatpush1.msra.mxu0 0.0
  %2162 = vmatprep.subr.mxu0 0.0
  %2163 = vmatpush1.msra.mxu0 0.0
  %2164 = vmatprep.subr.mxu0 0.0
  %2165 = vmatpush1.msra.mxu0 0.0
  %2166 = vmatprep.subr.mxu0 0.0
  %2167 = vmatpush1.msra.mxu0 0.0
  %2168 = vmatprep.subr.mxu0 0.0
  %2169 = vmatpush1.msra.mxu0 0.0
  %2170 = vmatprep.subr.mxu0 0.0
  %2171 = vmatpush1.msra.mxu0 0.0
  %2172 = vmatprep.subr.mxu0 0.0
  %2173 = vmatpush1.msra.mxu0 0.0
  %2174 = vmatprep.subr.mxu0 0.0
  %2175 = vmatpush1.msra.mxu0 0.0
  %2176 = vmatprep.subr.mxu0 0.0
  %2177 = vmatpush1.msra.mxu0 0.0
  %2178 = vmatprep.subr.mxu0 0.0
  %2179 = vmatpush1.msra.mxu0 0.0
  %2180 = vmatprep.subr.mxu0 0.0
  %2181 = vmatpush1.msra.mxu0 0.0
  %2182 = vmatprep.subr.mxu0 0.0
  %2183 = vmatpush1.msra.mxu0 0.0
  %2184 = vmatprep.subr.mxu0 0.0
  %2185 = vmatpush1.msra.mxu0 0.0
  %2186 = vmatprep.subr.mxu0 0.0
  %2187 = vmatpush1.msra.mxu0 0.0
  %2188 = vmatprep.subr.mxu0 0.0
  %2189 = vmatpush1.msra.mxu0 0.0
  %2190 = vmatprep.subr.mxu0 0.0
  %2191 = vmatpush1.msra.mxu0 0.0
  %2192 = vmatprep.subr.mxu0 0.0
  %2193 = vmatpush1.msra.mxu0 0.0
  %2194 = vmatprep.mubr.f32.mxu0 0.0
  %2195 = vmatmul.mubr.f32.gmra.mrb[0].mxu0 %v2104
  %v2196 = vpop.f32.mrb[0].mxu0
  %v2197 = vadd.f32 0.0, %v2196
  %v2198 = vpop.f32.mrb[0].mxu0
  %2199 = vmatprep.mubr.f32.mxu0 0.0
  %2200 = vmatmul.mubr.f32.gmra.mrb[0].mxu0 %v2107
  %v2201 = vpop.f32.mrb[0].mxu0
  %v2202 = vadd.f32 0.0, %v2201
  %v2203 = vpop.f32.mrb[0].mxu0
  %2204 = vmatprep.mubr.f32.mxu0 0.0
  %2205 = vmatmul.mubr.f32.gmra.mrb[0].mxu0 %v2110
  %v2206 = vpop.f32.mrb[0].mxu0
  %v2207 = vadd.f32 0.0, %v2206
  %v2208 = vpop.f32.mrb[0].mxu0
  %2209 = vmatprep.mubr.f32.mxu0 0.0
  %2210 = vmatmul.mubr.f32.gmra.mrb[0].mxu0 %v2113
  %v2211 = vpop.f32.mrb[0].mxu0
  %v2212 = vadd.f32 0.0, %v2211
  %v2213 = vpop.f32.mrb[0].mxu0
  %2214 = vmatprep.mubr.f32.mxu0 0.0
  %2215 = vmatmul.mubr.f32.gmra.mrb[0].mxu0 %v2116
  %v2216 = vpop.f32.mrb[0].mxu0
  %v2217 = vadd.f32 0.0, %v2216
  %v2218 = vpop.f32.mrb[0].mxu0
  %2219 = vmatprep.mubr.f32.mxu0 0.0
  %2220 = vmatmul.mubr.f32.gmra.mrb[0].mxu0 %v2119
  %v2221 = vpop.f32.mrb[0].mxu0
  %v2222 = vadd.f32 0.0, %v2221
  %v2223 = vpop.f32.mrb[0].mxu0
  %2224 = vmatprep.mubr.f32.mxu0 0.0
  %2225 = vmatmul.mubr.f32.gmra.mrb[0].mxu0 %v2122
  %v2226 = vpop.f32.mrb[0].mxu0
  %v2227 = vadd.f32 0.0, %v2226
  %v2228 = vpop.f32.mrb[0].mxu0
  %2229 = vmatprep.mubr.f32.mxu0 0.0
  %2230 = vmatmul.mubr.f32.gmra.mrb[0].mxu0 %v2125
  %v2231 = vpop.f32.mrb[0].mxu0
  %v2232 = vadd.f32 0.0, %v2231
  %v2233 = vpop.f32.mrb[0].mxu0
  %2234 = vmatprep.mubr.f32.mxu0 0.0
  %2235 = vmatmul.mubr.f32.gmra.mrb[0].mxu0 %v2128
  %v2236 = vpop.f32.mrb[0].mxu0
  %v2237 = vadd.f32 0.0, %v2236
  %v2238 = vpop.f32.mrb[0].mxu0
  %2239 = vdwg.mxu0
  %v2240 = vmul.f32 %v2197, %v971
  %v2241 = vmul.f32 %v2202, %v971
  %v2242 = vmul.f32 %v2207, %v971
  %v2243 = vmul.f32 %v2212, %v971
  %v2244 = vmul.f32 %v2217, %v971
  %v2245 = vmul.f32 %v2222, %v971
  %v2246 = vmul.f32 %v2227, %v971
  %v2247 = vmul.f32 %v2232, %v971
  %v2248 = vmul.f32 %v2237, %v971
  %v2249 = vadd.f32 %v2240, %v985
  %v2250 = vadd.f32 %v2241, %v985
  %v2251 = vadd.f32 %v2242, %v985
  %v2252 = vadd.f32 %v2243, %v985
  %v2253 = vadd.f32 %v2244, %v985
  %v2254 = vadd.f32 %v2245, %v985
  %v2255 = vadd.f32 %v2246, %v985
  %v2256 = vadd.f32 %v2247, %v985
  %v2257 = vadd.f32 %v2248, %v985
  %v2258 = vmax.f32 %v2249, 0.0
  %v2259 = vmax.f32 %v2250, 0.0
  %v2260 = vmax.f32 %v2251, 0.0
  %v2261 = vmax.f32 %v2252, 0.0
  %v2262 = vmax.f32 %v2253, 0.0
  %v2263 = vmax.f32 %v2254, 0.0
  %v2264 = vmax.f32 %v2255, 0.0
  %v2265 = vmax.f32 %v2256, 0.0
  %v2266 = vmax.f32 %v2257, 0.0
  %v2268 = vsel %vm545, %v2258, 0
  %v2271 = vsel %vm545, %v2259, 0
  %v2274 = vsel %vm545, %v2260, 0
  %v2277 = vsel %vm545, %v2261, 0
  %v2280 = vsel %vm545, %v2262, 0
  %v2283 = vsel %vm545, %v2263, 0
  %v2286 = vsel %vm545, %v2264, 0
  %v2289 = vsel %vm545, %v2265, 0
  %v2292 = vsel %vm545, %v2266, 0
  %2294 = vmatprep.subr.mxu0 0.0
  %2295 = vmatpush1.msra.mxu0 %v817
  %2296 = vmatprep.subr.mxu0 0.0
  %2297 = vmatpush1.msra.mxu0 0.0
  %2298 = vmatprep.subr.mxu0 0.0
  %2299 = vmatpush1.msra.mxu0 0.0
  %2300 = vmatprep.subr.mxu0 0.0
  %2301 = vmatpush1.msra.mxu0 0.0
  %2302 = vmatprep.subr.mxu0 0.0
  %2303 = vmatpush1.msra.mxu0 0.0
  %2304 = vmatprep.subr.mxu0 0.0
  %2305 = vmatpush1.msra.mxu0 0.0
  %2306 = vmatprep.subr.mxu0 0.0
  %2307 = vmatpush1.msra.mxu0 0.0
  %2308 = vmatprep.subr.mxu0 0.0
  %2309 = vmatpush1.msra.mxu0 0.0
  %2310 = vmatprep.subr.mxu0 0.0
  %2311 = vmatpush1.msra.mxu0 0.0
  %2312 = vmatprep.subr.mxu0 0.0
  %2313 = vmatpush1.msra.mxu0 0.0
  %2314 = vmatprep.subr.mxu0 0.0
  %2315 = vmatpush1.msra.mxu0 0.0
  %2316 = vmatprep.subr.mxu0 0.0
  %2317 = vmatpush1.msra.mxu0 0.0
  %2318 = vmatprep.subr.mxu0 0.0
  %2319 = vmatpush1.msra.mxu0 0.0
  %2320 = vmatprep.subr.mxu0 0.0
  %2321 = vmatpush1.msra.mxu0 0.0
  %2322 = vmatprep.subr.mxu0 0.0
  %2323 = vmatpush1.msra.mxu0 0.0
  %2324 = vmatprep.subr.mxu0 0.0
  %2325 = vmatpush1.msra.mxu0 0.0
  %2326 = vmatprep.subr.mxu0 0.0
  %2327 = vmatpush1.msra.mxu0 0.0
  %2328 = vmatprep.subr.mxu0 0.0
  %2329 = vmatpush1.msra.mxu0 0.0
  %2330 = vmatprep.subr.mxu0 0.0
  %2331 = vmatpush1.msra.mxu0 0.0
  %2332 = vmatprep.subr.mxu0 0.0
  %2333 = vmatpush1.msra.mxu0 0.0
  %2334 = vmatprep.subr.mxu0 0.0
  %2335 = vmatpush1.msra.mxu0 0.0
  %2336 = vmatprep.subr.mxu0 0.0
  %2337 = vmatpush1.msra.mxu0 0.0
  %2338 = vmatprep.subr.mxu0 0.0
  %2339 = vmatpush1.msra.mxu0 0.0
  %2340 = vmatprep.subr.mxu0 0.0
  %2341 = vmatpush1.msra.mxu0 0.0
  %2342 = vmatprep.subr.mxu0 0.0
  %2343 = vmatpush1.msra.mxu0 0.0
  %2344 = vmatprep.subr.mxu0 0.0
  %2345 = vmatpush1.msra.mxu0 0.0
  %2346 = vmatprep.subr.mxu0 0.0
  %2347 = vmatpush1.msra.mxu0 0.0
  %2348 = vmatprep.subr.mxu0 0.0
  %2349 = vmatpush1.msra.mxu0 0.0
  %2350 = vmatprep.subr.mxu0 0.0
  %2351 = vmatpush1.msra.mxu0 0.0
  %2352 = vmatprep.subr.mxu0 0.0
  %2353 = vmatpush1.msra.mxu0 0.0
  %2354 = vmatprep.subr.mxu0 0.0
  %2355 = vmatpush1.msra.mxu0 0.0
  %2356 = vmatprep.subr.mxu0 0.0
  %2357 = vmatpush1.msra.mxu0 0.0
  %2358 = vmatprep.mubr.f32.mxu0 0.0
  %2359 = vmatmul.mubr.f32.gmra.mrb[0].mxu0 %v2268
  %v2360 = vpop.f32.mrb[0].mxu0
  %v2361 = vadd.f32 0.0, %v2360
  %v2362 = vpop.f32.mrb[0].mxu0
  %2363 = vmatprep.mubr.f32.mxu0 0.0
  %2364 = vmatmul.mubr.f32.gmra.mrb[0].mxu0 %v2271
  %v2365 = vpop.f32.mrb[0].mxu0
  %v2366 = vadd.f32 0.0, %v2365
  %v2367 = vpop.f32.mrb[0].mxu0
  %2368 = vmatprep.mubr.f32.mxu0 0.0
  %2369 = vmatmul.mubr.f32.gmra.mrb[0].mxu0 %v2274
  %v2370 = vpop.f32.mrb[0].mxu0
  %v2371 = vadd.f32 0.0, %v2370
  %v2372 = vpop.f32.mrb[0].mxu0
  %2373 = vmatprep.mubr.f32.mxu0 0.0
  %2374 = vmatmul.mubr.f32.gmra.mrb[0].mxu0 %v2277
  %v2375 = vpop.f32.mrb[0].mxu0
  %v2376 = vadd.f32 0.0, %v2375
  %v2377 = vpop.f32.mrb[0].mxu0
  %2378 = vmatprep.mubr.f32.mxu0 0.0
  %2379 = vmatmul.mubr.f32.gmra.mrb[0].mxu0 %v2280
  %v2380 = vpop.f32.mrb[0].mxu0
  %v2381 = vadd.f32 0.0, %v2380
  %v2382 = vpop.f32.mrb[0].mxu0
  %2383 = vmatprep.mubr.f32.mxu0 0.0
  %2384 = vmatmul.mubr.f32.gmra.mrb[0].mxu0 %v2283
  %v2385 = vpop.f32.mrb[0].mxu0
  %v2386 = vadd.f32 0.0, %v2385
  %v2387 = vpop.f32.mrb[0].mxu0
  %2388 = vmatprep.mubr.f32.mxu0 0.0
  %2389 = vmatmul.mubr.f32.gmra.mrb[0].mxu0 %v2286
  %v2390 = vpop.f32.mrb[0].mxu0
  %v2391 = vadd.f32 0.0, %v2390
  %v2392 = vpop.f32.mrb[0].mxu0
  %2393 = vmatprep.mubr.f32.mxu0 0.0
  %2394 = vmatmul.mubr.f32.gmra.mrb[0].mxu0 %v2289
  %v2395 = vpop.f32.mrb[0].mxu0
  %v2396 = vadd.f32 0.0, %v2395
  %v2397 = vpop.f32.mrb[0].mxu0
  %2398 = vmatprep.mubr.f32.mxu0 0.0
  %2399 = vmatmul.mubr.f32.gmra.mrb[0].mxu0 %v2292
  %v2400 = vpop.f32.mrb[0].mxu0
  %v2401 = vadd.f32 0.0, %v2400
  %v2402 = vpop.f32.mrb[0].mxu0
  %2403 = vdwg.mxu0
  %v2404 = vadd.f32 %v2084, %v2361
  %v2405 = vadd.f32 %v2085, %v2366
  %v2406 = vadd.f32 %v2086, %v2371
  %v2407 = vadd.f32 %v2087, %v2376
  %v2408 = vadd.f32 %v2088, %v2381
  %v2409 = vadd.f32 %v2089, %v2386
  %v2410 = vadd.f32 %v2090, %v2391
  %v2411 = vadd.f32 %v2091, %v2396
  %v2412 = vadd.f32 %v2092, %v2401
  %s2413 = scalar_lea.vmem %s1, 360
  %v2414 = vld [vmem:[%s2413] sm:$0xff]
  %v2415 = vld [vmem:[%s2413 + $0x8] sm:$0xff]
  %v2416 = vld [vmem:[%s2413 + $0x10] sm:$0xff]
  %v2417 = vld [vmem:[%s2413 + $0x18] sm:$0xff]
  %v2418 = vld [vmem:[%s2413 + $0x20] sm:$0xff]
  %v2419 = vld [vmem:[%s2413 + $0x28] sm:$0xff]
  %v2420 = vld [vmem:[%s2413 + $0x30] sm:$0xff]
  %v2421 = vld [vmem:[%s2413 + $0x38] sm:$0xff]
  %v2422 = vld [vmem:[%s2413 + $0x40] sm:$0xff]
  %v2424 = vsel %vm83, %v2414, 0
  %v2427 = vsel %vm83, %v2415, 0
  %v2430 = vsel %vm83, %v2416, 0
  %v2433 = vsel %vm83, %v2417, 0
  %v2436 = vsel %vm83, %v2418, 0
  %v2439 = vsel %vm83, %v2419, 0
  %v2442 = vsel %vm83, %v2420, 0
  %v2445 = vsel %vm83, %v2421, 0
  %v2448 = vsel %vm83, %v2422, 0
  %2450 = vmatprep.subr.mxu0 0.0
  %2451 = vmatpush1.msra.mxu0 %v29
  %2452 = vmatprep.subr.mxu0 0.0
  %2453 = vmatpush1.msra.mxu0 %v30
  %2454 = vmatprep.subr.mxu0 0.0
  %2455 = vmatpush1.msra.mxu0 %v31
  %2456 = vmatprep.subr.mxu0 0.0
  %2457 = vmatpush1.msra.mxu0 %v32
  %2458 = vmatprep.subr.mxu0 0.0
  %2459 = vmatpush1.msra.mxu0 %v233
  %2460 = vmatprep.subr.mxu0 0.0
  %2461 = vmatpush1.msra.mxu0 0.0
  %2462 = vmatprep.subr.mxu0 0.0
  %2463 = vmatpush1.msra.mxu0 0.0
  %2464 = vmatprep.subr.mxu0 0.0
  %2465 = vmatpush1.msra.mxu0 0.0
  %2466 = vmatprep.subr.mxu0 0.0
  %2467 = vmatpush1.msra.mxu0 0.0
  %2468 = vmatprep.subr.mxu0 0.0
  %2469 = vmatpush1.msra.mxu0 0.0
  %2470 = vmatprep.subr.mxu0 0.0
  %2471 = vmatpush1.msra.mxu0 0.0
  %2472 = vmatprep.subr.mxu0 0.0
  %2473 = vmatpush1.msra.mxu0 0.0
  %2474 = vmatprep.subr.mxu0 0.0
  %2475 = vmatpush1.msra.mxu0 0.0
  %2476 = vmatprep.subr.mxu0 0.0
  %2477 = vmatpush1.msra.mxu0 0.0
  %2478 = vmatprep.subr.mxu0 0.0
  %2479 = vmatpush1.msra.mxu0 0.0
  %2480 = vmatprep.subr.mxu0 0.0
  %2481 = vmatpush1.msra.mxu0 0.0
  %2482 = vmatprep.subr.mxu0 0.0
  %2483 = vmatpush1.msra.mxu0 0.0
  %2484 = vmatprep.subr.mxu0 0.0
  %2485 = vmatpush1.msra.mxu0 0.0
  %2486 = vmatprep.subr.mxu0 0.0
  %2487 = vmatpush1.msra.mxu0 0.0
  %2488 = vmatprep.subr.mxu0 0.0
  %2489 = vmatpush1.msra.mxu0 0.0
  %2490 = vmatprep.subr.mxu0 0.0
  %2491 = vmatpush1.msra.mxu0 0.0
  %2492 = vmatprep.subr.mxu0 0.0
  %2493 = vmatpush1.msra.mxu0 0.0
  %2494 = vmatprep.subr.mxu0 0.0
  %2495 = vmatpush1.msra.mxu0 0.0
  %2496 = vmatprep.subr.mxu0 0.0
  %2497 = vmatpush1.msra.mxu0 0.0
  %2498 = vmatprep.subr.mxu0 0.0
  %2499 = vmatpush1.msra.mxu0 0.0
  %2500 = vmatprep.subr.mxu0 0.0
  %2501 = vmatpush1.msra.mxu0 0.0
  %2502 = vmatprep.subr.mxu0 0.0
  %2503 = vmatpush1.msra.mxu0 0.0
  %2504 = vmatprep.subr.mxu0 0.0
  %2505 = vmatpush1.msra.mxu0 0.0
  %2506 = vmatprep.subr.mxu0 0.0
  %2507 = vmatpush1.msra.mxu0 0.0
  %2508 = vmatprep.subr.mxu0 0.0
  %2509 = vmatpush1.msra.mxu0 0.0
  %2510 = vmatprep.subr.mxu0 0.0
  %2511 = vmatpush1.msra.mxu0 0.0
  %2512 = vmatprep.subr.mxu0 0.0
  %2513 = vmatpush1.msra.mxu0 0.0
  %2514 = vmatprep.mubr.f32.mxu0 0.0
  %2515 = vmatmul.mubr.f32.gmra.mrb[0].mxu0 %v2424
  %v2516 = vpop.f32.mrb[0].mxu0
  %v2517 = vadd.f32 0.0, %v2516
  %v2518 = vpop.f32.mrb[0].mxu0
  %2519 = vmatprep.mubr.f32.mxu0 0.0
  %2520 = vmatmul.mubr.f32.gmra.mrb[0].mxu0 %v2427
  %v2521 = vpop.f32.mrb[0].mxu0
  %v2522 = vadd.f32 0.0, %v2521
  %v2523 = vpop.f32.mrb[0].mxu0
  %2524 = vmatprep.mubr.f32.mxu0 0.0
  %2525 = vmatmul.mubr.f32.gmra.mrb[0].mxu0 %v2430
  %v2526 = vpop.f32.mrb[0].mxu0
  %v2527 = vadd.f32 0.0, %v2526
  %v2528 = vpop.f32.mrb[0].mxu0
  %2529 = vmatprep.mubr.f32.mxu0 0.0
  %2530 = vmatmul.mubr.f32.gmra.mrb[0].mxu0 %v2433
  %v2531 = vpop.f32.mrb[0].mxu0
  %v2532 = vadd.f32 0.0, %v2531
  %v2533 = vpop.f32.mrb[0].mxu0
  %2534 = vmatprep.mubr.f32.mxu0 0.0
  %2535 = vmatmul.mubr.f32.gmra.mrb[0].mxu0 %v2436
  %v2536 = vpop.f32.mrb[0].mxu0
  %v2537 = vadd.f32 0.0, %v2536
  %v2538 = vpop.f32.mrb[0].mxu0
  %2539 = vmatprep.mubr.f32.mxu0 0.0
  %2540 = vmatmul.mubr.f32.gmra.mrb[0].mxu0 %v2439
  %v2541 = vpop.f32.mrb[0].mxu0
  %v2542 = vadd.f32 0.0, %v2541
  %v2543 = vpop.f32.mrb[0].mxu0
  %2544 = vmatprep.mubr.f32.mxu0 0.0
  %2545 = vmatmul.mubr.f32.gmra.mrb[0].mxu0 %v2442
  %v2546 = vpop.f32.mrb[0].mxu0
  %v2547 = vadd.f32 0.0, %v2546
  %v2548 = vpop.f32.mrb[0].mxu0
  %2549 = vmatprep.mubr.f32.mxu0 0.0
  %2550 = vmatmul.mubr.f32.gmra.mrb[0].mxu0 %v2445
  %v2551 = vpop.f32.mrb[0].mxu0
  %v2552 = vadd.f32 0.0, %v2551
  %v2553 = vpop.f32.mrb[0].mxu0
  %2554 = vmatprep.mubr.f32.mxu0 0.0
  %2555 = vmatmul.mubr.f32.gmra.mrb[0].mxu0 %v2448
  %v2556 = vpop.f32.mrb[0].mxu0
  %v2557 = vadd.f32 0.0, %v2556
  %v2558 = vpop.f32.mrb[0].mxu0
  %2559 = vdwg.mxu0
  %v2560 = vmul.f32 %v2517, %v971
  %v2561 = vmul.f32 %v2522, %v971
  %v2562 = vmul.f32 %v2527, %v971
  %v2563 = vmul.f32 %v2532, %v971
  %v2564 = vmul.f32 %v2537, %v971
  %v2565 = vmul.f32 %v2542, %v971
  %v2566 = vmul.f32 %v2547, %v971
  %v2567 = vmul.f32 %v2552, %v971
  %v2568 = vmul.f32 %v2557, %v971
  %v2569 = vadd.f32 %v2560, %v985
  %v2570 = vadd.f32 %v2561, %v985
  %v2571 = vadd.f32 %v2562, %v985
  %v2572 = vadd.f32 %v2563, %v985
  %v2573 = vadd.f32 %v2564, %v985
  %v2574 = vadd.f32 %v2565, %v985
  %v2575 = vadd.f32 %v2566, %v985
  %v2576 = vadd.f32 %v2567, %v985
  %v2577 = vadd.f32 %v2568, %v985
  %v2578 = vmax.f32 %v2569, 0.0
  %v2579 = vmax.f32 %v2570, 0.0
  %v2580 = vmax.f32 %v2571, 0.0
  %v2581 = vmax.f32 %v2572, 0.0
  %v2582 = vmax.f32 %v2573, 0.0
  %v2583 = vmax.f32 %v2574, 0.0
  %v2584 = vmax.f32 %v2575, 0.0
  %v2585 = vmax.f32 %v2576, 0.0
  %v2586 = vmax.f32 %v2577, 0.0
  %v2588 = vsel %vm545, %v2578, 0
  %v2591 = vsel %vm545, %v2579, 0
  %v2594 = vsel %vm545, %v2580, 0
  %v2597 = vsel %vm545, %v2581, 0
  %v2600 = vsel %vm545, %v2582, 0
  %v2603 = vsel %vm545, %v2583, 0
  %v2606 = vsel %vm545, %v2584, 0
  %v2609 = vsel %vm545, %v2585, 0
  %v2612 = vsel %vm545, %v2586, 0
  %2614 = vmatprep.subr.mxu0 0.0
  %2615 = vmatpush1.msra.mxu0 %v818
  %2616 = vmatprep.subr.mxu0 0.0
  %2617 = vmatpush1.msra.mxu0 0.0
  %2618 = vmatprep.subr.mxu0 0.0
  %2619 = vmatpush1.msra.mxu0 0.0
  %2620 = vmatprep.subr.mxu0 0.0
  %2621 = vmatpush1.msra.mxu0 0.0
  %2622 = vmatprep.subr.mxu0 0.0
  %2623 = vmatpush1.msra.mxu0 0.0
  %2624 = vmatprep.subr.mxu0 0.0
  %2625 = vmatpush1.msra.mxu0 0.0
  %2626 = vmatprep.subr.mxu0 0.0
  %2627 = vmatpush1.msra.mxu0 0.0
  %2628 = vmatprep.subr.mxu0 0.0
  %2629 = vmatpush1.msra.mxu0 0.0
  %2630 = vmatprep.subr.mxu0 0.0
  %2631 = vmatpush1.msra.mxu0 0.0
  %2632 = vmatprep.subr.mxu0 0.0
  %2633 = vmatpush1.msra.mxu0 0.0
  %2634 = vmatprep.subr.mxu0 0.0
  %2635 = vmatpush1.msra.mxu0 0.0
  %2636 = vmatprep.subr.mxu0 0.0
  %2637 = vmatpush1.msra.mxu0 0.0
  %2638 = vmatprep.subr.mxu0 0.0
  %2639 = vmatpush1.msra.mxu0 0.0
  %2640 = vmatprep.subr.mxu0 0.0
  %2641 = vmatpush1.msra.mxu0 0.0
  %2642 = vmatprep.subr.mxu0 0.0
  %2643 = vmatpush1.msra.mxu0 0.0
  %2644 = vmatprep.subr.mxu0 0.0
  %2645 = vmatpush1.msra.mxu0 0.0
  %2646 = vmatprep.subr.mxu0 0.0
  %2647 = vmatpush1.msra.mxu0 0.0
  %2648 = vmatprep.subr.mxu0 0.0
  %2649 = vmatpush1.msra.mxu0 0.0
  %2650 = vmatprep.subr.mxu0 0.0
  %2651 = vmatpush1.msra.mxu0 0.0
  %2652 = vmatprep.subr.mxu0 0.0
  %2653 = vmatpush1.msra.mxu0 0.0
  %2654 = vmatprep.subr.mxu0 0.0
  %2655 = vmatpush1.msra.mxu0 0.0
  %2656 = vmatprep.subr.mxu0 0.0
  %2657 = vmatpush1.msra.mxu0 0.0
  %2658 = vmatprep.subr.mxu0 0.0
  %2659 = vmatpush1.msra.mxu0 0.0
  %2660 = vmatprep.subr.mxu0 0.0
  %2661 = vmatpush1.msra.mxu0 0.0
  %2662 = vmatprep.subr.mxu0 0.0
  %2663 = vmatpush1.msra.mxu0 0.0
  %2664 = vmatprep.subr.mxu0 0.0
  %2665 = vmatpush1.msra.mxu0 0.0
  %2666 = vmatprep.subr.mxu0 0.0
  %2667 = vmatpush1.msra.mxu0 0.0
  %2668 = vmatprep.subr.mxu0 0.0
  %2669 = vmatpush1.msra.mxu0 0.0
  %2670 = vmatprep.subr.mxu0 0.0
  %2671 = vmatpush1.msra.mxu0 0.0
  %2672 = vmatprep.subr.mxu0 0.0
  %2673 = vmatpush1.msra.mxu0 0.0
  %2674 = vmatprep.subr.mxu0 0.0
  %2675 = vmatpush1.msra.mxu0 0.0
  %2676 = vmatprep.subr.mxu0 0.0
  %2677 = vmatpush1.msra.mxu0 0.0
  %2678 = vmatprep.mubr.f32.mxu0 0.0
  %2679 = vmatmul.mubr.f32.gmra.mrb[0].mxu0 %v2588
  %v2680 = vpop.f32.mrb[0].mxu0
  %v2681 = vadd.f32 0.0, %v2680
  %v2682 = vpop.f32.mrb[0].mxu0
  %2683 = vmatprep.mubr.f32.mxu0 0.0
  %2684 = vmatmul.mubr.f32.gmra.mrb[0].mxu0 %v2591
  %v2685 = vpop.f32.mrb[0].mxu0
  %v2686 = vadd.f32 0.0, %v2685
  %v2687 = vpop.f32.mrb[0].mxu0
  %2688 = vmatprep.mubr.f32.mxu0 0.0
  %2689 = vmatmul.mubr.f32.gmra.mrb[0].mxu0 %v2594
  %v2690 = vpop.f32.mrb[0].mxu0
  %v2691 = vadd.f32 0.0, %v2690
  %v2692 = vpop.f32.mrb[0].mxu0
  %2693 = vmatprep.mubr.f32.mxu0 0.0
  %2694 = vmatmul.mubr.f32.gmra.mrb[0].mxu0 %v2597
  %v2695 = vpop.f32.mrb[0].mxu0
  %v2696 = vadd.f32 0.0, %v2695
  %v2697 = vpop.f32.mrb[0].mxu0
  %2698 = vmatprep.mubr.f32.mxu0 0.0
  %2699 = vmatmul.mubr.f32.gmra.mrb[0].mxu0 %v2600
  %v2700 = vpop.f32.mrb[0].mxu0
  %v2701 = vadd.f32 0.0, %v2700
  %v2702 = vpop.f32.mrb[0].mxu0
  %2703 = vmatprep.mubr.f32.mxu0 0.0
  %2704 = vmatmul.mubr.f32.gmra.mrb[0].mxu0 %v2603
  %v2705 = vpop.f32.mrb[0].mxu0
  %v2706 = vadd.f32 0.0, %v2705
  %v2707 = vpop.f32.mrb[0].mxu0
  %2708 = vmatprep.mubr.f32.mxu0 0.0
  %2709 = vmatmul.mubr.f32.gmra.mrb[0].mxu0 %v2606
  %v2710 = vpop.f32.mrb[0].mxu0
  %v2711 = vadd.f32 0.0, %v2710
  %v2712 = vpop.f32.mrb[0].mxu0
  %2713 = vmatprep.mubr.f32.mxu0 0.0
  %2714 = vmatmul.mubr.f32.gmra.mrb[0].mxu0 %v2609
  %v2715 = vpop.f32.mrb[0].mxu0
  %v2716 = vadd.f32 0.0, %v2715
  %v2717 = vpop.f32.mrb[0].mxu0
  %2718 = vmatprep.mubr.f32.mxu0 0.0
  %2719 = vmatmul.mubr.f32.gmra.mrb[0].mxu0 %v2612
  %v2720 = vpop.f32.mrb[0].mxu0
  %v2721 = vadd.f32 0.0, %v2720
  %v2722 = vpop.f32.mrb[0].mxu0
  %2723 = vdwg.mxu0
  %v2724 = vadd.f32 %v2404, %v2681
  %v2725 = vadd.f32 %v2405, %v2686
  %v2726 = vadd.f32 %v2406, %v2691
  %v2727 = vadd.f32 %v2407, %v2696
  %v2728 = vadd.f32 %v2408, %v2701
  %v2729 = vadd.f32 %v2409, %v2706
  %v2730 = vadd.f32 %v2410, %v2711
  %v2731 = vadd.f32 %v2411, %v2716
  %v2732 = vadd.f32 %v2412, %v2721
  %s2733 = scalar_lea.vmem %s1, 432
  %v2734 = vld [vmem:[%s2733] sm:$0xff]
  %v2735 = vld [vmem:[%s2733 + $0x8] sm:$0xff]
  %v2736 = vld [vmem:[%s2733 + $0x10] sm:$0xff]
  %v2737 = vld [vmem:[%s2733 + $0x18] sm:$0xff]
  %v2738 = vld [vmem:[%s2733 + $0x20] sm:$0xff]
  %v2739 = vld [vmem:[%s2733 + $0x28] sm:$0xff]
  %v2740 = vld [vmem:[%s2733 + $0x30] sm:$0xff]
  %v2741 = vld [vmem:[%s2733 + $0x38] sm:$0xff]
  %v2742 = vld [vmem:[%s2733 + $0x40] sm:$0xff]
  %v2744 = vsel %vm83, %v2734, 0
  %v2747 = vsel %vm83, %v2735, 0
  %v2750 = vsel %vm83, %v2736, 0
  %v2753 = vsel %vm83, %v2737, 0
  %v2756 = vsel %vm83, %v2738, 0
  %v2759 = vsel %vm83, %v2739, 0
  %v2762 = vsel %vm83, %v2740, 0
  %v2765 = vsel %vm83, %v2741, 0
  %v2768 = vsel %vm83, %v2742, 0
  %2770 = vmatprep.subr.mxu0 0.0
  %2771 = vmatpush1.msra.mxu0 %v29
  %2772 = vmatprep.subr.mxu0 0.0
  %2773 = vmatpush1.msra.mxu0 %v30
  %2774 = vmatprep.subr.mxu0 0.0
  %2775 = vmatpush1.msra.mxu0 %v31
  %2776 = vmatprep.subr.mxu0 0.0
  %2777 = vmatpush1.msra.mxu0 %v32
  %2778 = vmatprep.subr.mxu0 0.0
  %2779 = vmatpush1.msra.mxu0 %v233
  %2780 = vmatprep.subr.mxu0 0.0
  %2781 = vmatpush1.msra.mxu0 0.0
  %2782 = vmatprep.subr.mxu0 0.0
  %2783 = vmatpush1.msra.mxu0 0.0
  %2784 = vmatprep.subr.mxu0 0.0
  %2785 = vmatpush1.msra.mxu0 0.0
  %2786 = vmatprep.subr.mxu0 0.0
  %2787 = vmatpush1.msra.mxu0 0.0
  %2788 = vmatprep.subr.mxu0 0.0
  %2789 = vmatpush1.msra.mxu0 0.0
  %2790 = vmatprep.subr.mxu0 0.0
  %2791 = vmatpush1.msra.mxu0 0.0
  %2792 = vmatprep.subr.mxu0 0.0
  %2793 = vmatpush1.msra.mxu0 0.0
  %2794 = vmatprep.subr.mxu0 0.0
  %2795 = vmatpush1.msra.mxu0 0.0
  %2796 = vmatprep.subr.mxu0 0.0
  %2797 = vmatpush1.msra.mxu0 0.0
  %2798 = vmatprep.subr.mxu0 0.0
  %2799 = vmatpush1.msra.mxu0 0.0
  %2800 = vmatprep.subr.mxu0 0.0
  %2801 = vmatpush1.msra.mxu0 0.0
  %2802 = vmatprep.subr.mxu0 0.0
  %2803 = vmatpush1.msra.mxu0 0.0
  %2804 = vmatprep.subr.mxu0 0.0
  %2805 = vmatpush1.msra.mxu0 0.0
  %2806 = vmatprep.subr.mxu0 0.0
  %2807 = vmatpush1.msra.mxu0 0.0
  %2808 = vmatprep.subr.mxu0 0.0
  %2809 = vmatpush1.msra.mxu0 0.0
  %2810 = vmatprep.subr.mxu0 0.0
  %2811 = vmatpush1.msra.mxu0 0.0
  %2812 = vmatprep.subr.mxu0 0.0
  %2813 = vmatpush1.msra.mxu0 0.0
  %2814 = vmatprep.subr.mxu0 0.0
  %2815 = vmatpush1.msra.mxu0 0.0
  %2816 = vmatprep.subr.mxu0 0.0
  %2817 = vmatpush1.msra.mxu0 0.0
  %2818 = vmatprep.subr.mxu0 0.0
  %2819 = vmatpush1.msra.mxu0 0.0
  %2820 = vmatprep.subr.mxu0 0.0
  %2821 = vmatpush1.msra.mxu0 0.0
  %2822 = vmatprep.subr.mxu0 0.0
  %2823 = vmatpush1.msra.mxu0 0.0
  %2824 = vmatprep.subr.mxu0 0.0
  %2825 = vmatpush1.msra.mxu0 0.0
  %2826 = vmatprep.subr.mxu0 0.0
  %2827 = vmatpush1.msra.mxu0 0.0
  %2828 = vmatprep.subr.mxu0 0.0
  %2829 = vmatpush1.msra.mxu0 0.0
  %2830 = vmatprep.subr.mxu0 0.0
  %2831 = vmatpush1.msra.mxu0 0.0
  %2832 = vmatprep.subr.mxu0 0.0
  %2833 = vmatpush1.msra.mxu0 0.0
  %2834 = vmatprep.mubr.f32.mxu0 0.0
  %2835 = vmatmul.mubr.f32.gmra.mrb[0].mxu0 %v2744
  %v2836 = vpop.f32.mrb[0].mxu0
  %v2837 = vadd.f32 0.0, %v2836
  %v2838 = vpop.f32.mrb[0].mxu0
  %2839 = vmatprep.mubr.f32.mxu0 0.0
  %2840 = vmatmul.mubr.f32.gmra.mrb[0].mxu0 %v2747
  %v2841 = vpop.f32.mrb[0].mxu0
  %v2842 = vadd.f32 0.0, %v2841
  %v2843 = vpop.f32.mrb[0].mxu0
  %2844 = vmatprep.mubr.f32.mxu0 0.0
  %2845 = vmatmul.mubr.f32.gmra.mrb[0].mxu0 %v2750
  %v2846 = vpop.f32.mrb[0].mxu0
  %v2847 = vadd.f32 0.0, %v2846
  %v2848 = vpop.f32.mrb[0].mxu0
  %2849 = vmatprep.mubr.f32.mxu0 0.0
  %2850 = vmatmul.mubr.f32.gmra.mrb[0].mxu0 %v2753
  %v2851 = vpop.f32.mrb[0].mxu0
  %v2852 = vadd.f32 0.0, %v2851
  %v2853 = vpop.f32.mrb[0].mxu0
  %2854 = vmatprep.mubr.f32.mxu0 0.0
  %2855 = vmatmul.mubr.f32.gmra.mrb[0].mxu0 %v2756
  %v2856 = vpop.f32.mrb[0].mxu0
  %v2857 = vadd.f32 0.0, %v2856
  %v2858 = vpop.f32.mrb[0].mxu0
  %2859 = vmatprep.mubr.f32.mxu0 0.0
  %2860 = vmatmul.mubr.f32.gmra.mrb[0].mxu0 %v2759
  %v2861 = vpop.f32.mrb[0].mxu0
  %v2862 = vadd.f32 0.0, %v2861
  %v2863 = vpop.f32.mrb[0].mxu0
  %2864 = vmatprep.mubr.f32.mxu0 0.0
  %2865 = vmatmul.mubr.f32.gmra.mrb[0].mxu0 %v2762
  %v2866 = vpop.f32.mrb[0].mxu0
  %v2867 = vadd.f32 0.0, %v2866
  %v2868 = vpop.f32.mrb[0].mxu0
  %2869 = vmatprep.mubr.f32.mxu0 0.0
  %2870 = vmatmul.mubr.f32.gmra.mrb[0].mxu0 %v2765
  %v2871 = vpop.f32.mrb[0].mxu0
  %v2872 = vadd.f32 0.0, %v2871
  %v2873 = vpop.f32.mrb[0].mxu0
  %2874 = vmatprep.mubr.f32.mxu0 0.0
  %2875 = vmatmul.mubr.f32.gmra.mrb[0].mxu0 %v2768
  %v2876 = vpop.f32.mrb[0].mxu0
  %v2877 = vadd.f32 0.0, %v2876
  %v2878 = vpop.f32.mrb[0].mxu0
  %2879 = vdwg.mxu0
  %v2880 = vmul.f32 %v2837, %v971
  %v2881 = vmul.f32 %v2842, %v971
  %v2882 = vmul.f32 %v2847, %v971
  %v2883 = vmul.f32 %v2852, %v971
  %v2884 = vmul.f32 %v2857, %v971
  %v2885 = vmul.f32 %v2862, %v971
  %v2886 = vmul.f32 %v2867, %v971
  %v2887 = vmul.f32 %v2872, %v971
  %v2888 = vmul.f32 %v2877, %v971
  %v2889 = vadd.f32 %v2880, %v985
  %v2890 = vadd.f32 %v2881, %v985
  %v2891 = vadd.f32 %v2882, %v985
  %v2892 = vadd.f32 %v2883, %v985
  %v2893 = vadd.f32 %v2884, %v985
  %v2894 = vadd.f32 %v2885, %v985
  %v2895 = vadd.f32 %v2886, %v985
  %v2896 = vadd.f32 %v2887, %v985
  %v2897 = vadd.f32 %v2888, %v985
  %v2898 = vmax.f32 %v2889, 0.0
  %v2899 = vmax.f32 %v2890, 0.0
  %v2900 = vmax.f32 %v2891, 0.0
  %v2901 = vmax.f32 %v2892, 0.0
  %v2902 = vmax.f32 %v2893, 0.0
  %v2903 = vmax.f32 %v2894, 0.0
  %v2904 = vmax.f32 %v2895, 0.0
  %v2905 = vmax.f32 %v2896, 0.0
  %v2906 = vmax.f32 %v2897, 0.0
  %v2908 = vsel %vm545, %v2898, 0
  %v2911 = vsel %vm545, %v2899, 0
  %v2914 = vsel %vm545, %v2900, 0
  %v2917 = vsel %vm545, %v2901, 0
  %v2920 = vsel %vm545, %v2902, 0
  %v2923 = vsel %vm545, %v2903, 0
  %v2926 = vsel %vm545, %v2904, 0
  %v2929 = vsel %vm545, %v2905, 0
  %v2932 = vsel %vm545, %v2906, 0
  %2934 = vmatprep.subr.mxu0 0.0
  %2935 = vmatpush1.msra.mxu0 %v819
  %2936 = vmatprep.subr.mxu0 0.0
  %2937 = vmatpush1.msra.mxu0 0.0
  %2938 = vmatprep.subr.mxu0 0.0
  %2939 = vmatpush1.msra.mxu0 0.0
  %2940 = vmatprep.subr.mxu0 0.0
  %2941 = vmatpush1.msra.mxu0 0.0
  %2942 = vmatprep.subr.mxu0 0.0
  %2943 = vmatpush1.msra.mxu0 0.0
  %2944 = vmatprep.subr.mxu0 0.0
  %2945 = vmatpush1.msra.mxu0 0.0
  %2946 = vmatprep.subr.mxu0 0.0
  %2947 = vmatpush1.msra.mxu0 0.0
  %2948 = vmatprep.subr.mxu0 0.0
  %2949 = vmatpush1.msra.mxu0 0.0
  %2950 = vmatprep.subr.mxu0 0.0
  %2951 = vmatpush1.msra.mxu0 0.0
  %2952 = vmatprep.subr.mxu0 0.0
  %2953 = vmatpush1.msra.mxu0 0.0
  %2954 = vmatprep.subr.mxu0 0.0
  %2955 = vmatpush1.msra.mxu0 0.0
  %2956 = vmatprep.subr.mxu0 0.0
  %2957 = vmatpush1.msra.mxu0 0.0
  %2958 = vmatprep.subr.mxu0 0.0
  %2959 = vmatpush1.msra.mxu0 0.0
  %2960 = vmatprep.subr.mxu0 0.0
  %2961 = vmatpush1.msra.mxu0 0.0
  %2962 = vmatprep.subr.mxu0 0.0
  %2963 = vmatpush1.msra.mxu0 0.0
  %2964 = vmatprep.subr.mxu0 0.0
  %2965 = vmatpush1.msra.mxu0 0.0
  %2966 = vmatprep.subr.mxu0 0.0
  %2967 = vmatpush1.msra.mxu0 0.0
  %2968 = vmatprep.subr.mxu0 0.0
  %2969 = vmatpush1.msra.mxu0 0.0
  %2970 = vmatprep.subr.mxu0 0.0
  %2971 = vmatpush1.msra.mxu0 0.0
  %2972 = vmatprep.subr.mxu0 0.0
  %2973 = vmatpush1.msra.mxu0 0.0
  %2974 = vmatprep.subr.mxu0 0.0
  %2975 = vmatpush1.msra.mxu0 0.0
  %2976 = vmatprep.subr.mxu0 0.0
  %2977 = vmatpush1.msra.mxu0 0.0
  %2978 = vmatprep.subr.mxu0 0.0
  %2979 = vmatpush1.msra.mxu0 0.0
  %2980 = vmatprep.subr.mxu0 0.0
  %2981 = vmatpush1.msra.mxu0 0.0
  %2982 = vmatprep.subr.mxu0 0.0
  %2983 = vmatpush1.msra.mxu0 0.0
  %2984 = vmatprep.subr.mxu0 0.0
  %2985 = vmatpush1.msra.mxu0 0.0
  %2986 = vmatprep.subr.mxu0 0.0
  %2987 = vmatpush1.msra.mxu0 0.0
  %2988 = vmatprep.subr.mxu0 0.0
  %2989 = vmatpush1.msra.mxu0 0.0
  %2990 = vmatprep.subr.mxu0 0.0
  %2991 = vmatpush1.msra.mxu0 0.0
  %2992 = vmatprep.subr.mxu0 0.0
  %2993 = vmatpush1.msra.mxu0 0.0
  %2994 = vmatprep.subr.mxu0 0.0
  %2995 = vmatpush1.msra.mxu0 0.0
  %2996 = vmatprep.subr.mxu0 0.0
  %2997 = vmatpush1.msra.mxu0 0.0
  %2998 = vmatprep.mubr.f32.mxu0 0.0
  %2999 = vmatmul.mubr.f32.gmra.mrb[0].mxu0 %v2908
  %v3000 = vpop.f32.mrb[0].mxu0
  %v3001 = vadd.f32 0.0, %v3000
  %v3002 = vpop.f32.mrb[0].mxu0
  %3003 = vmatprep.mubr.f32.mxu0 0.0
  %3004 = vmatmul.mubr.f32.gmra.mrb[0].mxu0 %v2911
  %v3005 = vpop.f32.mrb[0].mxu0
  %v3006 = vadd.f32 0.0, %v3005
  %v3007 = vpop.f32.mrb[0].mxu0
  %3008 = vmatprep.mubr.f32.mxu0 0.0
  %3009 = vmatmul.mubr.f32.gmra.mrb[0].mxu0 %v2914
  %v3010 = vpop.f32.mrb[0].mxu0
  %v3011 = vadd.f32 0.0, %v3010
  %v3012 = vpop.f32.mrb[0].mxu0
  %3013 = vmatprep.mubr.f32.mxu0 0.0
  %3014 = vmatmul.mubr.f32.gmra.mrb[0].mxu0 %v2917
  %v3015 = vpop.f32.mrb[0].mxu0
  %v3016 = vadd.f32 0.0, %v3015
  %v3017 = vpop.f32.mrb[0].mxu0
  %3018 = vmatprep.mubr.f32.mxu0 0.0
  %3019 = vmatmul.mubr.f32.gmra.mrb[0].mxu0 %v2920
  %v3020 = vpop.f32.mrb[0].mxu0
  %v3021 = vadd.f32 0.0, %v3020
  %v3022 = vpop.f32.mrb[0].mxu0
  %3023 = vmatprep.mubr.f32.mxu0 0.0
  %3024 = vmatmul.mubr.f32.gmra.mrb[0].mxu0 %v2923
  %v3025 = vpop.f32.mrb[0].mxu0
  %v3026 = vadd.f32 0.0, %v3025
  %v3027 = vpop.f32.mrb[0].mxu0
  %3028 = vmatprep.mubr.f32.mxu0 0.0
  %3029 = vmatmul.mubr.f32.gmra.mrb[0].mxu0 %v2926
  %v3030 = vpop.f32.mrb[0].mxu0
  %v3031 = vadd.f32 0.0, %v3030
  %v3032 = vpop.f32.mrb[0].mxu0
  %3033 = vmatprep.mubr.f32.mxu0 0.0
  %3034 = vmatmul.mubr.f32.gmra.mrb[0].mxu0 %v2929
  %v3035 = vpop.f32.mrb[0].mxu0
  %v3036 = vadd.f32 0.0, %v3035
  %v3037 = vpop.f32.mrb[0].mxu0
  %3038 = vmatprep.mubr.f32.mxu0 0.0
  %3039 = vmatmul.mubr.f32.gmra.mrb[0].mxu0 %v2932
  %v3040 = vpop.f32.mrb[0].mxu0
  %v3041 = vadd.f32 0.0, %v3040
  %v3042 = vpop.f32.mrb[0].mxu0
  %3043 = vdwg.mxu0
  %v3044 = vadd.f32 %v2724, %v3001
  %v3045 = vadd.f32 %v2725, %v3006
  %v3046 = vadd.f32 %v2726, %v3011
  %v3047 = vadd.f32 %v2727, %v3016
  %v3048 = vadd.f32 %v2728, %v3021
  %v3049 = vadd.f32 %v2729, %v3026
  %v3050 = vadd.f32 %v2730, %v3031
  %v3051 = vadd.f32 %v2731, %v3036
  %v3052 = vadd.f32 %v2732, %v3041
  %s3053 = scalar_lea.vmem %s1, 504
  %v3054 = vld [vmem:[%s3053] sm:$0xff]
  %v3055 = vld [vmem:[%s3053 + $0x8] sm:$0xff]
  %v3056 = vld [vmem:[%s3053 + $0x10] sm:$0xff]
  %v3057 = vld [vmem:[%s3053 + $0x18] sm:$0xff]
  %v3058 = vld [vmem:[%s3053 + $0x20] sm:$0xff]
  %v3059 = vld [vmem:[%s3053 + $0x28] sm:$0xff]
  %v3060 = vld [vmem:[%s3053 + $0x30] sm:$0xff]
  %v3061 = vld [vmem:[%s3053 + $0x38] sm:$0xff]
  %v3062 = vld [vmem:[%s3053 + $0x40] sm:$0xff]
  %v3064 = vsel %vm83, %v3054, 0
  %v3067 = vsel %vm83, %v3055, 0
  %v3070 = vsel %vm83, %v3056, 0
  %v3073 = vsel %vm83, %v3057, 0
  %v3076 = vsel %vm83, %v3058, 0
  %v3079 = vsel %vm83, %v3059, 0
  %v3082 = vsel %vm83, %v3060, 0
  %v3085 = vsel %vm83, %v3061, 0
  %v3088 = vsel %vm83, %v3062, 0
  %3090 = vmatprep.subr.mxu0 0.0
  %3091 = vmatpush1.msra.mxu0 %v29
  %3092 = vmatprep.subr.mxu0 0.0
  %3093 = vmatpush1.msra.mxu0 %v30
  %3094 = vmatprep.subr.mxu0 0.0
  %3095 = vmatpush1.msra.mxu0 %v31
  %3096 = vmatprep.subr.mxu0 0.0
  %3097 = vmatpush1.msra.mxu0 %v32
  %3098 = vmatprep.subr.mxu0 0.0
  %3099 = vmatpush1.msra.mxu0 %v233
  %3100 = vmatprep.subr.mxu0 0.0
  %3101 = vmatpush1.msra.mxu0 0.0
  %3102 = vmatprep.subr.mxu0 0.0
  %3103 = vmatpush1.msra.mxu0 0.0
  %3104 = vmatprep.subr.mxu0 0.0
  %3105 = vmatpush1.msra.mxu0 0.0
  %3106 = vmatprep.subr.mxu0 0.0
  %3107 = vmatpush1.msra.mxu0 0.0
  %3108 = vmatprep.subr.mxu0 0.0
  %3109 = vmatpush1.msra.mxu0 0.0
  %3110 = vmatprep.subr.mxu0 0.0
  %3111 = vmatpush1.msra.mxu0 0.0
  %3112 = vmatprep.subr.mxu0 0.0
  %3113 = vmatpush1.msra.mxu0 0.0
  %3114 = vmatprep.subr.mxu0 0.0
  %3115 = vmatpush1.msra.mxu0 0.0
  %3116 = vmatprep.subr.mxu0 0.0
  %3117 = vmatpush1.msra.mxu0 0.0
  %3118 = vmatprep.subr.mxu0 0.0
  %3119 = vmatpush1.msra.mxu0 0.0
  %3120 = vmatprep.subr.mxu0 0.0
  %3121 = vmatpush1.msra.mxu0 0.0
  %3122 = vmatprep.subr.mxu0 0.0
  %3123 = vmatpush1.msra.mxu0 0.0
  %3124 = vmatprep.subr.mxu0 0.0
  %3125 = vmatpush1.msra.mxu0 0.0
  %3126 = vmatprep.subr.mxu0 0.0
  %3127 = vmatpush1.msra.mxu0 0.0
  %3128 = vmatprep.subr.mxu0 0.0
  %3129 = vmatpush1.msra.mxu0 0.0
  %3130 = vmatprep.subr.mxu0 0.0
  %3131 = vmatpush1.msra.mxu0 0.0
  %3132 = vmatprep.subr.mxu0 0.0
  %3133 = vmatpush1.msra.mxu0 0.0
  %3134 = vmatprep.subr.mxu0 0.0
  %3135 = vmatpush1.msra.mxu0 0.0
  %3136 = vmatprep.subr.mxu0 0.0
  %3137 = vmatpush1.msra.mxu0 0.0
  %3138 = vmatprep.subr.mxu0 0.0
  %3139 = vmatpush1.msra.mxu0 0.0
  %3140 = vmatprep.subr.mxu0 0.0
  %3141 = vmatpush1.msra.mxu0 0.0
  %3142 = vmatprep.subr.mxu0 0.0
  %3143 = vmatpush1.msra.mxu0 0.0
  %3144 = vmatprep.subr.mxu0 0.0
  %3145 = vmatpush1.msra.mxu0 0.0
  %3146 = vmatprep.subr.mxu0 0.0
  %3147 = vmatpush1.msra.mxu0 0.0
  %3148 = vmatprep.subr.mxu0 0.0
  %3149 = vmatpush1.msra.mxu0 0.0
  %3150 = vmatprep.subr.mxu0 0.0
  %3151 = vmatpush1.msra.mxu0 0.0
  %3152 = vmatprep.subr.mxu0 0.0
  %3153 = vmatpush1.msra.mxu0 0.0
  %3154 = vmatprep.mubr.f32.mxu0 0.0
  %3155 = vmatmul.mubr.f32.gmra.mrb[0].mxu0 %v3064
  %v3156 = vpop.f32.mrb[0].mxu0
  %v3157 = vadd.f32 0.0, %v3156
  %v3158 = vpop.f32.mrb[0].mxu0
  %3159 = vmatprep.mubr.f32.mxu0 0.0
  %3160 = vmatmul.mubr.f32.gmra.mrb[0].mxu0 %v3067
  %v3161 = vpop.f32.mrb[0].mxu0
  %v3162 = vadd.f32 0.0, %v3161
  %v3163 = vpop.f32.mrb[0].mxu0
  %3164 = vmatprep.mubr.f32.mxu0 0.0
  %3165 = vmatmul.mubr.f32.gmra.mrb[0].mxu0 %v3070
  %v3166 = vpop.f32.mrb[0].mxu0
  %v3167 = vadd.f32 0.0, %v3166
  %v3168 = vpop.f32.mrb[0].mxu0
  %3169 = vmatprep.mubr.f32.mxu0 0.0
  %3170 = vmatmul.mubr.f32.gmra.mrb[0].mxu0 %v3073
  %v3171 = vpop.f32.mrb[0].mxu0
  %v3172 = vadd.f32 0.0, %v3171
  %v3173 = vpop.f32.mrb[0].mxu0
  %3174 = vmatprep.mubr.f32.mxu0 0.0
  %3175 = vmatmul.mubr.f32.gmra.mrb[0].mxu0 %v3076
  %v3176 = vpop.f32.mrb[0].mxu0
  %v3177 = vadd.f32 0.0, %v3176
  %v3178 = vpop.f32.mrb[0].mxu0
  %3179 = vmatprep.mubr.f32.mxu0 0.0
  %3180 = vmatmul.mubr.f32.gmra.mrb[0].mxu0 %v3079
  %v3181 = vpop.f32.mrb[0].mxu0
  %v3182 = vadd.f32 0.0, %v3181
  %v3183 = vpop.f32.mrb[0].mxu0
  %3184 = vmatprep.mubr.f32.mxu0 0.0
  %3185 = vmatmul.mubr.f32.gmra.mrb[0].mxu0 %v3082
  %v3186 = vpop.f32.mrb[0].mxu0
  %v3187 = vadd.f32 0.0, %v3186
  %v3188 = vpop.f32.mrb[0].mxu0
  %3189 = vmatprep.mubr.f32.mxu0 0.0
  %3190 = vmatmul.mubr.f32.gmra.mrb[0].mxu0 %v3085
  %v3191 = vpop.f32.mrb[0].mxu0
  %v3192 = vadd.f32 0.0, %v3191
  %v3193 = vpop.f32.mrb[0].mxu0
  %3194 = vmatprep.mubr.f32.mxu0 0.0
  %3195 = vmatmul.mubr.f32.gmra.mrb[0].mxu0 %v3088
  %v3196 = vpop.f32.mrb[0].mxu0
  %v3197 = vadd.f32 0.0, %v3196
  %v3198 = vpop.f32.mrb[0].mxu0
  %3199 = vdwg.mxu0
  %v3200 = vmul.f32 %v3157, %v971
  %v3201 = vmul.f32 %v3162, %v971
  %v3202 = vmul.f32 %v3167, %v971
  %v3203 = vmul.f32 %v3172, %v971
  %v3204 = vmul.f32 %v3177, %v971
  %v3205 = vmul.f32 %v3182, %v971
  %v3206 = vmul.f32 %v3187, %v971
  %v3207 = vmul.f32 %v3192, %v971
  %v3208 = vmul.f32 %v3197, %v971
  %v3209 = vadd.f32 %v3200, %v985
  %v3210 = vadd.f32 %v3201, %v985
  %v3211 = vadd.f32 %v3202, %v985
  %v3212 = vadd.f32 %v3203, %v985
  %v3213 = vadd.f32 %v3204, %v985
  %v3214 = vadd.f32 %v3205, %v985
  %v3215 = vadd.f32 %v3206, %v985
  %v3216 = vadd.f32 %v3207, %v985
  %v3217 = vadd.f32 %v3208, %v985
  %v3218 = vmax.f32 %v3209, 0.0
  %v3219 = vmax.f32 %v3210, 0.0
  %v3220 = vmax.f32 %v3211, 0.0
  %v3221 = vmax.f32 %v3212, 0.0
  %v3222 = vmax.f32 %v3213, 0.0
  %v3223 = vmax.f32 %v3214, 0.0
  %v3224 = vmax.f32 %v3215, 0.0
  %v3225 = vmax.f32 %v3216, 0.0
  %v3226 = vmax.f32 %v3217, 0.0
  %v3228 = vsel %vm545, %v3218, 0
  %v3231 = vsel %vm545, %v3219, 0
  %v3234 = vsel %vm545, %v3220, 0
  %v3237 = vsel %vm545, %v3221, 0
  %v3240 = vsel %vm545, %v3222, 0
  %v3243 = vsel %vm545, %v3223, 0
  %v3246 = vsel %vm545, %v3224, 0
  %v3249 = vsel %vm545, %v3225, 0
  %v3252 = vsel %vm545, %v3226, 0
  %3254 = vmatprep.subr.mxu0 0.0
  %3255 = vmatpush1.msra.mxu0 %v820
  %3256 = vmatprep.subr.mxu0 0.0
  %3257 = vmatpush1.msra.mxu0 0.0
  %3258 = vmatprep.subr.mxu0 0.0
  %3259 = vmatpush1.msra.mxu0 0.0
  %3260 = vmatprep.subr.mxu0 0.0
  %3261 = vmatpush1.msra.mxu0 0.0
  %3262 = vmatprep.subr.mxu0 0.0
  %3263 = vmatpush1.msra.mxu0 0.0
  %3264 = vmatprep.subr.mxu0 0.0
  %3265 = vmatpush1.msra.mxu0 0.0
  %3266 = vmatprep.subr.mxu0 0.0
  %3267 = vmatpush1.msra.mxu0 0.0
  %3268 = vmatprep.subr.mxu0 0.0
  %3269 = vmatpush1.msra.mxu0 0.0
  %3270 = vmatprep.subr.mxu0 0.0
  %3271 = vmatpush1.msra.mxu0 0.0
  %3272 = vmatprep.subr.mxu0 0.0
  %3273 = vmatpush1.msra.mxu0 0.0
  %3274 = vmatprep.subr.mxu0 0.0
  %3275 = vmatpush1.msra.mxu0 0.0
  %3276 = vmatprep.subr.mxu0 0.0
  %3277 = vmatpush1.msra.mxu0 0.0
  %3278 = vmatprep.subr.mxu0 0.0
  %3279 = vmatpush1.msra.mxu0 0.0
  %3280 = vmatprep.subr.mxu0 0.0
  %3281 = vmatpush1.msra.mxu0 0.0
  %3282 = vmatprep.subr.mxu0 0.0
  %3283 = vmatpush1.msra.mxu0 0.0
  %3284 = vmatprep.subr.mxu0 0.0
  %3285 = vmatpush1.msra.mxu0 0.0
  %3286 = vmatprep.subr.mxu0 0.0
  %3287 = vmatpush1.msra.mxu0 0.0
  %3288 = vmatprep.subr.mxu0 0.0
  %3289 = vmatpush1.msra.mxu0 0.0
  %3290 = vmatprep.subr.mxu0 0.0
  %3291 = vmatpush1.msra.mxu0 0.0
  %3292 = vmatprep.subr.mxu0 0.0
  %3293 = vmatpush1.msra.mxu0 0.0
  %3294 = vmatprep.subr.mxu0 0.0
  %3295 = vmatpush1.msra.mxu0 0.0
  %3296 = vmatprep.subr.mxu0 0.0
  %3297 = vmatpush1.msra.mxu0 0.0
  %3298 = vmatprep.subr.mxu0 0.0
  %3299 = vmatpush1.msra.mxu0 0.0
  %3300 = vmatprep.subr.mxu0 0.0
  %3301 = vmatpush1.msra.mxu0 0.0
  %3302 = vmatprep.subr.mxu0 0.0
  %3303 = vmatpush1.msra.mxu0 0.0
  %3304 = vmatprep.subr.mxu0 0.0
  %3305 = vmatpush1.msra.mxu0 0.0
  %3306 = vmatprep.subr.mxu0 0.0
  %3307 = vmatpush1.msra.mxu0 0.0
  %3308 = vmatprep.subr.mxu0 0.0
  %3309 = vmatpush1.msra.mxu0 0.0
  %3310 = vmatprep.subr.mxu0 0.0
  %3311 = vmatpush1.msra.mxu0 0.0
  %3312 = vmatprep.subr.mxu0 0.0
  %3313 = vmatpush1.msra.mxu0 0.0
  %3314 = vmatprep.subr.mxu0 0.0
  %3315 = vmatpush1.msra.mxu0 0.0
  %3316 = vmatprep.subr.mxu0 0.0
  %3317 = vmatpush1.msra.mxu0 0.0
  %3318 = vmatprep.mubr.f32.mxu0 0.0
  %3319 = vmatmul.mubr.f32.gmra.mrb[0].mxu0 %v3228
  %v3320 = vpop.f32.mrb[0].mxu0
  %v3321 = vadd.f32 0.0, %v3320
  %v3322 = vpop.f32.mrb[0].mxu0
  %3323 = vmatprep.mubr.f32.mxu0 0.0
  %3324 = vmatmul.mubr.f32.gmra.mrb[0].mxu0 %v3231
  %v3325 = vpop.f32.mrb[0].mxu0
  %v3326 = vadd.f32 0.0, %v3325
  %v3327 = vpop.f32.mrb[0].mxu0
  %3328 = vmatprep.mubr.f32.mxu0 0.0
  %3329 = vmatmul.mubr.f32.gmra.mrb[0].mxu0 %v3234
  %v3330 = vpop.f32.mrb[0].mxu0
  %v3331 = vadd.f32 0.0, %v3330
  %v3332 = vpop.f32.mrb[0].mxu0
  %3333 = vmatprep.mubr.f32.mxu0 0.0
  %3334 = vmatmul.mubr.f32.gmra.mrb[0].mxu0 %v3237
  %v3335 = vpop.f32.mrb[0].mxu0
  %v3336 = vadd.f32 0.0, %v3335
  %v3337 = vpop.f32.mrb[0].mxu0
  %3338 = vmatprep.mubr.f32.mxu0 0.0
  %3339 = vmatmul.mubr.f32.gmra.mrb[0].mxu0 %v3240
  %v3340 = vpop.f32.mrb[0].mxu0
  %v3341 = vadd.f32 0.0, %v3340
  %v3342 = vpop.f32.mrb[0].mxu0
  %3343 = vmatprep.mubr.f32.mxu0 0.0
  %3344 = vmatmul.mubr.f32.gmra.mrb[0].mxu0 %v3243
  %v3345 = vpop.f32.mrb[0].mxu0
  %v3346 = vadd.f32 0.0, %v3345
  %v3347 = vpop.f32.mrb[0].mxu0
  %3348 = vmatprep.mubr.f32.mxu0 0.0
  %3349 = vmatmul.mubr.f32.gmra.mrb[0].mxu0 %v3246
  %v3350 = vpop.f32.mrb[0].mxu0
  %v3351 = vadd.f32 0.0, %v3350
  %v3352 = vpop.f32.mrb[0].mxu0
  %3353 = vmatprep.mubr.f32.mxu0 0.0
  %3354 = vmatmul.mubr.f32.gmra.mrb[0].mxu0 %v3249
  %v3355 = vpop.f32.mrb[0].mxu0
  %v3356 = vadd.f32 0.0, %v3355
  %v3357 = vpop.f32.mrb[0].mxu0
  %3358 = vmatprep.mubr.f32.mxu0 0.0
  %3359 = vmatmul.mubr.f32.gmra.mrb[0].mxu0 %v3252
  %v3360 = vpop.f32.mrb[0].mxu0
  %v3361 = vadd.f32 0.0, %v3360
  %v3362 = vpop.f32.mrb[0].mxu0
  %3363 = vdwg.mxu0
  %v3364 = vadd.f32 %v3044, %v3321
  %v3365 = vadd.f32 %v3045, %v3326
  %v3366 = vadd.f32 %v3046, %v3331
  %v3367 = vadd.f32 %v3047, %v3336
  %v3368 = vadd.f32 %v3048, %v3341
  %v3369 = vadd.f32 %v3049, %v3346
  %v3370 = vadd.f32 %v3050, %v3351
  %v3371 = vadd.f32 %v3051, %v3356
  %v3372 = vadd.f32 %v3052, %v3361
  %s3373 = scalar_lea.vmem %s1, 576
  %v3374 = vld [vmem:[%s3373] sm:$0xff]
  %v3375 = vld [vmem:[%s3373 + $0x8] sm:$0xff]
  %v3376 = vld [vmem:[%s3373 + $0x10] sm:$0xff]
  %v3377 = vld [vmem:[%s3373 + $0x18] sm:$0xff]
  %v3378 = vld [vmem:[%s3373 + $0x20] sm:$0xff]
  %v3379 = vld [vmem:[%s3373 + $0x28] sm:$0xff]
  %v3380 = vld [vmem:[%s3373 + $0x30] sm:$0xff]
  %v3381 = vld [vmem:[%s3373 + $0x38] sm:$0xff]
  %v3382 = vld [vmem:[%s3373 + $0x40] sm:$0xff]
  %v3384 = vsel %vm83, %v3374, 0
  %v3387 = vsel %vm83, %v3375, 0
  %v3390 = vsel %vm83, %v3376, 0
  %v3393 = vsel %vm83, %v3377, 0
  %v3396 = vsel %vm83, %v3378, 0
  %v3399 = vsel %vm83, %v3379, 0
  %v3402 = vsel %vm83, %v3380, 0
  %v3405 = vsel %vm83, %v3381, 0
  %v3408 = vsel %vm83, %v3382, 0
  %3410 = vmatprep.subr.mxu0 0.0
  %3411 = vmatpush1.msra.mxu0 %v29
  %3412 = vmatprep.subr.mxu0 0.0
  %3413 = vmatpush1.msra.mxu0 %v30
  %3414 = vmatprep.subr.mxu0 0.0
  %3415 = vmatpush1.msra.mxu0 %v31
  %3416 = vmatprep.subr.mxu0 0.0
  %3417 = vmatpush1.msra.mxu0 %v32
  %3418 = vmatprep.subr.mxu0 0.0
  %3419 = vmatpush1.msra.mxu0 %v233
  %3420 = vmatprep.subr.mxu0 0.0
  %3421 = vmatpush1.msra.mxu0 0.0
  %3422 = vmatprep.subr.mxu0 0.0
  %3423 = vmatpush1.msra.mxu0 0.0
  %3424 = vmatprep.subr.mxu0 0.0
  %3425 = vmatpush1.msra.mxu0 0.0
  %3426 = vmatprep.subr.mxu0 0.0
  %3427 = vmatpush1.msra.mxu0 0.0
  %3428 = vmatprep.subr.mxu0 0.0
  %3429 = vmatpush1.msra.mxu0 0.0
  %3430 = vmatprep.subr.mxu0 0.0
  %3431 = vmatpush1.msra.mxu0 0.0
  %3432 = vmatprep.subr.mxu0 0.0
  %3433 = vmatpush1.msra.mxu0 0.0
  %3434 = vmatprep.subr.mxu0 0.0
  %3435 = vmatpush1.msra.mxu0 0.0
  %3436 = vmatprep.subr.mxu0 0.0
  %3437 = vmatpush1.msra.mxu0 0.0
  %3438 = vmatprep.subr.mxu0 0.0
  %3439 = vmatpush1.msra.mxu0 0.0
  %3440 = vmatprep.subr.mxu0 0.0
  %3441 = vmatpush1.msra.mxu0 0.0
  %3442 = vmatprep.subr.mxu0 0.0
  %3443 = vmatpush1.msra.mxu0 0.0
  %3444 = vmatprep.subr.mxu0 0.0
  %3445 = vmatpush1.msra.mxu0 0.0
  %3446 = vmatprep.subr.mxu0 0.0
  %3447 = vmatpush1.msra.mxu0 0.0
  %3448 = vmatprep.subr.mxu0 0.0
  %3449 = vmatpush1.msra.mxu0 0.0
  %3450 = vmatprep.subr.mxu0 0.0
  %3451 = vmatpush1.msra.mxu0 0.0
  %3452 = vmatprep.subr.mxu0 0.0
  %3453 = vmatpush1.msra.mxu0 0.0
  %3454 = vmatprep.subr.mxu0 0.0
  %3455 = vmatpush1.msra.mxu0 0.0
  %3456 = vmatprep.subr.mxu0 0.0
  %3457 = vmatpush1.msra.mxu0 0.0
  %3458 = vmatprep.subr.mxu0 0.0
  %3459 = vmatpush1.msra.mxu0 0.0
  %3460 = vmatprep.subr.mxu0 0.0
  %3461 = vmatpush1.msra.mxu0 0.0
  %3462 = vmatprep.subr.mxu0 0.0
  %3463 = vmatpush1.msra.mxu0 0.0
  %3464 = vmatprep.subr.mxu0 0.0
  %3465 = vmatpush1.msra.mxu0 0.0
  %3466 = vmatprep.subr.mxu0 0.0
  %3467 = vmatpush1.msra.mxu0 0.0
  %3468 = vmatprep.subr.mxu0 0.0
  %3469 = vmatpush1.msra.mxu0 0.0
  %3470 = vmatprep.subr.mxu0 0.0
  %3471 = vmatpush1.msra.mxu0 0.0
  %3472 = vmatprep.subr.mxu0 0.0
  %3473 = vmatpush1.msra.mxu0 0.0
  %3474 = vmatprep.mubr.f32.mxu0 0.0
  %3475 = vmatmul.mubr.f32.gmra.mrb[0].mxu0 %v3384
  %v3476 = vpop.f32.mrb[0].mxu0
  %v3477 = vadd.f32 0.0, %v3476
  %v3478 = vpop.f32.mrb[0].mxu0
  %3479 = vmatprep.mubr.f32.mxu0 0.0
  %3480 = vmatmul.mubr.f32.gmra.mrb[0].mxu0 %v3387
  %v3481 = vpop.f32.mrb[0].mxu0
  %v3482 = vadd.f32 0.0, %v3481
  %v3483 = vpop.f32.mrb[0].mxu0
  %3484 = vmatprep.mubr.f32.mxu0 0.0
  %3485 = vmatmul.mubr.f32.gmra.mrb[0].mxu0 %v3390
  %v3486 = vpop.f32.mrb[0].mxu0
  %v3487 = vadd.f32 0.0, %v3486
  %v3488 = vpop.f32.mrb[0].mxu0
  %3489 = vmatprep.mubr.f32.mxu0 0.0
  %3490 = vmatmul.mubr.f32.gmra.mrb[0].mxu0 %v3393
  %v3491 = vpop.f32.mrb[0].mxu0
  %v3492 = vadd.f32 0.0, %v3491
  %v3493 = vpop.f32.mrb[0].mxu0
  %3494 = vmatprep.mubr.f32.mxu0 0.0
  %3495 = vmatmul.mubr.f32.gmra.mrb[0].mxu0 %v3396
  %v3496 = vpop.f32.mrb[0].mxu0
  %v3497 = vadd.f32 0.0, %v3496
  %v3498 = vpop.f32.mrb[0].mxu0
  %3499 = vmatprep.mubr.f32.mxu0 0.0
  %3500 = vmatmul.mubr.f32.gmra.mrb[0].mxu0 %v3399
  %v3501 = vpop.f32.mrb[0].mxu0
  %v3502 = vadd.f32 0.0, %v3501
  %v3503 = vpop.f32.mrb[0].mxu0
  %3504 = vmatprep.mubr.f32.mxu0 0.0
  %3505 = vmatmul.mubr.f32.gmra.mrb[0].mxu0 %v3402
  %v3506 = vpop.f32.mrb[0].mxu0
  %v3507 = vadd.f32 0.0, %v3506
  %v3508 = vpop.f32.mrb[0].mxu0
  %3509 = vmatprep.mubr.f32.mxu0 0.0
  %3510 = vmatmul.mubr.f32.gmra.mrb[0].mxu0 %v3405
  %v3511 = vpop.f32.mrb[0].mxu0
  %v3512 = vadd.f32 0.0, %v3511
  %v3513 = vpop.f32.mrb[0].mxu0
  %3514 = vmatprep.mubr.f32.mxu0 0.0
  %3515 = vmatmul.mubr.f32.gmra.mrb[0].mxu0 %v3408
  %v3516 = vpop.f32.mrb[0].mxu0
  %v3517 = vadd.f32 0.0, %v3516
  %v3518 = vpop.f32.mrb[0].mxu0
  %3519 = vdwg.mxu0
  %v3520 = vmul.f32 %v3477, %v971
  %v3521 = vmul.f32 %v3482, %v971
  %v3522 = vmul.f32 %v3487, %v971
  %v3523 = vmul.f32 %v3492, %v971
  %v3524 = vmul.f32 %v3497, %v971
  %v3525 = vmul.f32 %v3502, %v971
  %v3526 = vmul.f32 %v3507, %v971
  %v3527 = vmul.f32 %v3512, %v971
  %v3528 = vmul.f32 %v3517, %v971
  %v3529 = vadd.f32 %v3520, %v985
  %v3530 = vadd.f32 %v3521, %v985
  %v3531 = vadd.f32 %v3522, %v985
  %v3532 = vadd.f32 %v3523, %v985
  %v3533 = vadd.f32 %v3524, %v985
  %v3534 = vadd.f32 %v3525, %v985
  %v3535 = vadd.f32 %v3526, %v985
  %v3536 = vadd.f32 %v3527, %v985
  %v3537 = vadd.f32 %v3528, %v985
  %v3538 = vmax.f32 %v3529, 0.0
  %v3539 = vmax.f32 %v3530, 0.0
  %v3540 = vmax.f32 %v3531, 0.0
  %v3541 = vmax.f32 %v3532, 0.0
  %v3542 = vmax.f32 %v3533, 0.0
  %v3543 = vmax.f32 %v3534, 0.0
  %v3544 = vmax.f32 %v3535, 0.0
  %v3545 = vmax.f32 %v3536, 0.0
  %v3546 = vmax.f32 %v3537, 0.0
  %v3548 = vsel %vm545, %v3538, 0
  %v3551 = vsel %vm545, %v3539, 0
  %v3554 = vsel %vm545, %v3540, 0
  %v3557 = vsel %vm545, %v3541, 0
  %v3560 = vsel %vm545, %v3542, 0
  %v3563 = vsel %vm545, %v3543, 0
  %v3566 = vsel %vm545, %v3544, 0
  %v3569 = vsel %vm545, %v3545, 0
  %v3572 = vsel %vm545, %v3546, 0
  %3574 = vmatprep.subr.mxu0 0.0
  %3575 = vmatpush1.msra.mxu0 %v821
  %3576 = vmatprep.subr.mxu0 0.0
  %3577 = vmatpush1.msra.mxu0 0.0
  %3578 = vmatprep.subr.mxu0 0.0
  %3579 = vmatpush1.msra.mxu0 0.0
  %3580 = vmatprep.subr.mxu0 0.0
  %3581 = vmatpush1.msra.mxu0 0.0
  %3582 = vmatprep.subr.mxu0 0.0
  %3583 = vmatpush1.msra.mxu0 0.0
  %3584 = vmatprep.subr.mxu0 0.0
  %3585 = vmatpush1.msra.mxu0 0.0
  %3586 = vmatprep.subr.mxu0 0.0
  %3587 = vmatpush1.msra.mxu0 0.0
  %3588 = vmatprep.subr.mxu0 0.0
  %3589 = vmatpush1.msra.mxu0 0.0
  %3590 = vmatprep.subr.mxu0 0.0
  %3591 = vmatpush1.msra.mxu0 0.0
  %3592 = vmatprep.subr.mxu0 0.0
  %3593 = vmatpush1.msra.mxu0 0.0
  %3594 = vmatprep.subr.mxu0 0.0
  %3595 = vmatpush1.msra.mxu0 0.0
  %3596 = vmatprep.subr.mxu0 0.0
  %3597 = vmatpush1.msra.mxu0 0.0
  %3598 = vmatprep.subr.mxu0 0.0
  %3599 = vmatpush1.msra.mxu0 0.0
  %3600 = vmatprep.subr.mxu0 0.0
  %3601 = vmatpush1.msra.mxu0 0.0
  %3602 = vmatprep.subr.mxu0 0.0
  %3603 = vmatpush1.msra.mxu0 0.0
  %3604 = vmatprep.subr.mxu0 0.0
  %3605 = vmatpush1.msra.mxu0 0.0
  %3606 = vmatprep.subr.mxu0 0.0
  %3607 = vmatpush1.msra.mxu0 0.0
  %3608 = vmatprep.subr.mxu0 0.0
  %3609 = vmatpush1.msra.mxu0 0.0
  %3610 = vmatprep.subr.mxu0 0.0
  %3611 = vmatpush1.msra.mxu0 0.0
  %3612 = vmatprep.subr.mxu0 0.0
  %3613 = vmatpush1.msra.mxu0 0.0
  %3614 = vmatprep.subr.mxu0 0.0
  %3615 = vmatpush1.msra.mxu0 0.0
  %3616 = vmatprep.subr.mxu0 0.0
  %3617 = vmatpush1.msra.mxu0 0.0
  %3618 = vmatprep.subr.mxu0 0.0
  %3619 = vmatpush1.msra.mxu0 0.0
  %3620 = vmatprep.subr.mxu0 0.0
  %3621 = vmatpush1.msra.mxu0 0.0
  %3622 = vmatprep.subr.mxu0 0.0
  %3623 = vmatpush1.msra.mxu0 0.0
  %3624 = vmatprep.subr.mxu0 0.0
  %3625 = vmatpush1.msra.mxu0 0.0
  %3626 = vmatprep.subr.mxu0 0.0
  %3627 = vmatpush1.msra.mxu0 0.0
  %3628 = vmatprep.subr.mxu0 0.0
  %3629 = vmatpush1.msra.mxu0 0.0
  %3630 = vmatprep.subr.mxu0 0.0
  %3631 = vmatpush1.msra.mxu0 0.0
  %3632 = vmatprep.subr.mxu0 0.0
  %3633 = vmatpush1.msra.mxu0 0.0
  %3634 = vmatprep.subr.mxu0 0.0
  %3635 = vmatpush1.msra.mxu0 0.0
  %3636 = vmatprep.subr.mxu0 0.0
  %3637 = vmatpush1.msra.mxu0 0.0
  %3638 = vmatprep.mubr.f32.mxu0 0.0
  %3639 = vmatmul.mubr.f32.gmra.mrb[0].mxu0 %v3548
  %v3640 = vpop.f32.mrb[0].mxu0
  %v3641 = vadd.f32 0.0, %v3640
  %v3642 = vpop.f32.mrb[0].mxu0
  %3643 = vmatprep.mubr.f32.mxu0 0.0
  %3644 = vmatmul.mubr.f32.gmra.mrb[0].mxu0 %v3551
  %v3645 = vpop.f32.mrb[0].mxu0
  %v3646 = vadd.f32 0.0, %v3645
  %v3647 = vpop.f32.mrb[0].mxu0
  %3648 = vmatprep.mubr.f32.mxu0 0.0
  %3649 = vmatmul.mubr.f32.gmra.mrb[0].mxu0 %v3554
  %v3650 = vpop.f32.mrb[0].mxu0
  %v3651 = vadd.f32 0.0, %v3650
  %v3652 = vpop.f32.mrb[0].mxu0
  %3653 = vmatprep.mubr.f32.mxu0 0.0
  %3654 = vmatmul.mubr.f32.gmra.mrb[0].mxu0 %v3557
  %v3655 = vpop.f32.mrb[0].mxu0
  %v3656 = vadd.f32 0.0, %v3655
  %v3657 = vpop.f32.mrb[0].mxu0
  %3658 = vmatprep.mubr.f32.mxu0 0.0
  %3659 = vmatmul.mubr.f32.gmra.mrb[0].mxu0 %v3560
  %v3660 = vpop.f32.mrb[0].mxu0
  %v3661 = vadd.f32 0.0, %v3660
  %v3662 = vpop.f32.mrb[0].mxu0
  %3663 = vmatprep.mubr.f32.mxu0 0.0
  %3664 = vmatmul.mubr.f32.gmra.mrb[0].mxu0 %v3563
  %v3665 = vpop.f32.mrb[0].mxu0
  %v3666 = vadd.f32 0.0, %v3665
  %v3667 = vpop.f32.mrb[0].mxu0
  %3668 = vmatprep.mubr.f32.mxu0 0.0
  %3669 = vmatmul.mubr.f32.gmra.mrb[0].mxu0 %v3566
  %v3670 = vpop.f32.mrb[0].mxu0
  %v3671 = vadd.f32 0.0, %v3670
  %v3672 = vpop.f32.mrb[0].mxu0
  %3673 = vmatprep.mubr.f32.mxu0 0.0
  %3674 = vmatmul.mubr.f32.gmra.mrb[0].mxu0 %v3569
  %v3675 = vpop.f32.mrb[0].mxu0
  %v3676 = vadd.f32 0.0, %v3675
  %v3677 = vpop.f32.mrb[0].mxu0
  %3678 = vmatprep.mubr.f32.mxu0 0.0
  %3679 = vmatmul.mubr.f32.gmra.mrb[0].mxu0 %v3572
  %v3680 = vpop.f32.mrb[0].mxu0
  %v3681 = vadd.f32 0.0, %v3680
  %v3682 = vpop.f32.mrb[0].mxu0
  %3683 = vdwg.mxu0
  %v3684 = vadd.f32 %v3364, %v3641
  %v3685 = vadd.f32 %v3365, %v3646
  %v3686 = vadd.f32 %v3366, %v3651
  %v3687 = vadd.f32 %v3367, %v3656
  %v3688 = vadd.f32 %v3368, %v3661
  %v3689 = vadd.f32 %v3369, %v3666
  %v3690 = vadd.f32 %v3370, %v3671
  %v3691 = vadd.f32 %v3371, %v3676
  %v3692 = vadd.f32 %v3372, %v3681
  %vm3693 = vcmask 130048
  %v3694 = vsel %vm3693, %v3684, 0.0
  %v3695 = vsel %vm3693, %v3685, 0.0
  %v3696 = vadd.f32 %v3694, %v3695
  %v3697 = vsel %vm3693, %v3686, 0.0
  %v3698 = vadd.f32 %v3696, %v3697
  %v3699 = vsel %vm3693, %v3687, 0.0
  %v3700 = vadd.f32 %v3698, %v3699
  %v3701 = vsel %vm3693, %v3688, 0.0
  %v3702 = vadd.f32 %v3700, %v3701
  %v3703 = vsel %vm3693, %v3689, 0.0
  %v3704 = vadd.f32 %v3702, %v3703
  %v3705 = vsel %vm3693, %v3690, 0.0
  %v3706 = vadd.f32 %v3704, %v3705
  %v3707 = vsel %vm3693, %v3691, 0.0
  %v3708 = vadd.f32 %v3706, %v3707
  %v3709 = vsel %vm3693, %v3692, 0.0
  %v3710 = vadd.f32 %v3708, %v3709
  %v3711 = vrot.slane %v3710, 4
  %v3712 = vadd.f32 %v3710, %v3711
  %v3713 = vrot.slane %v3712, 2
  %v3714 = vadd.f32 %v3712, %v3713
  %v3715 = vrot.slane %v3714, 1
  %v3716 = vadd.f32 %v3714, %v3715
  %v3717 = vmul.f32 %v3684, %v3684
  %v3718 = vmul.f32 %v3685, %v3685
  %v3719 = vmul.f32 %v3686, %v3686
  %v3720 = vmul.f32 %v3687, %v3687
  %v3721 = vmul.f32 %v3688, %v3688
  %v3722 = vmul.f32 %v3689, %v3689
  %v3723 = vmul.f32 %v3690, %v3690
  %v3724 = vmul.f32 %v3691, %v3691
  %v3725 = vmul.f32 %v3692, %v3692
  %v3726 = vsel %vm3693, %v3717, 0.0
  %v3727 = vsel %vm3693, %v3718, 0.0
  %v3728 = vadd.f32 %v3726, %v3727
  %v3729 = vsel %vm3693, %v3719, 0.0
  %v3730 = vadd.f32 %v3728, %v3729
  %v3731 = vsel %vm3693, %v3720, 0.0
  %v3732 = vadd.f32 %v3730, %v3731
  %v3733 = vsel %vm3693, %v3721, 0.0
  %v3734 = vadd.f32 %v3732, %v3733
  %v3735 = vsel %vm3693, %v3722, 0.0
  %v3736 = vadd.f32 %v3734, %v3735
  %v3737 = vsel %vm3693, %v3723, 0.0
  %v3738 = vadd.f32 %v3736, %v3737
  %v3739 = vsel %vm3693, %v3724, 0.0
  %v3740 = vadd.f32 %v3738, %v3739
  %v3741 = vsel %vm3693, %v3725, 0.0
  %v3742 = vadd.f32 %v3740, %v3741
  %v3743 = vrot.slane %v3742, 4
  %v3744 = vadd.f32 %v3742, %v3743
  %v3745 = vrot.slane %v3744, 2
  %v3746 = vadd.f32 %v3744, %v3745
  %v3747 = vrot.slane %v3746, 1
  %v3748 = vadd.f32 %v3746, %v3747
  %v3749 = vmul.f32 %v3716, 0.013888889
  %v3750 = vmul.f32 %v3748, 0.013888889
  %v3751 = vmul.f32 %v3749, %v3749
  %v3752 = vsub.f32 %v3750, %v3751
  %v3753 = vmax.f32 %v3752, 0.0
  %v3754 = vadd.f32 %v3753, 1e-05
  %v3755 = vrsqrt.pop %v3754
  %v3756 = vld [vmem:[%s6] sm:$0x1]
  %v3757 = vmul.f32 %v3755, %v3756
  %v3758 = vld [vmem:[%s7] sm:$0x1]
  %v3759 = vmul.f32 %v3749, %v3757
  %v3760 = vsub.f32 %v3758, %v3759
  %v3761 = vlaneseq
  %v3762 = vshrl.u32 %v3761, 7
  %v3763 = vsub.s32 0, %v3762
  %v3764 = vrot.slane %v3757, %v3763
  %v3765 = vmul.f32 %v3684, %v3764
  %v3766 = vmul.f32 %v3685, %v3764
  %v3767 = vmul.f32 %v3686, %v3764
  %v3768 = vmul.f32 %v3687, %v3764
  %v3769 = vmul.f32 %v3688, %v3764
  %v3770 = vmul.f32 %v3689, %v3764
  %v3771 = vmul.f32 %v3690, %v3764
  %v3772 = vmul.f32 %v3691, %v3764
  %v3773 = vmul.f32 %v3692, %v3764
  %v3775 = vlaneseq
  %v3776 = vshrl.u32 %v3775, 7
  %v3777 = vsub.s32 0, %v3776
  %v3778 = vrot.slane %v3760, %v3777
  %v3780 = vadd.f32 %v3765, %v3778
  %v3781 = vadd.f32 %v3766, %v3778
  %v3782 = vadd.f32 %v3767, %v3778
  %v3783 = vadd.f32 %v3768, %v3778
  %v3784 = vadd.f32 %v3769, %v3778
  %v3785 = vadd.f32 %v3770, %v3778
  %v3786 = vadd.f32 %v3771, %v3778
  %v3787 = vadd.f32 %v3772, %v3778
  %v3788 = vadd.f32 %v3773, %v3778
  %v3789 = vmax.f32 %v3780, 0.0
  %v3790 = vmax.f32 %v3781, 0.0
  %v3791 = vmax.f32 %v3782, 0.0
  %v3792 = vmax.f32 %v3783, 0.0
  %v3793 = vmax.f32 %v3784, 0.0
  %v3794 = vmax.f32 %v3785, 0.0
  %v3795 = vmax.f32 %v3786, 0.0
  %v3796 = vmax.f32 %v3787, 0.0
  %v3797 = vmax.f32 %v3788, 0.0
  %3798 = vst.msk [vmem:[%s8] sm:$0xff] %vm3693, %v3789
  %3799 = vst.msk [vmem:[%s8 + $0x8] sm:$0xff] %vm3693, %v3790
  %3800 = vst.msk [vmem:[%s8 + $0x10] sm:$0xff] %vm3693, %v3791
  %3801 = vst.msk [vmem:[%s8 + $0x18] sm:$0xff] %vm3693, %v3792
  %3802 = vst.msk [vmem:[%s8 + $0x20] sm:$0xff] %vm3693, %v3793
  %3803 = vst.msk [vmem:[%s8 + $0x28] sm:$0xff] %vm3693, %v3794
  %3804 = vst.msk [vmem:[%s8 + $0x30] sm:$0xff] %vm3693, %v3795
  %3805 = vst.msk [vmem:[%s8 + $0x38] sm:$0xff] %vm3693, %v3796
  %3806 = vst.msk [vmem:[%s8 + $0x40] sm:$0xff] %vm3693, %v3797
  // Predicated region
  $region34: #{cnn_critic_forward.2} parent=0 // pred_check
    _
  $region35: #{cnn_critic_forward.2} parent=0 // pred_check_branch
    %3808 = sbr.rel (0) target = $region37
  $region36: #{cnn_critic_forward.2} parent=0 // pred_region
    _
  $region37: #{cnn_critic_forward.2} parent=0 // pred_fallthru
    _
  // Predicated region
  $region38: #{cnn_critic_forward.2} parent=0 // pred_check
    _
  $region39: #{cnn_critic_forward.2} parent=0 // pred_check_branch
    %3810 = sbr.rel (0) target = $region41
  $region40: #{cnn_critic_forward.2} parent=0 // pred_region
    _
  $region41: #{cnn_critic_forward.2} parent=0 // pred_fallthru
    _

</llo_original>
